<compile_context>
chip_gen: v6e
topology: v6e:2x2x1
jax: 0.10.0
libtpu: 0.0.40
codegen_flags: <defaults>
</compile_context>

<pallas_src>
import functools
import math

import jax
import jax.numpy as jnp
from jax import lax
from jax.experimental import pallas as pl
from jax.experimental.pallas import tpu as pltpu


# ----------------------------- Pallas kernels -------------------------------

def _gemm_kernel(w_ref, x_ref, b_ref, *rest, relu_in, relu_out, has_residual):
    """out = [relu]( W @ [relu](x) + b ) [+ residual], f32 accumulation."""
    if has_residual:
        r_ref, o_ref = rest
    else:
        (o_ref,) = rest
    x = x_ref[...]                                    # (K, tm) bf16
    if relu_in:
        x = jnp.maximum(x, 0)
    acc = jnp.dot(w_ref[...], x, preferred_element_type=jnp.float32)  # (Cout, tm)
    acc = acc + b_ref[...]
    if relu_out:
        acc = jnp.maximum(acc, 0.0)
    if has_residual:
        acc = acc + r_ref[...]
    o_ref[...] = acc


def _pick_tile_m(m):
    # Largest lane-aligned (multiple of 128) tile <= 512 that still leaves at
    # least 2 grid steps (so both v7x TensorCores get work); else the full M.
    for t in (512, 256, 128):
        if m % t == 0 and m // t >= 2:
            return t
    if m % 128 == 0:
        return min(m, 512)
    return m


def matmul_bias(w2, colT, b, *, relu_in=False, relu_out=False, residual=None):
    """(Cout, M) = relu?( W(Cout,K) @ relu?(colT(K,M)) + b(Cout,1) ) [+ res]."""
    nout, k = w2.shape
    _, m = colT.shape
    tm = _pick_tile_m(m)
    grid = (m // tm,)
    in_specs = [
        pl.BlockSpec((nout, k), lambda i: (0, 0)),    # weights resident
        pl.BlockSpec((k, tm), lambda i: (0, i)),      # patch tile, lane-dense M
        pl.BlockSpec((nout, 1), lambda i: (0, 0)),    # bias resident
    ]
    args = [w2, colT, b]
    if residual is not None:
        in_specs.append(pl.BlockSpec((nout, tm), lambda i: (0, i)))
        args.append(residual)
    bytes_accessed = (w2.size + colT.size) * 2 + b.size * 4 + nout * m * 4
    if residual is not None:
        bytes_accessed += residual.size * 4
    return pl.pallas_call(
        functools.partial(_gemm_kernel, relu_in=relu_in, relu_out=relu_out,
                          has_residual=residual is not None),
        out_shape=jax.ShapeDtypeStruct((nout, m), jnp.float32),
        grid=grid,
        in_specs=in_specs,
        out_specs=pl.BlockSpec((nout, tm), lambda i: (0, i)),
        compiler_params=pltpu.CompilerParams(
            dimension_semantics=("parallel",),
            vmem_limit_bytes=32 * 1024 * 1024),
        cost_estimate=pl.CostEstimate(flops=2 * m * k * nout, transcendentals=0,
                                      bytes_accessed=int(bytes_accessed)),
    )(*args)


def _vq_kernel(z_ref, e_ref, et_ref, zq_ref):
    """Nearest-codebook lookup: z(C,tm) bf16, e(K,C)/e^T(C,K) f32 -> zq(C,tm)."""
    z_bf = z_ref[...]                                     # (C, tm) bf16
    e = e_ref[...]                                        # (K, C)  f32
    k = e.shape[0]
    tm = z_bf.shape[1]
    cross = jnp.dot(e.astype(jnp.bfloat16), z_bf,
                    preferred_element_type=jnp.float32)   # (K, tm)
    zf = z_bf.astype(jnp.float32)
    z2 = jnp.sum(zf * zf, axis=0, keepdims=True)          # (1, tm)
    e2 = jnp.sum(e * e, axis=1, keepdims=True)            # (K, 1)
    d = z2 - 2.0 * cross + e2                             # (K, tm)
    # argmin over the codebook axis with first-index tie-break
    dmin = jnp.min(d, axis=0, keepdims=True)
    idx = lax.broadcasted_iota(jnp.int32, (k, tm), 0)
    first = jnp.min(jnp.where(d <= dmin, idx, k), axis=0, keepdims=True)
    onehot = (idx == first).astype(jnp.float32)           # (K, tm)
    zq_ref[...] = jnp.dot(et_ref[...], onehot,
                          preferred_element_type=jnp.float32)   # (C, tm)


def vq_quantize(ze_cf, embedding):
    """ze_cf: (C, N, H, W) f32, embedding: (K, C) f32 -> zq_cf (C, N, H, W)."""
    c, n, h, w = ze_cf.shape
    m = n * h * w
    k = embedding.shape[0]
    zf = ze_cf.reshape(c, m).astype(jnp.bfloat16)
    et = embedding.T                                      # (C, K), exact codebook
    tm = _pick_tile_m(m)
    grid = (m // tm,)
    zq = pl.pallas_call(
        _vq_kernel,
        out_shape=jax.ShapeDtypeStruct((c, m), jnp.float32),
        grid=grid,
        in_specs=[pl.BlockSpec((c, tm), lambda i: (0, i)),
                  pl.BlockSpec((k, c), lambda i: (0, 0)),
                  pl.BlockSpec((c, k), lambda i: (0, 0))],
        out_specs=pl.BlockSpec((c, tm), lambda i: (0, i)),
        compiler_params=pltpu.CompilerParams(
            dimension_semantics=("parallel",),
            vmem_limit_bytes=32 * 1024 * 1024),
        cost_estimate=pl.CostEstimate(
            flops=4 * m * c * k, transcendentals=0,
            bytes_accessed=int(zf.size * 2 + embedding.size * 8 + c * m * 4)),
    )(zf, embedding, et)
    return zq.reshape(c, n, h, w)


# ----------------------- conv glue (channel-leading layout) ------------------
# TODO(synk): patch extraction (im2col^T) is still XLA-side (transpose-free and
# in bf16); fully in-kernel extraction would need strided VMEM windows per tile.

def _patches_cf(x, kh, kw, stride, pad):
    """x: (C, N, H, W) -> colT: (C*kh*kw, N*Ho*Wo) in PyTorch weight order."""
    c, n, h, w = x.shape
    if pad > 0:
        x = jnp.pad(x, ((0, 0), (0, 0), (pad, pad), (pad, pad)))
    hp, wp = h + 2 * pad, w + 2 * pad
    ho = (hp - kh) // stride + 1
    wo = (wp - kw) // stride + 1
    slices = []
    for i in range(kh):
        for j in range(kw):
            slices.append(x[:, :, i:i + stride * (ho - 1) + 1:stride,
                               j:j + stride * (wo - 1) + 1:stride])
    col = jnp.stack(slices, axis=1)                   # (C, kh*kw, N, Ho, Wo)
    return col.reshape(c * kh * kw, n * ho * wo), ho, wo


def conv2d_cf(x, w, b, *, stride=1, pad=0, relu_in=False, relu_out=False,
              residual=None):
    """Conv2d on (C, N, H, W) activations; output (Cout, N, Ho, Wo)."""
    cout, cin, kh, kw = w.shape
    _, n, h, ww = x.shape
    xb = x.astype(jnp.bfloat16)
    if kh == 1 and kw == 1 and stride == 1 and pad == 0:
        colT, ho, wo = xb.reshape(cin, n * h * ww), h, ww
    else:
        colT, ho, wo = _patches_cf(xb, kh, kw, stride, pad)
    w2 = w.reshape(cout, cin * kh * kw).astype(jnp.bfloat16)
    res = None if residual is None else residual.reshape(cout, n * ho * wo)
    out = matmul_bias(w2, colT, b.reshape(cout, 1),
                      relu_in=relu_in, relu_out=relu_out, residual=res)
    return out.reshape(cout, n, ho, wo)


def conv_transpose2d_cf(x, w_t, b, *, relu_out=False):
    """ConvTranspose2d(k=4, s=2, p=1) via sub-pixel decomposition.

    y[co, n, 2j+ph, 2l+pw] = b[co] + sum_{ci,a,b'} xpad[ci,n,j+ph+a,l+pw+b'] *
                                      w_t[ci, co, 3-ph-2a, 3-pw-2b']
    which is a single stride-1 3x3-patch GEMM on the undilated input with the
    four parity sub-kernels zero-stuffed into (4*Cout, Cin*9) rows.
    """
    cin, cout, kh, kw = w_t.shape          # kh = kw = 4
    _, n, h, w_sp = x.shape
    colT, _, _ = _patches_cf(x.astype(jnp.bfloat16), 3, 3, 1, 1)  # (Cin*9, N*H*W)

    subs = []
    for ph in range(2):
        for pw in range(2):
            w_sub = jnp.zeros((cout, cin, 3, 3), w_t.dtype)
            for a in range(2):
                for bb in range(2):
                    w_sub = w_sub.at[:, :, ph + a, pw + bb].set(
                        jnp.transpose(
                            w_t[:, :, 3 - ph - 2 * a, 3 - pw - 2 * bb], (1, 0)))
            subs.append(w_sub.reshape(cout, cin * 9))
    w_eff = jnp.concatenate(subs, axis=0).astype(jnp.bfloat16)    # (4*Cout, Cin*9)
    b_eff = jnp.tile(b, 4).reshape(4 * cout, 1)

    out = matmul_bias(w_eff, colT, b_eff, relu_out=relu_out)      # (4*Cout, N*H*W)
    out = out.reshape(2, 2, cout, n, h, w_sp)
    out = jnp.transpose(out, (2, 3, 4, 0, 5, 1)).reshape(cout, n, 2 * h, 2 * w_sp)
    return out


# ------------------------------- model ---------------------------------------

def _init_conv(key, cout, cin, kh, kw):
    k1, k2 = jax.random.split(key)
    bound = 1.0 / math.sqrt(cin * kh * kw)
    w = jax.random.uniform(k1, (cout, cin, kh, kw), jnp.float32, -bound, bound)
    b = jax.random.uniform(k2, (cout,), jnp.float32, -bound, bound)
    return w, b


def _init_convT(key, cin, cout, kh, kw):
    k1, k2 = jax.random.split(key)
    bound = 1.0 / math.sqrt(cout * kh * kw)
    w = jax.random.uniform(k1, (cin, cout, kh, kw), jnp.float32, -bound, bound)
    b = jax.random.uniform(k2, (cout,), jnp.float32, -bound, bound)
    return w, b


def init_vqvae_params(key, input_dim=3, dim=32, n_embedding=8):
    keys = iter(jax.random.split(key, 32))
    p = {}
    p['enc0'] = _init_conv(next(keys), dim, input_dim, 4, 4)
    p['enc1'] = _init_conv(next(keys), dim, dim, 4, 4)
    p['enc2'] = _init_conv(next(keys), dim, dim, 4, 4)
    p['enc3'] = _init_conv(next(keys), dim, dim, 4, 4)
    p['enc4'] = _init_conv(next(keys), dim, dim, 3, 3)
    p['enc_rb1'] = (_init_conv(next(keys), dim, dim, 3, 3),
                    _init_conv(next(keys), dim, dim, 1, 1))
    p['enc_rb2'] = (_init_conv(next(keys), dim, dim, 3, 3),
                    _init_conv(next(keys), dim, dim, 1, 1))
    p['embedding'] = jax.random.uniform(
        next(keys), (n_embedding, dim), jnp.float32,
        -1.0 / n_embedding, 1.0 / n_embedding)
    p['dec0'] = _init_conv(next(keys), dim, dim, 3, 3)
    p['dec_rb1'] = (_init_conv(next(keys), dim, dim, 3, 3),
                    _init_conv(next(keys), dim, dim, 1, 1))
    p['dec_rb2'] = (_init_conv(next(keys), dim, dim, 3, 3),
                    _init_conv(next(keys), dim, dim, 1, 1))
    p['ct1'] = _init_convT(next(keys), dim, dim, 4, 4)
    p['ct2'] = _init_convT(next(keys), dim, dim, 4, 4)
    p['ct3'] = _init_convT(next(keys), dim, dim, 4, 4)
    p['ct4'] = _init_convT(next(keys), dim, input_dim, 4, 4)
    return p


def residual_block_cf(x, p):
    (w1, b1), (w2, b2) = p
    # relu -> conv3x3 -> relu -> conv1x1 -> (+x); relus and the skip-add are
    # fused into the GEMM kernels (2 pallas_calls, no extra elementwise pass).
    t = conv2d_cf(x, w1, b1, stride=1, pad=1, relu_in=True, relu_out=True)
    return conv2d_cf(t, w2, b2, stride=1, pad=0, residual=x)


def vqvae_forward(params, x):
    # (N, C, H, W) -> channel-leading (C, N, H, W) once at the boundary.
    xc = jnp.transpose(x, (1, 0, 2, 3))

    # ----- encoder -----
    h = conv2d_cf(xc, *params['enc0'], stride=2, pad=1, relu_out=True)
    h = conv2d_cf(h, *params['enc1'], stride=2, pad=1, relu_out=True)
    h = conv2d_cf(h, *params['enc2'], stride=2, pad=1, relu_out=True)
    h = conv2d_cf(h, *params['enc3'], stride=2, pad=1, relu_out=True)
    h = conv2d_cf(h, *params['enc4'], stride=1, pad=1)
    h = residual_block_cf(h, params['enc_rb1'])
    ze = residual_block_cf(h, params['enc_rb2'])

    # ----- vector quantization + straight-through estimator -----
    zq = vq_quantize(ze, params['embedding'])
    decoder_input = ze + lax.stop_gradient(zq - ze)

    # ----- decoder -----
    h = conv2d_cf(decoder_input, *params['dec0'], stride=1, pad=1)
    h = residual_block_cf(h, params['dec_rb1'])
    h = residual_block_cf(h, params['dec_rb2'])
    h = conv_transpose2d_cf(h, *params['ct1'], relu_out=True)
    h = conv_transpose2d_cf(h, *params['ct2'], relu_out=True)
    h = conv_transpose2d_cf(h, *params['ct3'], relu_out=True)
    x_hat = conv_transpose2d_cf(h, *params['ct4'], relu_out=False)

    to_nchw = lambda a: jnp.transpose(a, (1, 0, 2, 3))
    return to_nchw(x_hat), to_nchw(ze), to_nchw(zq)


if __name__ == "__main__":
    key = jax.random.PRNGKey(0)
    kx, kp = jax.random.split(key)
    input_dim, dim, n_embedding = 3, 32, 8          # small but structure-preserving
    x = jax.random.normal(kx, (2, input_dim, 32, 32), jnp.float32)
    params = init_vqvae_params(kp, input_dim=input_dim, dim=dim,
                               n_embedding=n_embedding)

    fwd = jax.jit(vqvae_forward)
    x_hat, ze, zq = fwd(params, x)
    jax.block_until_ready((x_hat, ze, zq))

    assert x_hat.shape == x.shape, x_hat.shape
    assert ze.shape == (2, dim, 2, 2), ze.shape        # 4 stride-2 downsamples
    assert zq.shape == ze.shape, zq.shape
    assert bool(jnp.all(jnp.isfinite(x_hat)))
    assert bool(jnp.all(jnp.isfinite(zq)))
    print("KERNEL_OK")
</pallas_src>

<mosaic_0001>
module attributes {stable_mosaic.version = 11 : i64} {
  func.func @_gemm_kernel(%arg0: i32, %arg1: memref<32x48xbf16, #tpu.memory_space<vmem>>, %arg2: memref<48x256xbf16, #tpu.memory_space<vmem>>, %arg3: memref<32x1xf32, #tpu.memory_space<vmem>>, %arg4: memref<32x256xf32, #tpu.memory_space<vmem>>) attributes {dimension_semantics = [#tpu.dimension_semantics<parallel>], iteration_bounds = array<i64: 2>, scalar_prefetch = 0 : i64, scratch_operands = 0 : i64, tpu.core_type = #tpu.core_type<tc>, window_params = [{pipeline_mode = #tpu.pipeline_mode<synchronous>, transform_indices = @transform_0, window_bounds = array<i64: 32, 48>}, {transform_indices = @transform_1, window_bounds = array<i64: 48, 256>}, {pipeline_mode = #tpu.pipeline_mode<synchronous>, transform_indices = @transform_2, window_bounds = array<i64: 32, 1>}, {transform_indices = @transform_3, window_bounds = array<i64: 32, 256>}]} {
    %c0 = arith.constant 0 : index
    %c0_0 = arith.constant 0 : index
    %0 = vector.load %arg2[%c0, %c0_0] : memref<48x256xbf16, #tpu.memory_space<vmem>>, vector<48x256xbf16>
    %c0_1 = arith.constant 0 : index
    %c0_2 = arith.constant 0 : index
    %1 = vector.load %arg1[%c0_1, %c0_2] : memref<32x48xbf16, #tpu.memory_space<vmem>>, vector<32x48xbf16>
    %cst = arith.constant dense<0.000000e+00> : vector<32x256xf32>
    %2 = tpu.matmul %1, %0, %cst {dimension_numbers = #tpu.dot_dimension_numbers<[1], [0], [0], [1], [0, 0, 1, 1], [], []>} : vector<32x48xbf16>, vector<48x256xbf16>, vector<32x256xf32> -> vector<32x256xf32>
    %c0_3 = arith.constant 0 : index
    %c0_4 = arith.constant 0 : index
    %3 = vector.load %arg3[%c0_3, %c0_4] : memref<32x1xf32, #tpu.memory_space<vmem>>, vector<32x1xf32>
    %4 = vector.broadcast %3 : vector<32x1xf32> to vector<32x256xf32>
    %5 = arith.addf %2, %4 : vector<32x256xf32>
    %cst_5 = arith.constant 0.000000e+00 : f32
    %6 = vector.broadcast %cst_5 : f32 to vector<32x256xf32>
    %7 = arith.maximumf %5, %6 : vector<32x256xf32>
    %c0_6 = arith.constant 0 : index
    %c0_7 = arith.constant 0 : index
    %8 = vector.load %arg4[%c0_6, %c0_7] : memref<32x256xf32, #tpu.memory_space<vmem>>, vector<32x256xf32>
    tpu.vector_store %arg4[%c0_6, %c0_7], %7 {strides = array<i32>} : memref<32x256xf32, #tpu.memory_space<vmem>>, vector<32x256xf32>,
    return
  }
  func.func @transform_0(%arg0: i32) -> (i32, i32) {
    %c0_i32 = arith.constant 0 : i32
    %c0_i32_0 = arith.constant 0 : i32
    %c0_i32_1 = arith.constant 0 : i32
    return %c0_i32, %c0_i32_0 : i32, i32
  }
  func.func @transform_1(%arg0: i32) -> (i32, i32) {
    %c0_i32 = arith.constant 0 : i32
    %c0_i32_0 = arith.constant 0 : i32
    return %c0_i32, %arg0 : i32, i32
  }
  func.func @transform_2(%arg0: i32) -> (i32, i32) {
    %c0_i32 = arith.constant 0 : i32
    %c0_i32_0 = arith.constant 0 : i32
    %c0_i32_1 = arith.constant 0 : i32
    return %c0_i32, %c0_i32_0 : i32, i32
  }
  func.func @transform_3(%arg0: i32) -> (i32, i32) {
    %c0_i32 = arith.constant 0 : i32
    %c0_i32_0 = arith.constant 0 : i32
    return %c0_i32, %arg0 : i32, i32
  }
}

module attributes {stable_mosaic.version = 11 : i64} {
  func.func @_gemm_kernel(%arg0: i32, %arg1: memref<32x512xbf16, #tpu.memory_space<vmem>>, %arg2: memref<512x128xbf16, #tpu.memory_space<vmem>>, %arg3: memref<32x1xf32, #tpu.memory_space<vmem>>, %arg4: memref<32x128xf32, #tpu.memory_space<vmem>>) attributes {dimension_semantics = [#tpu.dimension_semantics<parallel>], iteration_bounds = array<i64: 1>, scalar_prefetch = 0 : i64, scratch_operands = 0 : i64, tpu.core_type = #tpu.core_type<tc>, window_params = [{pipeline_mode = #tpu.pipeline_mode<synchronous>, transform_indices = @transform_0, window_bounds = array<i64: 32, 512>}, {transform_indices = @transform_1, window_bounds = array<i64: 512, 128>}, {pipeline_mode = #tpu.pipeline_mode<synchronous>, transform_indices = @transform_2, window_bounds = array<i64: 32, 1>}, {transform_indices = @transform_3, window_bounds = array<i64: 32, 128>}]} {
    %c0 = arith.constant 0 : index
    %c0_0 = arith.constant 0 : index
    %0 = vector.load %arg2[%c0, %c0_0] : memref<512x128xbf16, #tpu.memory_space<vmem>>, vector<512x128xbf16>
    %c0_1 = arith.constant 0 : index
    %c0_2 = arith.constant 0 : index
    %1 = vector.load %arg1[%c0_1, %c0_2] : memref<32x512xbf16, #tpu.memory_space<vmem>>, vector<32x512xbf16>
    %cst = arith.constant dense<0.000000e+00> : vector<32x128xf32>
    %2 = tpu.matmul %1, %0, %cst {dimension_numbers = #tpu.dot_dimension_numbers<[1], [0], [0], [1], [0, 0, 1, 1], [], []>} : vector<32x512xbf16>, vector<512x128xbf16>, vector<32x128xf32> -> vector<32x128xf32>
    %c0_3 = arith.constant 0 : index
    %c0_4 = arith.constant 0 : index
    %3 = vector.load %arg3[%c0_3, %c0_4] : memref<32x1xf32, #tpu.memory_space<vmem>>, vector<32x1xf32>
    %4 = vector.broadcast %3 : vector<32x1xf32> to vector<32x128xf32>
    %5 = arith.addf %2, %4 : vector<32x128xf32>
    %cst_5 = arith.constant 0.000000e+00 : f32
    %6 = vector.broadcast %cst_5 : f32 to vector<32x128xf32>
    %7 = arith.maximumf %5, %6 : vector<32x128xf32>
    %c0_6 = arith.constant 0 : index
    %c0_7 = arith.constant 0 : index
    %8 = vector.load %arg4[%c0_6, %c0_7] : memref<32x128xf32, #tpu.memory_space<vmem>>, vector<32x128xf32>
    tpu.vector_store %arg4[%c0_6, %c0_7], %7 {strides = array<i32>} : memref<32x128xf32, #tpu.memory_space<vmem>>, vector<32x128xf32>,
    return
  }
  func.func @transform_0(%arg0: i32) -> (i32, i32) {
    %c0_i32 = arith.constant 0 : i32
    %c0_i32_0 = arith.constant 0 : i32
    %c0_i32_1 = arith.constant 0 : i32
    return %c0_i32, %c0_i32_0 : i32, i32
  }
  func.func @transform_1(%arg0: i32) -> (i32, i32) {
    %c0_i32 = arith.constant 0 : i32
    %c0_i32_0 = arith.constant 0 : i32
    return %c0_i32, %arg0 : i32, i32
  }
  func.func @transform_2(%arg0: i32) -> (i32, i32) {
    %c0_i32 = arith.constant 0 : i32
    %c0_i32_0 = arith.constant 0 : i32
    %c0_i32_1 = arith.constant 0 : i32
    return %c0_i32, %c0_i32_0 : i32, i32
  }
  func.func @transform_3(%arg0: i32) -> (i32, i32) {
    %c0_i32 = arith.constant 0 : i32
    %c0_i32_0 = arith.constant 0 : i32
    return %c0_i32, %arg0 : i32, i32
  }
}

module attributes {stable_mosaic.version = 11 : i64} {
  func.func @_gemm_kernel(%arg0: i32, %arg1: memref<32x512xbf16, #tpu.memory_space<vmem>>, %arg2: memref<512x32xbf16, #tpu.memory_space<vmem>>, %arg3: memref<32x1xf32, #tpu.memory_space<vmem>>, %arg4: memref<32x32xf32, #tpu.memory_space<vmem>>) attributes {dimension_semantics = [#tpu.dimension_semantics<parallel>], iteration_bounds = array<i64: 1>, scalar_prefetch = 0 : i64, scratch_operands = 0 : i64, tpu.core_type = #tpu.core_type<tc>, window_params = [{pipeline_mode = #tpu.pipeline_mode<synchronous>, transform_indices = @transform_0, window_bounds = array<i64: 32, 512>}, {transform_indices = @transform_1, window_bounds = array<i64: 512, 32>}, {pipeline_mode = #tpu.pipeline_mode<synchronous>, transform_indices = @transform_2, window_bounds = array<i64: 32, 1>}, {transform_indices = @transform_3, window_bounds = array<i64: 32, 32>}]} {
    %c0 = arith.constant 0 : index
    %c0_0 = arith.constant 0 : index
    %0 = vector.load %arg2[%c0, %c0_0] : memref<512x32xbf16, #tpu.memory_space<vmem>>, vector<512x32xbf16>
    %c0_1 = arith.constant 0 : index
    %c0_2 = arith.constant 0 : index
    %1 = vector.load %arg1[%c0_1, %c0_2] : memref<32x512xbf16, #tpu.memory_space<vmem>>, vector<32x512xbf16>
    %cst = arith.constant dense<0.000000e+00> : vector<32x32xf32>
    %2 = tpu.matmul %1, %0, %cst {dimension_numbers = #tpu.dot_dimension_numbers<[1], [0], [0], [1], [0, 0, 1, 1], [], []>} : vector<32x512xbf16>, vector<512x32xbf16>, vector<32x32xf32> -> vector<32x32xf32>
    %c0_3 = arith.constant 0 : index
    %c0_4 = arith.constant 0 : index
    %3 = vector.load %arg3[%c0_3, %c0_4] : memref<32x1xf32, #tpu.memory_space<vmem>>, vector<32x1xf32>
    %4 = vector.broadcast %3 : vector<32x1xf32> to vector<32x32xf32>
    %5 = arith.addf %2, %4 : vector<32x32xf32>
    %cst_5 = arith.constant 0.000000e+00 : f32
    %6 = vector.broadcast %cst_5 : f32 to vector<32x32xf32>
    %7 = arith.maximumf %5, %6 : vector<32x32xf32>
    %c0_6 = arith.constant 0 : index
    %c0_7 = arith.constant 0 : index
    %8 = vector.load %arg4[%c0_6, %c0_7] : memref<32x32xf32, #tpu.memory_space<vmem>>, vector<32x32xf32>
    tpu.vector_store %arg4[%c0_6, %c0_7], %7 {strides = array<i32>} : memref<32x32xf32, #tpu.memory_space<vmem>>, vector<32x32xf32>,
    return
  }
  func.func @transform_0(%arg0: i32) -> (i32, i32) {
    %c0_i32 = arith.constant 0 : i32
    %c0_i32_0 = arith.constant 0 : i32
    %c0_i32_1 = arith.constant 0 : i32
    return %c0_i32, %c0_i32_0 : i32, i32
  }
  func.func @transform_1(%arg0: i32) -> (i32, i32) {
    %c0_i32 = arith.constant 0 : i32
    %c0_i32_0 = arith.constant 0 : i32
    return %c0_i32, %arg0 : i32, i32
  }
  func.func @transform_2(%arg0: i32) -> (i32, i32) {
    %c0_i32 = arith.constant 0 : i32
    %c0_i32_0 = arith.constant 0 : i32
    %c0_i32_1 = arith.constant 0 : i32
    return %c0_i32, %c0_i32_0 : i32, i32
  }
  func.func @transform_3(%arg0: i32) -> (i32, i32) {
    %c0_i32 = arith.constant 0 : i32
    %c0_i32_0 = arith.constant 0 : i32
    return %c0_i32, %arg0 : i32, i32
  }
}

module attributes {stable_mosaic.version = 11 : i64} {
  func.func @_gemm_kernel(%arg0: i32, %arg1: memref<32x512xbf16, #tpu.memory_space<vmem>>, %arg2: memref<512x8xbf16, #tpu.memory_space<vmem>>, %arg3: memref<32x1xf32, #tpu.memory_space<vmem>>, %arg4: memref<32x8xf32, #tpu.memory_space<vmem>>) attributes {dimension_semantics = [#tpu.dimension_semantics<parallel>], iteration_bounds = array<i64: 1>, scalar_prefetch = 0 : i64, scratch_operands = 0 : i64, tpu.core_type = #tpu.core_type<tc>, window_params = [{pipeline_mode = #tpu.pipeline_mode<synchronous>, transform_indices = @transform_0, window_bounds = array<i64: 32, 512>}, {transform_indices = @transform_1, window_bounds = array<i64: 512, 8>}, {pipeline_mode = #tpu.pipeline_mode<synchronous>, transform_indices = @transform_2, window_bounds = array<i64: 32, 1>}, {transform_indices = @transform_3, window_bounds = array<i64: 32, 8>}]} {
    %c0 = arith.constant 0 : index
    %c0_0 = arith.constant 0 : index
    %0 = vector.load %arg2[%c0, %c0_0] : memref<512x8xbf16, #tpu.memory_space<vmem>>, vector<512x8xbf16>
    %c0_1 = arith.constant 0 : index
    %c0_2 = arith.constant 0 : index
    %1 = vector.load %arg1[%c0_1, %c0_2] : memref<32x512xbf16, #tpu.memory_space<vmem>>, vector<32x512xbf16>
    %cst = arith.constant dense<0.000000e+00> : vector<32x8xf32>
    %2 = tpu.matmul %1, %0, %cst {dimension_numbers = #tpu.dot_dimension_numbers<[1], [0], [0], [1], [0, 0, 1, 1], [], []>} : vector<32x512xbf16>, vector<512x8xbf16>, vector<32x8xf32> -> vector<32x8xf32>
    %c0_3 = arith.constant 0 : index
    %c0_4 = arith.constant 0 : index
    %3 = vector.load %arg3[%c0_3, %c0_4] : memref<32x1xf32, #tpu.memory_space<vmem>>, vector<32x1xf32>
    %4 = vector.broadcast %3 : vector<32x1xf32> to vector<32x8xf32>
    %5 = arith.addf %2, %4 : vector<32x8xf32>
    %cst_5 = arith.constant 0.000000e+00 : f32
    %6 = vector.broadcast %cst_5 : f32 to vector<32x8xf32>
    %7 = arith.maximumf %5, %6 : vector<32x8xf32>
    %c0_6 = arith.constant 0 : index
    %c0_7 = arith.constant 0 : index
    %8 = vector.load %arg4[%c0_6, %c0_7] : memref<32x8xf32, #tpu.memory_space<vmem>>, vector<32x8xf32>
    tpu.vector_store %arg4[%c0_6, %c0_7], %7 {strides = array<i32>} : memref<32x8xf32, #tpu.memory_space<vmem>>, vector<32x8xf32>,
    return
  }
  func.func @transform_0(%arg0: i32) -> (i32, i32) {
    %c0_i32 = arith.constant 0 : i32
    %c0_i32_0 = arith.constant 0 : i32
    %c0_i32_1 = arith.constant 0 : i32
    return %c0_i32, %c0_i32_0 : i32, i32
  }
  func.func @transform_1(%arg0: i32) -> (i32, i32) {
    %c0_i32 = arith.constant 0 : i32
    %c0_i32_0 = arith.constant 0 : i32
    return %c0_i32, %arg0 : i32, i32
  }
  func.func @transform_2(%arg0: i32) -> (i32, i32) {
    %c0_i32 = arith.constant 0 : i32
    %c0_i32_0 = arith.constant 0 : i32
    %c0_i32_1 = arith.constant 0 : i32
    return %c0_i32, %c0_i32_0 : i32, i32
  }
  func.func @transform_3(%arg0: i32) -> (i32, i32) {
    %c0_i32 = arith.constant 0 : i32
    %c0_i32_0 = arith.constant 0 : i32
    return %c0_i32, %arg0 : i32, i32
  }
}

module attributes {stable_mosaic.version = 11 : i64} {
  func.func @_gemm_kernel(%arg0: i32, %arg1: memref<32x288xbf16, #tpu.memory_space<vmem>>, %arg2: memref<288x8xbf16, #tpu.memory_space<vmem>>, %arg3: memref<32x1xf32, #tpu.memory_space<vmem>>, %arg4: memref<32x8xf32, #tpu.memory_space<vmem>>) attributes {dimension_semantics = [#tpu.dimension_semantics<parallel>], iteration_bounds = array<i64: 1>, scalar_prefetch = 0 : i64, scratch_operands = 0 : i64, tpu.core_type = #tpu.core_type<tc>, window_params = [{pipeline_mode = #tpu.pipeline_mode<synchronous>, transform_indices = @transform_0, window_bounds = array<i64: 32, 288>}, {transform_indices = @transform_1, window_bounds = array<i64: 288, 8>}, {pipeline_mode = #tpu.pipeline_mode<synchronous>, transform_indices = @transform_2, window_bounds = array<i64: 32, 1>}, {transform_indices = @transform_3, window_bounds = array<i64: 32, 8>}]} {
    %c0 = arith.constant 0 : index
    %c0_0 = arith.constant 0 : index
    %0 = vector.load %arg2[%c0, %c0_0] : memref<288x8xbf16, #tpu.memory_space<vmem>>, vector<288x8xbf16>
    %c0_1 = arith.constant 0 : index
    %c0_2 = arith.constant 0 : index
    %1 = vector.load %arg1[%c0_1, %c0_2] : memref<32x288xbf16, #tpu.memory_space<vmem>>, vector<32x288xbf16>
    %cst = arith.constant dense<0.000000e+00> : vector<32x8xf32>
    %2 = tpu.matmul %1, %0, %cst {dimension_numbers = #tpu.dot_dimension_numbers<[1], [0], [0], [1], [0, 0, 1, 1], [], []>} : vector<32x288xbf16>, vector<288x8xbf16>, vector<32x8xf32> -> vector<32x8xf32>
    %c0_3 = arith.constant 0 : index
    %c0_4 = arith.constant 0 : index
    %3 = vector.load %arg3[%c0_3, %c0_4] : memref<32x1xf32, #tpu.memory_space<vmem>>, vector<32x1xf32>
    %4 = vector.broadcast %3 : vector<32x1xf32> to vector<32x8xf32>
    %5 = arith.addf %2, %4 : vector<32x8xf32>
    %c0_5 = arith.constant 0 : index
    %c0_6 = arith.constant 0 : index
    %6 = vector.load %arg4[%c0_5, %c0_6] : memref<32x8xf32, #tpu.memory_space<vmem>>, vector<32x8xf32>
    tpu.vector_store %arg4[%c0_5, %c0_6], %5 {strides = array<i32>} : memref<32x8xf32, #tpu.memory_space<vmem>>, vector<32x8xf32>,
    return
  }
  func.func @transform_0(%arg0: i32) -> (i32, i32) {
    %c0_i32 = arith.constant 0 : i32
    %c0_i32_0 = arith.constant 0 : i32
    %c0_i32_1 = arith.constant 0 : i32
    return %c0_i32, %c0_i32_0 : i32, i32
  }
  func.func @transform_1(%arg0: i32) -> (i32, i32) {
    %c0_i32 = arith.constant 0 : i32
    %c0_i32_0 = arith.constant 0 : i32
    return %c0_i32, %arg0 : i32, i32
  }
  func.func @transform_2(%arg0: i32) -> (i32, i32) {
    %c0_i32 = arith.constant 0 : i32
    %c0_i32_0 = arith.constant 0 : i32
    %c0_i32_1 = arith.constant 0 : i32
    return %c0_i32, %c0_i32_0 : i32, i32
  }
  func.func @transform_3(%arg0: i32) -> (i32, i32) {
    %c0_i32 = arith.constant 0 : i32
    %c0_i32_0 = arith.constant 0 : i32
    return %c0_i32, %arg0 : i32, i32
  }
}

module attributes {stable_mosaic.version = 11 : i64} {
  func.func @_gemm_kernel(%arg0: i32, %arg1: memref<32x288xbf16, #tpu.memory_space<vmem>>, %arg2: memref<288x8xbf16, #tpu.memory_space<vmem>>, %arg3: memref<32x1xf32, #tpu.memory_space<vmem>>, %arg4: memref<32x8xf32, #tpu.memory_space<vmem>>) attributes {dimension_semantics = [#tpu.dimension_semantics<parallel>], iteration_bounds = array<i64: 1>, scalar_prefetch = 0 : i64, scratch_operands = 0 : i64, tpu.core_type = #tpu.core_type<tc>, window_params = [{pipeline_mode = #tpu.pipeline_mode<synchronous>, transform_indices = @transform_0, window_bounds = array<i64: 32, 288>}, {transform_indices = @transform_1, window_bounds = array<i64: 288, 8>}, {pipeline_mode = #tpu.pipeline_mode<synchronous>, transform_indices = @transform_2, window_bounds = array<i64: 32, 1>}, {transform_indices = @transform_3, window_bounds = array<i64: 32, 8>}]} {
    %c0 = arith.constant 0 : index
    %c0_0 = arith.constant 0 : index
    %0 = vector.load %arg2[%c0, %c0_0] : memref<288x8xbf16, #tpu.memory_space<vmem>>, vector<288x8xbf16>
    %cst = arith.constant 0.000000e+00 : bf16
    %1 = vector.broadcast %cst : bf16 to vector<288x8xbf16>
    %2 = arith.maximumf %0, %1 : vector<288x8xbf16>
    %c0_1 = arith.constant 0 : index
    %c0_2 = arith.constant 0 : index
    %3 = vector.load %arg1[%c0_1, %c0_2] : memref<32x288xbf16, #tpu.memory_space<vmem>>, vector<32x288xbf16>
    %cst_3 = arith.constant dense<0.000000e+00> : vector<32x8xf32>
    %4 = tpu.matmul %3, %2, %cst_3 {dimension_numbers = #tpu.dot_dimension_numbers<[1], [0], [0], [1], [0, 0, 1, 1], [], []>} : vector<32x288xbf16>, vector<288x8xbf16>, vector<32x8xf32> -> vector<32x8xf32>
    %c0_4 = arith.constant 0 : index
    %c0_5 = arith.constant 0 : index
    %5 = vector.load %arg3[%c0_4, %c0_5] : memref<32x1xf32, #tpu.memory_space<vmem>>, vector<32x1xf32>
    %6 = vector.broadcast %5 : vector<32x1xf32> to vector<32x8xf32>
    %7 = arith.addf %4, %6 : vector<32x8xf32>
    %cst_6 = arith.constant 0.000000e+00 : f32
    %8 = vector.broadcast %cst_6 : f32 to vector<32x8xf32>
    %9 = arith.maximumf %7, %8 : vector<32x8xf32>
    %c0_7 = arith.constant 0 : index
    %c0_8 = arith.constant 0 : index
    %10 = vector.load %arg4[%c0_7, %c0_8] : memref<32x8xf32, #tpu.memory_space<vmem>>, vector<32x8xf32>
    tpu.vector_store %arg4[%c0_7, %c0_8], %9 {strides = array<i32>} : memref<32x8xf32, #tpu.memory_space<vmem>>, vector<32x8xf32>,
    return
  }
  func.func @transform_0(%arg0: i32) -> (i32, i32) {
    %c0_i32 = arith.constant 0 : i32
    %c0_i32_0 = arith.constant 0 : i32
    %c0_i32_1 = arith.constant 0 : i32
    return %c0_i32, %c0_i32_0 : i32, i32
  }
  func.func @transform_1(%arg0: i32) -> (i32, i32) {
    %c0_i32 = arith.constant 0 : i32
    %c0_i32_0 = arith.constant 0 : i32
    return %c0_i32, %arg0 : i32, i32
  }
  func.func @transform_2(%arg0: i32) -> (i32, i32) {
    %c0_i32 = arith.constant 0 : i32
    %c0_i32_0 = arith.constant 0 : i32
    %c0_i32_1 = arith.constant 0 : i32
    return %c0_i32, %c0_i32_0 : i32, i32
  }
  func.func @transform_3(%arg0: i32) -> (i32, i32) {
    %c0_i32 = arith.constant 0 : i32
    %c0_i32_0 = arith.constant 0 : i32
    return %c0_i32, %arg0 : i32, i32
  }
}

module attributes {stable_mosaic.version = 11 : i64} {
  func.func @_gemm_kernel(%arg0: i32, %arg1: memref<32x32xbf16, #tpu.memory_space<vmem>>, %arg2: memref<32x8xbf16, #tpu.memory_space<vmem>>, %arg3: memref<32x1xf32, #tpu.memory_space<vmem>>, %arg4: memref<32x8xf32, #tpu.memory_space<vmem>>, %arg5: memref<32x8xf32, #tpu.memory_space<vmem>>) attributes {dimension_semantics = [#tpu.dimension_semantics<parallel>], iteration_bounds = array<i64: 1>, scalar_prefetch = 0 : i64, scratch_operands = 0 : i64, tpu.core_type = #tpu.core_type<tc>, window_params = [{pipeline_mode = #tpu.pipeline_mode<synchronous>, transform_indices = @transform_0, window_bounds = array<i64: 32, 32>}, {transform_indices = @transform_1, window_bounds = array<i64: 32, 8>}, {pipeline_mode = #tpu.pipeline_mode<synchronous>, transform_indices = @transform_2, window_bounds = array<i64: 32, 1>}, {transform_indices = @transform_3, window_bounds = array<i64: 32, 8>}, {transform_indices = @transform_4, window_bounds = array<i64: 32, 8>}]} {
    %c0 = arith.constant 0 : index
    %c0_0 = arith.constant 0 : index
    %0 = vector.load %arg2[%c0, %c0_0] : memref<32x8xbf16, #tpu.memory_space<vmem>>, vector<32x8xbf16>
    %c0_1 = arith.constant 0 : index
    %c0_2 = arith.constant 0 : index
    %1 = vector.load %arg1[%c0_1, %c0_2] : memref<32x32xbf16, #tpu.memory_space<vmem>>, vector<32x32xbf16>
    %cst = arith.constant dense<0.000000e+00> : vector<32x8xf32>
    %2 = tpu.matmul %1, %0, %cst {dimension_numbers = #tpu.dot_dimension_numbers<[1], [0], [0], [1], [0, 0, 1, 1], [], []>} : vector<32x32xbf16>, vector<32x8xbf16>, vector<32x8xf32> -> vector<32x8xf32>
    %c0_3 = arith.constant 0 : index
    %c0_4 = arith.constant 0 : index
    %3 = vector.load %arg3[%c0_3, %c0_4] : memref<32x1xf32, #tpu.memory_space<vmem>>, vector<32x1xf32>
    %4 = vector.broadcast %3 : vector<32x1xf32> to vector<32x8xf32>
    %5 = arith.addf %2, %4 : vector<32x8xf32>
    %c0_5 = arith.constant 0 : index
    %c0_6 = arith.constant 0 : index
    %6 = vector.load %arg4[%c0_5, %c0_6] : memref<32x8xf32, #tpu.memory_space<vmem>>, vector<32x8xf32>
    %7 = arith.addf %5, %6 : vector<32x8xf32>
    %c0_7 = arith.constant 0 : index
    %c0_8 = arith.constant 0 : index
    %8 = vector.load %arg5[%c0_7, %c0_8] : memref<32x8xf32, #tpu.memory_space<vmem>>, vector<32x8xf32>
    tpu.vector_store %arg5[%c0_7, %c0_8], %7 {strides = array<i32>} : memref<32x8xf32, #tpu.memory_space<vmem>>, vector<32x8xf32>,
    return
  }
  func.func @transform_0(%arg0: i32) -> (i32, i32) {
    %c0_i32 = arith.constant 0 : i32
    %c0_i32_0 = arith.constant 0 : i32
    %c0_i32_1 = arith.constant 0 : i32
    return %c0_i32, %c0_i32_0 : i32, i32
  }
  func.func @transform_1(%arg0: i32) -> (i32, i32) {
    %c0_i32 = arith.constant 0 : i32
    %c0_i32_0 = arith.constant 0 : i32
    return %c0_i32, %arg0 : i32, i32
  }
  func.func @transform_2(%arg0: i32) -> (i32, i32) {
    %c0_i32 = arith.constant 0 : i32
    %c0_i32_0 = arith.constant 0 : i32
    %c0_i32_1 = arith.constant 0 : i32
    return %c0_i32, %c0_i32_0 : i32, i32
  }
  func.func @transform_3(%arg0: i32) -> (i32, i32) {
    %c0_i32 = arith.constant 0 : i32
    %c0_i32_0 = arith.constant 0 : i32
    return %c0_i32, %arg0 : i32, i32
  }
  func.func @transform_4(%arg0: i32) -> (i32, i32) {
    %c0_i32 = arith.constant 0 : i32
    %c0_i32_0 = arith.constant 0 : i32
    return %c0_i32, %arg0 : i32, i32
  }
}

module attributes {stable_mosaic.version = 11 : i64} {
  func.func @_vq_kernel(%arg0: i32, %arg1: memref<32x8xbf16, #tpu.memory_space<vmem>>, %arg2: memref<8x32xf32, #tpu.memory_space<vmem>>, %arg3: memref<32x8xf32, #tpu.memory_space<vmem>>, %arg4: memref<32x8xf32, #tpu.memory_space<vmem>>) attributes {dimension_semantics = [#tpu.dimension_semantics<parallel>], iteration_bounds = array<i64: 1>, scalar_prefetch = 0 : i64, scratch_operands = 0 : i64, tpu.core_type = #tpu.core_type<tc>, window_params = [{transform_indices = @transform_0, window_bounds = array<i64: 32, 8>}, {pipeline_mode = #tpu.pipeline_mode<synchronous>, transform_indices = @transform_1, window_bounds = array<i64: 8, 32>}, {pipeline_mode = #tpu.pipeline_mode<synchronous>, transform_indices = @transform_2, window_bounds = array<i64: 32, 8>}, {transform_indices = @transform_3, window_bounds = array<i64: 32, 8>}]} {
    %c0 = arith.constant 0 : index
    %c0_0 = arith.constant 0 : index
    %0 = vector.load %arg1[%c0, %c0_0] : memref<32x8xbf16, #tpu.memory_space<vmem>>, vector<32x8xbf16>
    %c0_1 = arith.constant 0 : index
    %c0_2 = arith.constant 0 : index
    %1 = vector.load %arg2[%c0_1, %c0_2] : memref<8x32xf32, #tpu.memory_space<vmem>>, vector<8x32xf32>
    %2 = arith.truncf %1 : vector<8x32xf32> to vector<8x32xbf16>
    %cst = arith.constant dense<0.000000e+00> : vector<8x8xf32>
    %3 = tpu.matmul %2, %0, %cst {dimension_numbers = #tpu.dot_dimension_numbers<[1], [0], [0], [1], [0, 0, 1, 1], [], []>} : vector<8x32xbf16>, vector<32x8xbf16>, vector<8x8xf32> -> vector<8x8xf32>
    %4 = arith.extf %0 : vector<32x8xbf16> to vector<32x8xf32>
    %5 = arith.mulf %4, %4 : vector<32x8xf32>
    %cst_3 = arith.constant dense<0.000000e+00> : vector<8xf32>
    %6 = vector.multi_reduction <add>, %5, %cst_3 [0] : vector<32x8xf32> to vector<8xf32>
    %7 = vector.shape_cast %6 : vector<8xf32> to vector<1x8xf32>
    %8 = arith.mulf %1, %1 : vector<8x32xf32>
    %cst_4 = arith.constant dense<0.000000e+00> : vector<8xf32>
    %9 = vector.multi_reduction <add>, %8, %cst_4 [1] : vector<8x32xf32> to vector<8xf32>
    %10 = vector.shape_cast %9 : vector<8xf32> to vector<8x1xf32>
    %cst_5 = arith.constant 2.000000e+00 : f32
    %11 = vector.broadcast %cst_5 : f32 to vector<8x8xf32>
    %12 = arith.mulf %11, %3 : vector<8x8xf32>
    %13 = vector.broadcast %7 : vector<1x8xf32> to vector<8x8xf32>
    %14 = arith.subf %13, %12 : vector<8x8xf32>
    %15 = vector.broadcast %10 : vector<8x1xf32> to vector<8x8xf32>
    %16 = arith.addf %14, %15 : vector<8x8xf32>
    %cst_6 = arith.constant dense<0x7F800000> : vector<8xf32>
    %17 = vector.multi_reduction <minimumf>, %16, %cst_6 [0] : vector<8x8xf32> to vector<8xf32>
    %18 = vector.shape_cast %17 : vector<8xf32> to vector<1x8xf32>
    %19 = tpu.iota {dimensions = array<i32: 0>} : vector<8x8xi32>
    %20 = vector.broadcast %18 : vector<1x8xf32> to vector<8x8xf32>
    %21 = arith.cmpf ole, %16, %20 : vector<8x8xf32>
    %c8_i32 = arith.constant 8 : i32
    %22 = vector.broadcast %c8_i32 : i32 to vector<8x8xi32>
    %23 = arith.select %21, %19, %22 : vector<8x8xi1>, vector<8x8xi32>
    %cst_7 = arith.constant dense<2147483647> : vector<8xi32>
    %24 = vector.multi_reduction <minsi>, %23, %cst_7 [0] : vector<8x8xi32> to vector<8xi32>
    %25 = vector.shape_cast %24 : vector<8xi32> to vector<1x8xi32>
    %26 = vector.broadcast %25 : vector<1x8xi32> to vector<8x8xi32>
    %27 = arith.cmpi eq, %19, %26 : vector<8x8xi32>
    %28 = arith.extui %27 : vector<8x8xi1> to vector<8x8xi32>
    %29 = arith.sitofp %28 : vector<8x8xi32> to vector<8x8xf32>
    %c0_8 = arith.constant 0 : index
    %c0_9 = arith.constant 0 : index
    %30 = vector.load %arg3[%c0_8, %c0_9] : memref<32x8xf32, #tpu.memory_space<vmem>>, vector<32x8xf32>
    %cst_10 = arith.constant dense<0.000000e+00> : vector<32x8xf32>
    %31 = tpu.matmul %30, %29, %cst_10 {dimension_numbers = #tpu.dot_dimension_numbers<[1], [0], [0], [1], [0, 0, 1, 1], [], []>} : vector<32x8xf32>, vector<8x8xf32>, vector<32x8xf32> -> vector<32x8xf32>
    %c0_11 = arith.constant 0 : index
    %c0_12 = arith.constant 0 : index
    %32 = vector.load %arg4[%c0_11, %c0_12] : memref<32x8xf32, #tpu.memory_space<vmem>>, vector<32x8xf32>
    tpu.vector_store %arg4[%c0_11, %c0_12], %31 {strides = array<i32>} : memref<32x8xf32, #tpu.memory_space<vmem>>, vector<32x8xf32>,
    return
  }
  func.func @transform_0(%arg0: i32) -> (i32, i32) {
    %c0_i32 = arith.constant 0 : i32
    %c0_i32_0 = arith.constant 0 : i32
    return %c0_i32, %arg0 : i32, i32
  }
  func.func @transform_1(%arg0: i32) -> (i32, i32) {
    %c0_i32 = arith.constant 0 : i32
    %c0_i32_0 = arith.constant 0 : i32
    %c0_i32_1 = arith.constant 0 : i32
    return %c0_i32, %c0_i32_0 : i32, i32
  }
  func.func @transform_2(%arg0: i32) -> (i32, i32) {
    %c0_i32 = arith.constant 0 : i32
    %c0_i32_0 = arith.constant 0 : i32
    %c0_i32_1 = arith.constant 0 : i32
    return %c0_i32, %c0_i32_0 : i32, i32
  }
  func.func @transform_3(%arg0: i32) -> (i32, i32) {
    %c0_i32 = arith.constant 0 : i32
    %c0_i32_0 = arith.constant 0 : i32
    return %c0_i32, %arg0 : i32, i32
  }
}

module attributes {stable_mosaic.version = 11 : i64} {
  func.func @_gemm_kernel(%arg0: i32, %arg1: memref<128x288xbf16, #tpu.memory_space<vmem>>, %arg2: memref<288x8xbf16, #tpu.memory_space<vmem>>, %arg3: memref<128x1xf32, #tpu.memory_space<vmem>>, %arg4: memref<128x8xf32, #tpu.memory_space<vmem>>) attributes {dimension_semantics = [#tpu.dimension_semantics<parallel>], iteration_bounds = array<i64: 1>, scalar_prefetch = 0 : i64, scratch_operands = 0 : i64, tpu.core_type = #tpu.core_type<tc>, window_params = [{pipeline_mode = #tpu.pipeline_mode<synchronous>, transform_indices = @transform_0, window_bounds = array<i64: 128, 288>}, {transform_indices = @transform_1, window_bounds = array<i64: 288, 8>}, {pipeline_mode = #tpu.pipeline_mode<synchronous>, transform_indices = @transform_2, window_bounds = array<i64: 128, 1>}, {transform_indices = @transform_3, window_bounds = array<i64: 128, 8>}]} {
    %c0 = arith.constant 0 : index
    %c0_0 = arith.constant 0 : index
    %0 = vector.load %arg2[%c0, %c0_0] : memref<288x8xbf16, #tpu.memory_space<vmem>>, vector<288x8xbf16>
    %c0_1 = arith.constant 0 : index
    %c0_2 = arith.constant 0 : index
    %1 = vector.load %arg1[%c0_1, %c0_2] : memref<128x288xbf16, #tpu.memory_space<vmem>>, vector<128x288xbf16>
    %cst = arith.constant dense<0.000000e+00> : vector<128x8xf32>
    %2 = tpu.matmul %1, %0, %cst {dimension_numbers = #tpu.dot_dimension_numbers<[1], [0], [0], [1], [0, 0, 1, 1], [], []>} : vector<128x288xbf16>, vector<288x8xbf16>, vector<128x8xf32> -> vector<128x8xf32>
    %c0_3 = arith.constant 0 : index
    %c0_4 = arith.constant 0 : index
    %3 = vector.load %arg3[%c0_3, %c0_4] : memref<128x1xf32, #tpu.memory_space<vmem>>, vector<128x1xf32>
    %4 = vector.broadcast %3 : vector<128x1xf32> to vector<128x8xf32>
    %5 = arith.addf %2, %4 : vector<128x8xf32>
    %cst_5 = arith.constant 0.000000e+00 : f32
    %6 = vector.broadcast %cst_5 : f32 to vector<128x8xf32>
    %7 = arith.maximumf %5, %6 : vector<128x8xf32>
    %c0_6 = arith.constant 0 : index
    %c0_7 = arith.constant 0 : index
    %8 = vector.load %arg4[%c0_6, %c0_7] : memref<128x8xf32, #tpu.memory_space<vmem>>, vector<128x8xf32>
    tpu.vector_store %arg4[%c0_6, %c0_7], %7 {strides = array<i32>} : memref<128x8xf32, #tpu.memory_space<vmem>>, vector<128x8xf32>,
    return
  }
  func.func @transform_0(%arg0: i32) -> (i32, i32) {
    %c0_i32 = arith.constant 0 : i32
    %c0_i32_0 = arith.constant 0 : i32
    %c0_i32_1 = arith.constant 0 : i32
    return %c0_i32, %c0_i32_0 : i32, i32
  }
  func.func @transform_1(%arg0: i32) -> (i32, i32) {
    %c0_i32 = arith.constant 0 : i32
    %c0_i32_0 = arith.constant 0 : i32
    return %c0_i32, %arg0 : i32, i32
  }
  func.func @transform_2(%arg0: i32) -> (i32, i32) {
    %c0_i32 = arith.constant 0 : i32
    %c0_i32_0 = arith.constant 0 : i32
    %c0_i32_1 = arith.constant 0 : i32
    return %c0_i32, %c0_i32_0 : i32, i32
  }
  func.func @transform_3(%arg0: i32) -> (i32, i32) {
    %c0_i32 = arith.constant 0 : i32
    %c0_i32_0 = arith.constant 0 : i32
    return %c0_i32, %arg0 : i32, i32
  }
}

module attributes {stable_mosaic.version = 11 : i64} {
  func.func @_gemm_kernel(%arg0: i32, %arg1: memref<128x288xbf16, #tpu.memory_space<vmem>>, %arg2: memref<288x32xbf16, #tpu.memory_space<vmem>>, %arg3: memref<128x1xf32, #tpu.memory_space<vmem>>, %arg4: memref<128x32xf32, #tpu.memory_space<vmem>>) attributes {dimension_semantics = [#tpu.dimension_semantics<parallel>], iteration_bounds = array<i64: 1>, scalar_prefetch = 0 : i64, scratch_operands = 0 : i64, tpu.core_type = #tpu.core_type<tc>, window_params = [{pipeline_mode = #tpu.pipeline_mode<synchronous>, transform_indices = @transform_0, window_bounds = array<i64: 128, 288>}, {transform_indices = @transform_1, window_bounds = array<i64: 288, 32>}, {pipeline_mode = #tpu.pipeline_mode<synchronous>, transform_indices = @transform_2, window_bounds = array<i64: 128, 1>}, {transform_indices = @transform_3, window_bounds = array<i64: 128, 32>}]} {
    %c0 = arith.constant 0 : index
    %c0_0 = arith.constant 0 : index
    %0 = vector.load %arg2[%c0, %c0_0] : memref<288x32xbf16, #tpu.memory_space<vmem>>, vector<288x32xbf16>
    %c0_1 = arith.constant 0 : index
    %c0_2 = arith.constant 0 : index
    %1 = vector.load %arg1[%c0_1, %c0_2] : memref<128x288xbf16, #tpu.memory_space<vmem>>, vector<128x288xbf16>
    %cst = arith.constant dense<0.000000e+00> : vector<128x32xf32>
    %2 = tpu.matmul %1, %0, %cst {dimension_numbers = #tpu.dot_dimension_numbers<[1], [0], [0], [1], [0, 0, 1, 1], [], []>} : vector<128x288xbf16>, vector<288x32xbf16>, vector<128x32xf32> -> vector<128x32xf32>
    %c0_3 = arith.constant 0 : index
    %c0_4 = arith.constant 0 : index
    %3 = vector.load %arg3[%c0_3, %c0_4] : memref<128x1xf32, #tpu.memory_space<vmem>>, vector<128x1xf32>
    %4 = vector.broadcast %3 : vector<128x1xf32> to vector<128x32xf32>
    %5 = arith.addf %2, %4 : vector<128x32xf32>
    %cst_5 = arith.constant 0.000000e+00 : f32
    %6 = vector.broadcast %cst_5 : f32 to vector<128x32xf32>
    %7 = arith.maximumf %5, %6 : vector<128x32xf32>
    %c0_6 = arith.constant 0 : index
    %c0_7 = arith.constant 0 : index
    %8 = vector.load %arg4[%c0_6, %c0_7] : memref<128x32xf32, #tpu.memory_space<vmem>>, vector<128x32xf32>
    tpu.vector_store %arg4[%c0_6, %c0_7], %7 {strides = array<i32>} : memref<128x32xf32, #tpu.memory_space<vmem>>, vector<128x32xf32>,
    return
  }
  func.func @transform_0(%arg0: i32) -> (i32, i32) {
    %c0_i32 = arith.constant 0 : i32
    %c0_i32_0 = arith.constant 0 : i32
    %c0_i32_1 = arith.constant 0 : i32
    return %c0_i32, %c0_i32_0 : i32, i32
  }
  func.func @transform_1(%arg0: i32) -> (i32, i32) {
    %c0_i32 = arith.constant 0 : i32
    %c0_i32_0 = arith.constant 0 : i32
    return %c0_i32, %arg0 : i32, i32
  }
  func.func @transform_2(%arg0: i32) -> (i32, i32) {
    %c0_i32 = arith.constant 0 : i32
    %c0_i32_0 = arith.constant 0 : i32
    %c0_i32_1 = arith.constant 0 : i32
    return %c0_i32, %c0_i32_0 : i32, i32
  }
  func.func @transform_3(%arg0: i32) -> (i32, i32) {
    %c0_i32 = arith.constant 0 : i32
    %c0_i32_0 = arith.constant 0 : i32
    return %c0_i32, %arg0 : i32, i32
  }
}

module attributes {stable_mosaic.version = 11 : i64} {
  func.func @_gemm_kernel(%arg0: i32, %arg1: memref<128x288xbf16, #tpu.memory_space<vmem>>, %arg2: memref<288x128xbf16, #tpu.memory_space<vmem>>, %arg3: memref<128x1xf32, #tpu.memory_space<vmem>>, %arg4: memref<128x128xf32, #tpu.memory_space<vmem>>) attributes {dimension_semantics = [#tpu.dimension_semantics<parallel>], iteration_bounds = array<i64: 1>, scalar_prefetch = 0 : i64, scratch_operands = 0 : i64, tpu.core_type = #tpu.core_type<tc>, window_params = [{pipeline_mode = #tpu.pipeline_mode<synchronous>, transform_indices = @transform_0, window_bounds = array<i64: 128, 288>}, {transform_indices = @transform_1, window_bounds = array<i64: 288, 128>}, {pipeline_mode = #tpu.pipeline_mode<synchronous>, transform_indices = @transform_2, window_bounds = array<i64: 128, 1>}, {transform_indices = @transform_3, window_bounds = array<i64: 128, 128>}]} {
    %c0 = arith.constant 0 : index
    %c0_0 = arith.constant 0 : index
    %0 = vector.load %arg2[%c0, %c0_0] : memref<288x128xbf16, #tpu.memory_space<vmem>>, vector<288x128xbf16>
    %c0_1 = arith.constant 0 : index
    %c0_2 = arith.constant 0 : index
    %1 = vector.load %arg1[%c0_1, %c0_2] : memref<128x288xbf16, #tpu.memory_space<vmem>>, vector<128x288xbf16>
    %cst = arith.constant dense<0.000000e+00> : vector<128x128xf32>
    %2 = tpu.matmul %1, %0, %cst {dimension_numbers = #tpu.dot_dimension_numbers<[1], [0], [0], [1], [0, 0, 1, 1], [], []>} : vector<128x288xbf16>, vector<288x128xbf16>, vector<128x128xf32> -> vector<128x128xf32>
    %c0_3 = arith.constant 0 : index
    %c0_4 = arith.constant 0 : index
    %3 = vector.load %arg3[%c0_3, %c0_4] : memref<128x1xf32, #tpu.memory_space<vmem>>, vector<128x1xf32>
    %4 = vector.broadcast %3 : vector<128x1xf32> to vector<128x128xf32>
    %5 = arith.addf %2, %4 : vector<128x128xf32>
    %cst_5 = arith.constant 0.000000e+00 : f32
    %6 = vector.broadcast %cst_5 : f32 to vector<128x128xf32>
    %7 = arith.maximumf %5, %6 : vector<128x128xf32>
    %c0_6 = arith.constant 0 : index
    %c0_7 = arith.constant 0 : index
    %8 = vector.load %arg4[%c0_6, %c0_7] : memref<128x128xf32, #tpu.memory_space<vmem>>, vector<128x128xf32>
    tpu.vector_store %arg4[%c0_6, %c0_7], %7 {strides = array<i32>} : memref<128x128xf32, #tpu.memory_space<vmem>>, vector<128x128xf32>,
    return
  }
  func.func @transform_0(%arg0: i32) -> (i32, i32) {
    %c0_i32 = arith.constant 0 : i32
    %c0_i32_0 = arith.constant 0 : i32
    %c0_i32_1 = arith.constant 0 : i32
    return %c0_i32, %c0_i32_0 : i32, i32
  }
  func.func @transform_1(%arg0: i32) -> (i32, i32) {
    %c0_i32 = arith.constant 0 : i32
    %c0_i32_0 = arith.constant 0 : i32
    return %c0_i32, %arg0 : i32, i32
  }
  func.func @transform_2(%arg0: i32) -> (i32, i32) {
    %c0_i32 = arith.constant 0 : i32
    %c0_i32_0 = arith.constant 0 : i32
    %c0_i32_1 = arith.constant 0 : i32
    return %c0_i32, %c0_i32_0 : i32, i32
  }
  func.func @transform_3(%arg0: i32) -> (i32, i32) {
    %c0_i32 = arith.constant 0 : i32
    %c0_i32_0 = arith.constant 0 : i32
    return %c0_i32, %arg0 : i32, i32
  }
}

module attributes {stable_mosaic.version = 11 : i64} {
  func.func @_gemm_kernel(%arg0: i32, %arg1: memref<12x288xbf16, #tpu.memory_space<vmem>>, %arg2: memref<288x256xbf16, #tpu.memory_space<vmem>>, %arg3: memref<12x1xf32, #tpu.memory_space<vmem>>, %arg4: memref<12x256xf32, #tpu.memory_space<vmem>>) attributes {dimension_semantics = [#tpu.dimension_semantics<parallel>], iteration_bounds = array<i64: 2>, scalar_prefetch = 0 : i64, scratch_operands = 0 : i64, tpu.core_type = #tpu.core_type<tc>, window_params = [{pipeline_mode = #tpu.pipeline_mode<synchronous>, transform_indices = @transform_0, window_bounds = array<i64: 12, 288>}, {transform_indices = @transform_1, window_bounds = array<i64: 288, 256>}, {pipeline_mode = #tpu.pipeline_mode<synchronous>, transform_indices = @transform_2, window_bounds = array<i64: 12, 1>}, {transform_indices = @transform_3, window_bounds = array<i64: 12, 256>}]} {
    %c0 = arith.constant 0 : index
    %c0_0 = arith.constant 0 : index
    %0 = vector.load %arg2[%c0, %c0_0] : memref<288x256xbf16, #tpu.memory_space<vmem>>, vector<288x256xbf16>
    %c0_1 = arith.constant 0 : index
    %c0_2 = arith.constant 0 : index
    %1 = vector.load %arg1[%c0_1, %c0_2] : memref<12x288xbf16, #tpu.memory_space<vmem>>, vector<12x288xbf16>
    %cst = arith.constant dense<0.000000e+00> : vector<12x256xf32>
    %2 = tpu.matmul %1, %0, %cst {dimension_numbers = #tpu.dot_dimension_numbers<[1], [0], [0], [1], [0, 0, 1, 1], [], []>} : vector<12x288xbf16>, vector<288x256xbf16>, vector<12x256xf32> -> vector<12x256xf32>
    %c0_3 = arith.constant 0 : index
    %c0_4 = arith.constant 0 : index
    %3 = vector.load %arg3[%c0_3, %c0_4] : memref<12x1xf32, #tpu.memory_space<vmem>>, vector<12x1xf32>
    %4 = vector.broadcast %3 : vector<12x1xf32> to vector<12x256xf32>
    %5 = arith.addf %2, %4 : vector<12x256xf32>
    %c0_5 = arith.constant 0 : index
    %c0_6 = arith.constant 0 : index
    %6 = vector.load %arg4[%c0_5, %c0_6] : memref<12x256xf32, #tpu.memory_space<vmem>>, vector<12x256xf32>
    tpu.vector_store %arg4[%c0_5, %c0_6], %5 {strides = array<i32>} : memref<12x256xf32, #tpu.memory_space<vmem>>, vector<12x256xf32>,
    return
  }
  func.func @transform_0(%arg0: i32) -> (i32, i32) {
    %c0_i32 = arith.constant 0 : i32
    %c0_i32_0 = arith.constant 0 : i32
    %c0_i32_1 = arith.constant 0 : i32
    return %c0_i32, %c0_i32_0 : i32, i32
  }
  func.func @transform_1(%arg0: i32) -> (i32, i32) {
    %c0_i32 = arith.constant 0 : i32
    %c0_i32_0 = arith.constant 0 : i32
    return %c0_i32, %arg0 : i32, i32
  }
  func.func @transform_2(%arg0: i32) -> (i32, i32) {
    %c0_i32 = arith.constant 0 : i32
    %c0_i32_0 = arith.constant 0 : i32
    %c0_i32_1 = arith.constant 0 : i32
    return %c0_i32, %c0_i32_0 : i32, i32
  }
  func.func @transform_3(%arg0: i32) -> (i32, i32) {
    %c0_i32 = arith.constant 0 : i32
    %c0_i32_0 = arith.constant 0 : i32
    return %c0_i32, %arg0 : i32, i32
  }
}

</mosaic_0001>

<llo_original>
// kernel: vqvae_forward.19
$region0: #{vqvae_forward.19}
  #allocation0 [shape = 'u32[]', space=smem, size = 0x4, offset = 0x4, fixed_abs, tag = 'smem constant byte address 0x4 - core index']
  #allocation1 [shape = 'u32[144,128]{1,0:T(1,128)}', space=vmem, size = 0x12000, scoped, tag = 'internal scratch']
  %s0 = inlined_call_operand.vmem [shape: bf16[32,48], index: 0, kind: input, shape index: {}]
  %s1 = inlined_call_operand.vmem [shape: bf16[48,512], index: 1, kind: input, shape index: {}]
  %s2 = inlined_call_operand.vmem [shape: f32[32,1], index: 2, kind: input, shape index: {}]
  %s3 = inlined_call_operand.vmem [shape: f32[32,512], index: 3, kind: output, shape index: {}]
  %s4 = sld [smem:[#allocation0]]
  $region102: #{vqvae_forward.19} parent=0
    _
  %s6 = ssub.s32 1, %s4
  %s7 = scalar_select 0, %s6, %s4
  $region1: #{vqvae_forward.19} parent=0
    #allocation2 [shape = 'u8[49152]{0}', space=vmem, size = 0xc000, scoped, tag = 'input window, operand 1']
    #allocation3 [shape = 'u8[65536]{0}', space=vmem, size = 0x10000, scoped, tag = 'output window, operand 0']
    loop: start=0, step=1, limit=4
    $region2: #{vqvae_forward.19} parent=1 // loop_pre_header
      _
    $region3: #{vqvae_forward.19} parent=1 // loop_header
      %s9 = sphi 0, %s13
      %p10 = scmp.ge.s32.totalorder %s9, 4
      %s17 = sphi 0, %s17
      %s19 = sphi 0, %s17
      %s20 = sphi 0, %s19
      %s34 = sphi 0, %s20
      %s40 = sphi 0, %s42
      %s43 = sphi 0, %s40
      %s44 = sphi 0, %s43
      %s60 = sphi 0, %s44
      %s64 = sphi 0, %s64
      %s66 = sphi 0, %s64
      %s67 = sphi 0, %s66
      %s81 = sphi 0, %s67
      %s87 = sphi 0, %s89
      %s90 = sphi 0, %s87
      %s91 = sphi 0, %s90
      %s107 = sphi 0, %s91
    $region4: #{vqvae_forward.19} parent=1 // loop_header_branch
      %12 = sbr.rel (%p10) target = $region8
    $region5: #{vqvae_forward.19} parent=1 // loop_body
      %s14 = ssub.s32 %s9, 1
      %s15 = ssub.s32 %s9, 2
      %s16 = sadd.s32 %s9, 1
      %s18 = sadd.s32 %s17, 1
      %p21 = scmp.eq.s32.totalorder %s9, 1
      %p22 = scmp.ne.s32.totalorder %s17, %s19
      %p23 = scmp.eq.s32.totalorder %s9, 0
      %p24 = por %p22, %p23
      %p25 = scmp.ne.s32.totalorder %s17, %s19
      %p26 = scmp.eq.s32.totalorder %s14, 1
      %p27 = por %p25, %p26
      %p28 = scmp.ne.s32.totalorder %s19, %s20
      %p29 = scmp.eq.s32.totalorder %s14, 0
      %p30 = por %p28, %p29
      %p31 = scmp.ne.s32.totalorder %s19, %s20
      %p32 = scmp.eq.s32.totalorder %s15, 1
      %p33 = por %p31, %p32
      %p35 = scmp.ne.s32.totalorder %s20, %s34
      %p36 = scmp.eq.s32.totalorder %s15, 0
      %p37 = por %p35, %p36
      %s38 = ssub.s32 %s9, %s16
      %p39 = scmp.eq.s32.totalorder %s38, 0
      %s41 = sadd.s32 %s40, 1
      %s42 = scalar_select %p39, %s40, %s41
      %p45 = pneg %p39
      %p46 = scmp.eq.s32.totalorder %s9, 1
      %p47 = por %p45, %p46
      %p48 = scmp.ne.s32.totalorder %s40, %s43
      %p49 = scmp.eq.s32.totalorder %s9, 0
      %p50 = por %p48, %p49
      %p51 = scmp.ne.s32.totalorder %s40, %s43
      %p52 = scmp.eq.s32.totalorder %s14, 1
      %p53 = por %p51, %p52
      %p54 = scmp.ne.s32.totalorder %s43, %s44
      %p55 = scmp.eq.s32.totalorder %s14, 0
      %p56 = por %p54, %p55
      %p57 = scmp.ne.s32.totalorder %s43, %s44
      %p58 = scmp.eq.s32.totalorder %s15, 1
      %p59 = por %p57, %p58
      %p61 = scmp.ne.s32.totalorder %s44, %s60
      %p62 = scmp.eq.s32.totalorder %s15, 0
      %p63 = por %p61, %p62
      %s65 = sadd.s32 %s64, 1
      %p68 = scmp.eq.s32.totalorder %s9, 1
      %p69 = scmp.ne.s32.totalorder %s64, %s66
      %p70 = scmp.eq.s32.totalorder %s9, 0
      %p71 = por %p69, %p70
      %p72 = scmp.ne.s32.totalorder %s64, %s66
      %p73 = scmp.eq.s32.totalorder %s14, 1
      %p74 = por %p72, %p73
      %p75 = scmp.ne.s32.totalorder %s66, %s67
      %p76 = scmp.eq.s32.totalorder %s14, 0
      %p77 = por %p75, %p76
      %p78 = scmp.ne.s32.totalorder %s66, %s67
      %p79 = scmp.eq.s32.totalorder %s15, 1
      %p80 = por %p78, %p79
      %p82 = scmp.ne.s32.totalorder %s67, %s81
      %p83 = scmp.eq.s32.totalorder %s15, 0
      %p84 = por %p82, %p83
      %s85 = ssub.s32 %s9, %s16
      %p86 = scmp.eq.s32.totalorder %s85, 0
      %s88 = sadd.s32 %s87, 1
      %s89 = scalar_select %p86, %s87, %s88
      %p92 = pneg %p86
      %p93 = scmp.eq.s32.totalorder %s9, 1
      %p94 = por %p92, %p93
      %p95 = scmp.ne.s32.totalorder %s87, %s90
      %p96 = scmp.eq.s32.totalorder %s9, 0
      %p97 = por %p95, %p96
      %p98 = scmp.ne.s32.totalorder %s87, %s90
      %p99 = scmp.eq.s32.totalorder %s14, 1
      %p100 = por %p98, %p99
      %p101 = scmp.ne.s32.totalorder %s90, %s91
      %p102 = scmp.eq.s32.totalorder %s14, 0
      %p103 = por %p101, %p102
      %p104 = scmp.ne.s32.totalorder %s90, %s91
      %p105 = scmp.eq.s32.totalorder %s15, 1
      %p106 = por %p104, %p105
      %p108 = scmp.ne.s32.totalorder %s91, %s107
      %p109 = scmp.eq.s32.totalorder %s15, 0
      %p110 = por %p108, %p109
      %p111 = scmp.le.s32.totalorder 1, %s9
      %p112 = scmp.lt.s32.totalorder %s9, 3
      %p113 = pnand %p111, %p112
      %p114 = pneg %p113
      // Predicated region
      $region9: #{vqvae_forward.19} parent=5 // pred_check
        _
      $region10: #{vqvae_forward.19} parent=5 // pred_check_branch
        %116 = sbr.rel (%p113) target = $region12
      $region11: #{vqvae_forward.19} parent=5 // pred_region
        %s117 = ssub.s32 %s9, 1
        // Predicated region
        $region13: #{vqvae_forward.19} parent=11 // pred_check
          %p118 = pneg %p30
        $region14: #{vqvae_forward.19} parent=11 // pred_check_branch
          %120 = sbr.rel (%p118) target = $region16
        $region15: #{vqvae_forward.19} parent=11 // pred_region
          _
        $region16: #{vqvae_forward.19} parent=11 // pred_fallthru
          _
        // Predicated region
        $region17: #{vqvae_forward.19} parent=11 // pred_check
          %p121 = pneg %p77
        $region18: #{vqvae_forward.19} parent=11 // pred_check_branch
          %123 = sbr.rel (%p121) target = $region20
        $region19: #{vqvae_forward.19} parent=11 // pred_region
          _
        $region20: #{vqvae_forward.19} parent=11 // pred_fallthru
          _
      $region12: #{vqvae_forward.19} parent=5 // pred_fallthru
        _
      %p124 = scmp.lt.s32.totalorder %s9, 2
      // Predicated region
      $region21: #{vqvae_forward.19} parent=5 // pred_check
        %p125 = pneg %p124
      $region22: #{vqvae_forward.19} parent=5 // pred_check_branch
        %127 = sbr.rel (%p125) target = $region24
      $region23: #{vqvae_forward.19} parent=5 // pred_region
        // Predicated region
        $region25: #{vqvae_forward.19} parent=23 // pred_check
          %p128 = pneg %p50
        $region26: #{vqvae_forward.19} parent=23 // pred_check_branch
          %130 = sbr.rel (%p128) target = $region28
        $region27: #{vqvae_forward.19} parent=23 // pred_region
          %s131 = sand.u32 %s40, 1
          %s132 = sand.u32 %s40, 1
          %s133 = smul.addr %s132, 48
          %s134 = scalar_lea.vmem [#allocation2], %s133
          %s135 = smul.u32 2, %s9
          %s136 = smul.addr %s135, 4
          %s137 = scalar_lea.vmem %s1, %s136
          // Predicated region
          $region29: #{vqvae_forward.19} parent=27 // pred_check
            _
          $region30: #{vqvae_forward.19} parent=27 // pred_check_branch
            %139 = sbr.rel (0) target = $region32
          $region31: #{vqvae_forward.19} parent=27 // pred_region
            // Predicated region
            $region33: #{vqvae_forward.19} parent=31 // pred_check
              _
            $region34: #{vqvae_forward.19} parent=31 // pred_check_branch
              %141 = sbr.rel (0) target = $region36
            $region35: #{vqvae_forward.19} parent=31 // pred_region
              // Predicated region
              $region48: #{vqvae_forward.19} parent=35 // pred_check
                _
              $region49: #{vqvae_forward.19} parent=35 // pred_check_branch
                %167 = sbr.rel (0) target = $region51
              $region50: #{vqvae_forward.19} parent=35 // pred_region
                loop: start=0, step=1, limit=1
                $region52: #{vqvae_forward.19} parent=50 // loop_pre_header
                  _
                $region53: #{vqvae_forward.19} parent=50 // loop_header
                  %s169 = sphi 0, %s173
                  %p170 = scmp.ge.s32.totalorder %s169, 1
                  %s174 = sphi %s137, %s137
                  %s175 = sphi %s134, %s134
                $region54: #{vqvae_forward.19} parent=50 // loop_header_branch
                  %172 = sbr.rel (%p170) target = $region58
                $region55: #{vqvae_forward.19} parent=50 // loop_body
                  %v176 = vld [vmem:[%s174] sm:$0xff]
                  %177 = vst [vmem:[%s175] sm:$0xff] %v176
                  %v178 = vld [vmem:[%s174 + $0x10] sm:$0xff]
                  %179 = vst [vmem:[%s175 + $0x8] sm:$0xff] %v178
                  %v180 = vld [vmem:[%s174 + $0x20] sm:$0xff]
                  %181 = vst [vmem:[%s175 + $0x10] sm:$0xff] %v180
                  %v182 = vld [vmem:[%s174 + $0x30] sm:$0xff]
                  %183 = vst [vmem:[%s175 + $0x18] sm:$0xff] %v182
                  %v184 = vld [vmem:[%s174 + $0x40] sm:$0xff]
                  %185 = vst [vmem:[%s175 + $0x20] sm:$0xff] %v184
                  %v186 = vld [vmem:[%s174 + $0x50] sm:$0xff]
                  %187 = vst [vmem:[%s175 + $0x28] sm:$0xff] %v186
                $region56: #{vqvae_forward.19} parent=50 // loop_footer
                  %s173 = sadd.s32 1, %s169
                $region57: #{vqvae_forward.19} parent=50 // loop_footer_branch
                  %168 = sbr.rel target = $region53
                $region58: #{vqvae_forward.19} parent=50 // loop_exit
                  _
              $region51: #{vqvae_forward.19} parent=35 // pred_fallthru
                _
              // Predicated region
              $region59: #{vqvae_forward.19} parent=35 // pred_check
                _
              $region60: #{vqvae_forward.19} parent=35 // pred_check_branch
                %189 = sbr.rel target = $region62
              $region61: #{vqvae_forward.19} parent=35 // pred_region
                _
              $region62: #{vqvae_forward.19} parent=35 // pred_fallthru
                _
            $region36: #{vqvae_forward.19} parent=31 // pred_fallthru
              _
            // Predicated region
            $region37: #{vqvae_forward.19} parent=31 // pred_check
              _
            $region38: #{vqvae_forward.19} parent=31 // pred_check_branch
              %143 = sbr.rel target = $region40
            $region39: #{vqvae_forward.19} parent=31 // pred_region
              %s145 = ssub.s32 256, 1
              loop: start=0, step=1, limit=1
              $region41: #{vqvae_forward.19} parent=39 // loop_pre_header
                _
              $region42: #{vqvae_forward.19} parent=39 // loop_header
                %s147 = sphi 0, %s151
                %p148 = scmp.ge.s32.totalorder %s147, 1
                %s152 = sphi %s137, %s137
                %s153 = sphi %s134, %s134
              $region43: #{vqvae_forward.19} parent=39 // loop_header_branch
                %150 = sbr.rel (%p148) target = $region47
              $region44: #{vqvae_forward.19} parent=39 // loop_body
                %v154 = vld [vmem:[%s152] sm:%s145]
                %155 = vst [vmem:[%s153] sm:%s145] %v154
                %v156 = vld [vmem:[%s152 + $0x10] sm:%s145]
                %157 = vst [vmem:[%s153 + $0x8] sm:%s145] %v156
                %v158 = vld [vmem:[%s152 + $0x20] sm:%s145]
                %159 = vst [vmem:[%s153 + $0x10] sm:%s145] %v158
                %v160 = vld [vmem:[%s152 + $0x30] sm:%s145]
                %161 = vst [vmem:[%s153 + $0x18] sm:%s145] %v160
                %v162 = vld [vmem:[%s152 + $0x40] sm:%s145]
                %163 = vst [vmem:[%s153 + $0x20] sm:%s145] %v162
                %v164 = vld [vmem:[%s152 + $0x50] sm:%s145]
                %165 = vst [vmem:[%s153 + $0x28] sm:%s145] %v164
              $region45: #{vqvae_forward.19} parent=39 // loop_footer
                %s151 = sadd.s32 1, %s147
              $region46: #{vqvae_forward.19} parent=39 // loop_footer_branch
                %146 = sbr.rel target = $region42
              $region47: #{vqvae_forward.19} parent=39 // loop_exit
                _
            $region40: #{vqvae_forward.19} parent=31 // pred_fallthru
              _
          $region32: #{vqvae_forward.19} parent=27 // pred_fallthru
            _
          %190 = vnop
        $region28: #{vqvae_forward.19} parent=23 // pred_fallthru
          _
      $region24: #{vqvae_forward.19} parent=5 // pred_fallthru
        _
      %p191 = scmp.le.s32.totalorder 1, %s9
      %p192 = scmp.lt.s32.totalorder %s9, 3
      %p193 = pnand %p191, %p192
      %p194 = pneg %p193
      // Predicated region
      $region63: #{vqvae_forward.19} parent=5 // pred_check
        _
      $region64: #{vqvae_forward.19} parent=5 // pred_check_branch
        %196 = sbr.rel (%p193) target = $region66
      $region65: #{vqvae_forward.19} parent=5 // pred_region
        %s197 = ssub.s32 %s9, 1
        %s198 = sand.u32 %s43, 1
        %s199 = sand.u32 %s43, 1
        %s200 = smul.addr %s199, 48
        %s201 = scalar_lea.vmem [#allocation2], %s200
        // Predicated region
        $region67: #{vqvae_forward.19} parent=65 // pred_check
          %p202 = pneg %p56
        $region68: #{vqvae_forward.19} parent=65 // pred_check_branch
          %204 = sbr.rel (%p202) target = $region70
        $region69: #{vqvae_forward.19} parent=65 // pred_region
          _
        $region70: #{vqvae_forward.19} parent=65 // pred_fallthru
          _
        %p205 = pneg %p30
        %p206 = pneg %p27
        %s207 = sand.u32 %s43, 1
        %s208 = sand.u32 %s43, 1
        %s209 = smul.addr %s208, 48
        %s210 = scalar_lea.vmem [#allocation2], %s209
        %p211 = pneg %p56
        %p212 = pneg %p53
        %p213 = pneg %p77
        %p214 = pneg %p74
        %p215 = pneg %p103
        %p216 = pneg %p100
        %s217 = sand.u32 %s90, 1
        %s218 = sand.u32 %s90, 1
        %s219 = smul.addr %s218, 64
        %s220 = scalar_lea.vmem [#allocation3], %s219
        %s221 = smul.u32 2, %s14
        %s222 = smul.u32 2, %s14
        %v224 = vld [vmem:[%s201] sm:$0xff]
        %v225 = vld [vmem:[%s201 + $0x8] sm:$0xff]
        %v226 = vld [vmem:[%s201 + $0x10] sm:$0xff]
        %v227 = vld [vmem:[%s201 + $0x18] sm:$0xff]
        %v228 = vld [vmem:[%s201 + $0x20] sm:$0xff]
        %v229 = vld [vmem:[%s201 + $0x28] sm:$0xff]
        %v230 = vld [vmem:[%s0] sm:$0xf]
        %v231 = vld [vmem:[%s0 + $0x4] sm:$0xf]
        %v232 = vld [vmem:[%s0 + $0x8] sm:$0xf]
        %v233 = vld [vmem:[%s0 + $0xc] sm:$0xf]
        %v234 = vld [vmem:[%s2] sm:$0xff]
        %v235 = vld [vmem:[%s2 + $0x8] sm:$0xff]
        %v236 = vld [vmem:[%s2 + $0x10] sm:$0xff]
        %v237 = vld [vmem:[%s2 + $0x18] sm:$0xff]
        %239 = vset.pattern.permute.xlu0 0
        %240 = vperm.xlu0 %239, %v234
        %v241 = vpop.permute.xlu0 %240
        %244 = vset.pattern.permute.xlu0 0
        %245 = vperm.xlu0 %244, %v235
        %v246 = vpop.permute.xlu0 %245
        %249 = vset.pattern.permute.xlu0 0
        %250 = vperm.xlu0 %249, %v236
        %v251 = vpop.permute.xlu0 %250
        %254 = vset.pattern.permute.xlu0 0
        %255 = vperm.xlu0 %254, %v237
        %v256 = vpop.permute.xlu0 %255
        %v262 = vunpack.c.l.b16 %v230
        %v263 = vunpack.c.l.b16 %v231
        %v264 = vunpack.c.l.b16 %v232
        %v265 = vunpack.c.l.b16 %v233
        %v266 = vpack.c.b16 %v263, %v262
        %v267 = vpack.c.b16 %v265, %v264
        %v274 = vunpack.c.l.b16 %v224
        %v275 = vunpack.c.h.b16 %v224
        %v276 = vunpack.c.l.b16 %v225
        %v277 = vunpack.c.h.b16 %v225
        %v278 = vunpack.c.l.b16 %v226
        %v279 = vunpack.c.h.b16 %v226
        %v280 = vunpack.c.l.b16 %v227
        %v281 = vunpack.c.h.b16 %v227
        %v282 = vunpack.c.l.b16 %v228
        %v283 = vunpack.c.h.b16 %v228
        %v284 = vunpack.c.l.b16 %v229
        %v285 = vunpack.c.h.b16 %v229
        %v286 = vpack.c.b16 %v276, %v274
        %v287 = vpack.c.b16 %v277, %v275
        %v288 = vpack.c.b16 %v280, %v278
        %v289 = vpack.c.b16 %v281, %v279
        %v290 = vpack.c.b16 %v284, %v282
        %v291 = vpack.c.b16 %v285, %v283
        %vm298 = vcmask 392192
        %v300 = vsel %vm298, %v266, 0
        %v303 = vsel %vm298, %v267, 0
        %305 = vmatprep.subr.bf16.mxu0 0
        %306 = vmatpush1.bf16.msra.mxu0 0
        %307 = vmatprep.subr.bf16.mxu0 0
        %308 = vmatpush1.bf16.msra.mxu0 0
        %309 = vmatprep.subr.bf16.mxu0 0
        %310 = vmatpush1.bf16.msra.mxu0 0
        %311 = vmatprep.subr.bf16.mxu0 0
        %312 = vmatpush1.bf16.msra.mxu0 0
        %313 = vmatprep.subr.bf16.mxu0 0
        %314 = vmatpush1.bf16.msra.mxu0 0
        %315 = vmatprep.subr.bf16.mxu0 %v291
        %316 = vmatpush1.bf16.msra.mxu0 %v290
        %317 = vmatprep.subr.bf16.mxu0 %v289
        %318 = vmatpush1.bf16.msra.mxu0 %v288
        %319 = vmatprep.subr.bf16.mxu0 %v287
        %320 = vmatpush1.bf16.msra.mxu0 %v286
        %321 = vmatprep.subr.bf16.mxu0 0
        %322 = vmatpush2.bf16.msra.mxu0 0
        %323 = vmatprep.subr.bf16.mxu0 0
        %324 = vmatpush2.bf16.msra.mxu0 0
        %325 = vmatprep.subr.bf16.mxu0 0
        %326 = vmatpush2.bf16.msra.mxu0 0
        %327 = vmatprep.subr.bf16.mxu0 0
        %328 = vmatpush2.bf16.msra.mxu0 0
        %329 = vmatprep.subr.bf16.mxu0 0
        %330 = vmatpush2.bf16.msra.mxu0 0
        %331 = vmatprep.subr.bf16.mxu0 0
        %332 = vmatpush2.bf16.msra.mxu0 0
        %333 = vmatprep.subr.bf16.mxu0 0
        %334 = vmatpush2.bf16.msra.mxu0 0
        %335 = vmatprep.subr.bf16.mxu0 0
        %336 = vmatpush2.bf16.msra.mxu0 0
        %337 = vmatprep.mubr.bf16.mxu0 0
        %338 = vmatmul.mubr.bf16.gmra.mxu0 %v300
        %v339 = vpop.f32.mrf.mxu0
        %v340 = vadd.f32 %v241, %v339
        %v341 = vpop.f32.mrf.mxu0
        %v342 = vadd.f32 %v241, %v341
        %v343 = vpop.f32.mrf.mxu0
        %v344 = vadd.f32 %v246, %v343
        %v345 = vpop.f32.mrf.mxu0
        %v346 = vadd.f32 %v246, %v345
        %347 = vmatprep.mubr.bf16.mxu0 0
        %348 = vmatmul.mubr.bf16.gmra.mxu0 %v303
        %v349 = vpop.f32.mrf.mxu0
        %v350 = vadd.f32 %v251, %v349
        %v351 = vpop.f32.mrf.mxu0
        %v352 = vadd.f32 %v251, %v351
        %v353 = vpop.f32.mrf.mxu0
        %v354 = vadd.f32 %v256, %v353
        %v355 = vpop.f32.mrf.mxu0
        %v356 = vadd.f32 %v256, %v355
        %357 = vdwg.mxu0
        %v358 = vmax.f32 %v340, 0.0
        %v359 = vmax.f32 %v342, 0.0
        %v360 = vmax.f32 %v344, 0.0
        %v361 = vmax.f32 %v346, 0.0
        %v362 = vmax.f32 %v350, 0.0
        %v363 = vmax.f32 %v352, 0.0
        %v364 = vmax.f32 %v354, 0.0
        %v365 = vmax.f32 %v356, 0.0
        %366 = vst [vmem:[%s220] sm:$0xff] %v358
        %367 = vst [vmem:[%s220 + $0x8] sm:$0xff] %v359
        %368 = vst [vmem:[%s220 + $0x10] sm:$0xff] %v360
        %369 = vst [vmem:[%s220 + $0x18] sm:$0xff] %v361
        %370 = vst [vmem:[%s220 + $0x20] sm:$0xff] %v362
        %371 = vst [vmem:[%s220 + $0x28] sm:$0xff] %v363
        %372 = vst [vmem:[%s220 + $0x30] sm:$0xff] %v364
        %373 = vst [vmem:[%s220 + $0x38] sm:$0xff] %v365
        %s374 = sand.u32 %s90, 1
        %s375 = sand.u32 %s90, 1
        %s376 = smul.addr %s375, 64
        %s377 = scalar_lea.vmem [#allocation3], %s376
        // Predicated region
        $region71: #{vqvae_forward.19} parent=65 // pred_check
          %p378 = pneg %p100
        $region72: #{vqvae_forward.19} parent=65 // pred_check_branch
          %380 = sbr.rel (%p378) target = $region74
        $region73: #{vqvae_forward.19} parent=65 // pred_region
          %s381 = smul.u32 2, %s14
          %s382 = smul.addr %s381, 8
          %s383 = scalar_lea.vmem %s3, %s382
          // Predicated region
          $region75: #{vqvae_forward.19} parent=73 // pred_check
            _
          $region76: #{vqvae_forward.19} parent=73 // pred_check_branch
            %385 = sbr.rel (0) target = $region78
          $region77: #{vqvae_forward.19} parent=73 // pred_region
            // Predicated region
            $region79: #{vqvae_forward.19} parent=77 // pred_check
              _
            $region80: #{vqvae_forward.19} parent=77 // pred_check_branch
              %387 = sbr.rel (0) target = $region82
            $region81: #{vqvae_forward.19} parent=77 // pred_region
              loop: start=0, step=1, limit=1
              $region83: #{vqvae_forward.19} parent=81 // loop_pre_header
                _
              $region84: #{vqvae_forward.19} parent=81 // loop_header
                %s389 = sphi 0, %s393
                %p390 = scmp.ge.s32.totalorder %s389, 1
                %s394 = sphi %s377, %s377
                %s395 = sphi %s383, %s383
              $region85: #{vqvae_forward.19} parent=81 // loop_header_branch
                %392 = sbr.rel (%p390) target = $region89
              $region86: #{vqvae_forward.19} parent=81 // loop_body
                %v396 = vld [vmem:[%s394] sm:$0xff]
                %397 = vst [vmem:[%s395] sm:$0xff] %v396
                %v398 = vld [vmem:[%s394 + $0x8] sm:$0xff]
                %399 = vst [vmem:[%s395 + $0x8] sm:$0xff] %v398
                %v400 = vld [vmem:[%s394 + $0x10] sm:$0xff]
                %401 = vst [vmem:[%s395 + $0x20] sm:$0xff] %v400
                %v402 = vld [vmem:[%s394 + $0x18] sm:$0xff]
                %403 = vst [vmem:[%s395 + $0x28] sm:$0xff] %v402
                %v404 = vld [vmem:[%s394 + $0x20] sm:$0xff]
                %405 = vst [vmem:[%s395 + $0x40] sm:$0xff] %v404
                %v406 = vld [vmem:[%s394 + $0x28] sm:$0xff]
                %407 = vst [vmem:[%s395 + $0x48] sm:$0xff] %v406
                %v408 = vld [vmem:[%s394 + $0x30] sm:$0xff]
                %409 = vst [vmem:[%s395 + $0x60] sm:$0xff] %v408
                %v410 = vld [vmem:[%s394 + $0x38] sm:$0xff]
                %411 = vst [vmem:[%s395 + $0x68] sm:$0xff] %v410
              $region87: #{vqvae_forward.19} parent=81 // loop_footer
                %s393 = sadd.s32 1, %s389
              $region88: #{vqvae_forward.19} parent=81 // loop_footer_branch
                %388 = sbr.rel target = $region84
              $region89: #{vqvae_forward.19} parent=81 // loop_exit
                _
            $region82: #{vqvae_forward.19} parent=77 // pred_fallthru
              _
            // Predicated region
            $region90: #{vqvae_forward.19} parent=77 // pred_check
              _
            $region91: #{vqvae_forward.19} parent=77 // pred_check_branch
              %413 = sbr.rel target = $region93
            $region92: #{vqvae_forward.19} parent=77 // pred_region
              _
            $region93: #{vqvae_forward.19} parent=77 // pred_fallthru
              _
          $region78: #{vqvae_forward.19} parent=73 // pred_fallthru
            _
          %414 = vnop
        $region74: #{vqvae_forward.19} parent=65 // pred_fallthru
          _
      $region66: #{vqvae_forward.19} parent=5 // pred_fallthru
        _
      %p415 = scmp.le.s32.totalorder 2, %s9
      // Predicated region
      $region94: #{vqvae_forward.19} parent=5 // pred_check
        %p416 = pneg %p415
      $region95: #{vqvae_forward.19} parent=5 // pred_check_branch
        %418 = sbr.rel (%p416) target = $region97
      $region96: #{vqvae_forward.19} parent=5 // pred_region
        %s419 = ssub.s32 %s9, 2
        // Predicated region
        $region98: #{vqvae_forward.19} parent=96 // pred_check
          %p420 = pneg %p106
        $region99: #{vqvae_forward.19} parent=96 // pred_check_branch
          %422 = sbr.rel (%p420) target = $region101
        $region100: #{vqvae_forward.19} parent=96 // pred_region
          %s423 = sand.u32 %s91, 1
          %s424 = sand.u32 %s91, 1
          %s425 = smul.addr %s424, 64
          %s426 = scalar_lea.vmem [#allocation3], %s425
        $region101: #{vqvae_forward.19} parent=96 // pred_fallthru
          _
      $region97: #{vqvae_forward.19} parent=5 // pred_fallthru
        _
    $region6: #{vqvae_forward.19} parent=1 // loop_footer
      %s13 = sadd.s32 1, %s9
    $region7: #{vqvae_forward.19} parent=1 // loop_footer_branch
      %8 = sbr.rel target = $region3
    $region8: #{vqvae_forward.19} parent=1 // loop_exit
      _

// kernel: vqvae_forward.20
$region0: #{vqvae_forward.20}
  #allocation0 [shape = 'u32[]', space=smem, size = 0x4, offset = 0x4, fixed_abs, tag = 'smem constant byte address 0x4 - core index']
  #allocation1 [shape = 'u32[144,128]{1,0:T(1,128)}', space=vmem, size = 0x12000, scoped, tag = 'internal scratch']
  %s0 = inlined_call_operand.vmem [shape: bf16[32,512], index: 0, kind: input, shape index: {}]
  %s1 = inlined_call_operand.vmem [shape: bf16[512,128], index: 1, kind: input, shape index: {}]
  %s2 = inlined_call_operand.vmem [shape: f32[32,1], index: 2, kind: input, shape index: {}]
  %s3 = inlined_call_operand.vmem [shape: f32[32,128], index: 3, kind: output, shape index: {}]
  %s4 = sld [smem:[#allocation0]]
  $region22: #{vqvae_forward.20} parent=0
    _
  %s6 = ssub.s32 1, %s4
  %s7 = scalar_select 0, %s6, %s4
  // Predicated region
  $region2: #{vqvae_forward.20} parent=0 // pred_check
    _
  $region3: #{vqvae_forward.20} parent=0 // pred_check_branch
    %9 = sbr.rel (0) target = $region5
  $region4: #{vqvae_forward.20} parent=0 // pred_region
    _
  $region5: #{vqvae_forward.20} parent=0 // pred_fallthru
    _
  // Predicated region
  $region6: #{vqvae_forward.20} parent=0 // pred_check
    _
  $region7: #{vqvae_forward.20} parent=0 // pred_check_branch
    %11 = sbr.rel (0) target = $region9
  $region8: #{vqvae_forward.20} parent=0 // pred_region
    _
  $region9: #{vqvae_forward.20} parent=0 // pred_fallthru
    _
  // Predicated region
  $region10: #{vqvae_forward.20} parent=0 // pred_check
    _
  $region11: #{vqvae_forward.20} parent=0 // pred_check_branch
    %13 = sbr.rel (0) target = $region13
  $region12: #{vqvae_forward.20} parent=0 // pred_region
    _
  $region13: #{vqvae_forward.20} parent=0 // pred_fallthru
    _
  %v15 = vld [vmem:[%s1] sm:$0xf]
  %v16 = vld [vmem:[%s1 + $0x4] sm:$0xf]
  %v17 = vld [vmem:[%s1 + $0x8] sm:$0xf]
  %v18 = vld [vmem:[%s1 + $0xc] sm:$0xf]
  %v19 = vld [vmem:[%s1 + $0x10] sm:$0xf]
  %v20 = vld [vmem:[%s1 + $0x14] sm:$0xf]
  %v21 = vld [vmem:[%s1 + $0x18] sm:$0xf]
  %v22 = vld [vmem:[%s1 + $0x1c] sm:$0xf]
  %v23 = vld [vmem:[%s1 + $0x20] sm:$0xf]
  %v24 = vld [vmem:[%s1 + $0x24] sm:$0xf]
  %v25 = vld [vmem:[%s1 + $0x28] sm:$0xf]
  %v26 = vld [vmem:[%s1 + $0x2c] sm:$0xf]
  %v27 = vld [vmem:[%s1 + $0x30] sm:$0xf]
  %v28 = vld [vmem:[%s1 + $0x34] sm:$0xf]
  %v29 = vld [vmem:[%s1 + $0x38] sm:$0xf]
  %v30 = vld [vmem:[%s1 + $0x3c] sm:$0xf]
  %v31 = vld [vmem:[%s1 + $0x40] sm:$0xf]
  %v32 = vld [vmem:[%s1 + $0x44] sm:$0xf]
  %v33 = vld [vmem:[%s1 + $0x48] sm:$0xf]
  %v34 = vld [vmem:[%s1 + $0x4c] sm:$0xf]
  %v35 = vld [vmem:[%s1 + $0x50] sm:$0xf]
  %v36 = vld [vmem:[%s1 + $0x54] sm:$0xf]
  %v37 = vld [vmem:[%s1 + $0x58] sm:$0xf]
  %v38 = vld [vmem:[%s1 + $0x5c] sm:$0xf]
  %v39 = vld [vmem:[%s1 + $0x60] sm:$0xf]
  %v40 = vld [vmem:[%s1 + $0x64] sm:$0xf]
  %v41 = vld [vmem:[%s1 + $0x68] sm:$0xf]
  %v42 = vld [vmem:[%s1 + $0x6c] sm:$0xf]
  %v43 = vld [vmem:[%s1 + $0x70] sm:$0xf]
  %v44 = vld [vmem:[%s1 + $0x74] sm:$0xf]
  %v45 = vld [vmem:[%s1 + $0x78] sm:$0xf]
  %v46 = vld [vmem:[%s1 + $0x7c] sm:$0xf]
  %v47 = vld [vmem:[%s1 + $0x80] sm:$0xf]
  %v48 = vld [vmem:[%s1 + $0x84] sm:$0xf]
  %v49 = vld [vmem:[%s1 + $0x88] sm:$0xf]
  %v50 = vld [vmem:[%s1 + $0x8c] sm:$0xf]
  %v51 = vld [vmem:[%s1 + $0x90] sm:$0xf]
  %v52 = vld [vmem:[%s1 + $0x94] sm:$0xf]
  %v53 = vld [vmem:[%s1 + $0x98] sm:$0xf]
  %v54 = vld [vmem:[%s1 + $0x9c] sm:$0xf]
  %v55 = vld [vmem:[%s1 + $0xa0] sm:$0xf]
  %v56 = vld [vmem:[%s1 + $0xa4] sm:$0xf]
  %v57 = vld [vmem:[%s1 + $0xa8] sm:$0xf]
  %v58 = vld [vmem:[%s1 + $0xac] sm:$0xf]
  %v59 = vld [vmem:[%s1 + $0xb0] sm:$0xf]
  %v60 = vld [vmem:[%s1 + $0xb4] sm:$0xf]
  %v61 = vld [vmem:[%s1 + $0xb8] sm:$0xf]
  %v62 = vld [vmem:[%s1 + $0xbc] sm:$0xf]
  %v63 = vld [vmem:[%s1 + $0xc0] sm:$0xf]
  %v64 = vld [vmem:[%s1 + $0xc4] sm:$0xf]
  %v65 = vld [vmem:[%s1 + $0xc8] sm:$0xf]
  %v66 = vld [vmem:[%s1 + $0xcc] sm:$0xf]
  %v67 = vld [vmem:[%s1 + $0xd0] sm:$0xf]
  %v68 = vld [vmem:[%s1 + $0xd4] sm:$0xf]
  %v69 = vld [vmem:[%s1 + $0xd8] sm:$0xf]
  %v70 = vld [vmem:[%s1 + $0xdc] sm:$0xf]
  %v71 = vld [vmem:[%s1 + $0xe0] sm:$0xf]
  %v72 = vld [vmem:[%s1 + $0xe4] sm:$0xf]
  %v73 = vld [vmem:[%s1 + $0xe8] sm:$0xf]
  %v74 = vld [vmem:[%s1 + $0xec] sm:$0xf]
  %v75 = vld [vmem:[%s1 + $0xf0] sm:$0xf]
  %v76 = vld [vmem:[%s1 + $0xf4] sm:$0xf]
  %v77 = vld [vmem:[%s1 + $0xf8] sm:$0xf]
  %v78 = vld [vmem:[%s1 + $0xfc] sm:$0xf]
  %v79 = vld [vmem:[%s0] sm:$0xff]
  %v80 = vld [vmem:[%s0 + $0x8] sm:$0xff]
  %v81 = vld [vmem:[%s0 + $0x10] sm:$0xff]
  %v82 = vld [vmem:[%s0 + $0x18] sm:$0xff]
  %v83 = vld [vmem:[%s0 + $0x20] sm:$0xff]
  %v84 = vld [vmem:[%s0 + $0x28] sm:$0xff]
  %v85 = vld [vmem:[%s0 + $0x30] sm:$0xff]
  %v86 = vld [vmem:[%s0 + $0x38] sm:$0xff]
  %v87 = vld [vmem:[%s2] sm:$0xff]
  %v88 = vld [vmem:[%s2 + $0x8] sm:$0xff]
  %v89 = vld [vmem:[%s2 + $0x10] sm:$0xff]
  %v90 = vld [vmem:[%s2 + $0x18] sm:$0xff]
  %92 = vset.pattern.permute.xlu0 0
  %93 = vperm.xlu0 %92, %v87
  %v94 = vpop.permute.xlu0 %93
  %97 = vset.pattern.permute.xlu0 0
  %98 = vperm.xlu0 %97, %v88
  %v99 = vpop.permute.xlu0 %98
  %102 = vset.pattern.permute.xlu0 0
  %103 = vperm.xlu0 %102, %v89
  %v104 = vpop.permute.xlu0 %103
  %107 = vset.pattern.permute.xlu0 0
  %108 = vperm.xlu0 %107, %v90
  %v109 = vpop.permute.xlu0 %108
  %v119 = vunpack.c.l.b16 %v79
  %v120 = vunpack.c.h.b16 %v79
  %v121 = vunpack.c.l.b16 %v80
  %v122 = vunpack.c.h.b16 %v80
  %v123 = vunpack.c.l.b16 %v81
  %v124 = vunpack.c.h.b16 %v81
  %v125 = vunpack.c.l.b16 %v82
  %v126 = vunpack.c.h.b16 %v82
  %v127 = vunpack.c.l.b16 %v83
  %v128 = vunpack.c.h.b16 %v83
  %v129 = vunpack.c.l.b16 %v84
  %v130 = vunpack.c.h.b16 %v84
  %v131 = vunpack.c.l.b16 %v85
  %v132 = vunpack.c.h.b16 %v85
  %v133 = vunpack.c.l.b16 %v86
  %v134 = vunpack.c.h.b16 %v86
  %v135 = vpack.c.b16 %v123, %v119
  %v136 = vpack.c.b16 %v124, %v120
  %v137 = vpack.c.b16 %v125, %v121
  %v138 = vpack.c.b16 %v126, %v122
  %v139 = vpack.c.b16 %v131, %v127
  %v140 = vpack.c.b16 %v132, %v128
  %v141 = vpack.c.b16 %v133, %v129
  %v142 = vpack.c.b16 %v134, %v130
  %v215 = vunpack.c.l.b16 %v15
  %v216 = vunpack.c.l.b16 %v16
  %v217 = vunpack.c.l.b16 %v17
  %v218 = vunpack.c.l.b16 %v18
  %v219 = vunpack.c.l.b16 %v19
  %v220 = vunpack.c.l.b16 %v20
  %v221 = vunpack.c.l.b16 %v21
  %v222 = vunpack.c.l.b16 %v22
  %v223 = vunpack.c.l.b16 %v23
  %v224 = vunpack.c.l.b16 %v24
  %v225 = vunpack.c.l.b16 %v25
  %v226 = vunpack.c.l.b16 %v26
  %v227 = vunpack.c.l.b16 %v27
  %v228 = vunpack.c.l.b16 %v28
  %v229 = vunpack.c.l.b16 %v29
  %v230 = vunpack.c.l.b16 %v30
  %v231 = vunpack.c.l.b16 %v31
  %v232 = vunpack.c.l.b16 %v32
  %v233 = vunpack.c.l.b16 %v33
  %v234 = vunpack.c.l.b16 %v34
  %v235 = vunpack.c.l.b16 %v35
  %v236 = vunpack.c.l.b16 %v36
  %v237 = vunpack.c.l.b16 %v37
  %v238 = vunpack.c.l.b16 %v38
  %v239 = vunpack.c.l.b16 %v39
  %v240 = vunpack.c.l.b16 %v40
  %v241 = vunpack.c.l.b16 %v41
  %v242 = vunpack.c.l.b16 %v42
  %v243 = vunpack.c.l.b16 %v43
  %v244 = vunpack.c.l.b16 %v44
  %v245 = vunpack.c.l.b16 %v45
  %v246 = vunpack.c.l.b16 %v46
  %v247 = vunpack.c.l.b16 %v47
  %v248 = vunpack.c.l.b16 %v48
  %v249 = vunpack.c.l.b16 %v49
  %v250 = vunpack.c.l.b16 %v50
  %v251 = vunpack.c.l.b16 %v51
  %v252 = vunpack.c.l.b16 %v52
  %v253 = vunpack.c.l.b16 %v53
  %v254 = vunpack.c.l.b16 %v54
  %v255 = vunpack.c.l.b16 %v55
  %v256 = vunpack.c.l.b16 %v56
  %v257 = vunpack.c.l.b16 %v57
  %v258 = vunpack.c.l.b16 %v58
  %v259 = vunpack.c.l.b16 %v59
  %v260 = vunpack.c.l.b16 %v60
  %v261 = vunpack.c.l.b16 %v61
  %v262 = vunpack.c.l.b16 %v62
  %v263 = vunpack.c.l.b16 %v63
  %v264 = vunpack.c.l.b16 %v64
  %v265 = vunpack.c.l.b16 %v65
  %v266 = vunpack.c.l.b16 %v66
  %v267 = vunpack.c.l.b16 %v67
  %v268 = vunpack.c.l.b16 %v68
  %v269 = vunpack.c.l.b16 %v69
  %v270 = vunpack.c.l.b16 %v70
  %v271 = vunpack.c.l.b16 %v71
  %v272 = vunpack.c.l.b16 %v72
  %v273 = vunpack.c.l.b16 %v73
  %v274 = vunpack.c.l.b16 %v74
  %v275 = vunpack.c.l.b16 %v75
  %v276 = vunpack.c.l.b16 %v76
  %v277 = vunpack.c.l.b16 %v77
  %v278 = vunpack.c.l.b16 %v78
  %v279 = vpack.c.b16 %v216, %v215
  %v280 = vpack.c.b16 %v218, %v217
  %v281 = vpack.c.b16 %v220, %v219
  %v282 = vpack.c.b16 %v222, %v221
  %v283 = vpack.c.b16 %v224, %v223
  %v284 = vpack.c.b16 %v226, %v225
  %v285 = vpack.c.b16 %v228, %v227
  %v286 = vpack.c.b16 %v230, %v229
  %v287 = vpack.c.b16 %v232, %v231
  %v288 = vpack.c.b16 %v234, %v233
  %v289 = vpack.c.b16 %v236, %v235
  %v290 = vpack.c.b16 %v238, %v237
  %v291 = vpack.c.b16 %v240, %v239
  %v292 = vpack.c.b16 %v242, %v241
  %v293 = vpack.c.b16 %v244, %v243
  %v294 = vpack.c.b16 %v246, %v245
  %v295 = vpack.c.b16 %v248, %v247
  %v296 = vpack.c.b16 %v250, %v249
  %v297 = vpack.c.b16 %v252, %v251
  %v298 = vpack.c.b16 %v254, %v253
  %v299 = vpack.c.b16 %v256, %v255
  %v300 = vpack.c.b16 %v258, %v257
  %v301 = vpack.c.b16 %v260, %v259
  %v302 = vpack.c.b16 %v262, %v261
  %v303 = vpack.c.b16 %v264, %v263
  %v304 = vpack.c.b16 %v266, %v265
  %v305 = vpack.c.b16 %v268, %v267
  %v306 = vpack.c.b16 %v270, %v269
  %v307 = vpack.c.b16 %v272, %v271
  %v308 = vpack.c.b16 %v274, %v273
  %v309 = vpack.c.b16 %v276, %v275
  %v310 = vpack.c.b16 %v278, %v277
  %343 = vmatprep.subr.bf16.mxu0 0
  %344 = vmatpush1.bf16.msra.mxu0 %v286
  %345 = vmatprep.subr.bf16.mxu0 0
  %346 = vmatpush1.bf16.msra.mxu0 %v285
  %347 = vmatprep.subr.bf16.mxu0 0
  %348 = vmatpush1.bf16.msra.mxu0 %v284
  %349 = vmatprep.subr.bf16.mxu0 0
  %350 = vmatpush1.bf16.msra.mxu0 %v283
  %351 = vmatprep.subr.bf16.mxu0 0
  %352 = vmatpush1.bf16.msra.mxu0 %v282
  %353 = vmatprep.subr.bf16.mxu0 0
  %354 = vmatpush1.bf16.msra.mxu0 %v281
  %355 = vmatprep.subr.bf16.mxu0 0
  %356 = vmatpush1.bf16.msra.mxu0 %v280
  %357 = vmatprep.subr.bf16.mxu0 0
  %358 = vmatpush1.bf16.msra.mxu0 %v279
  %359 = vmatprep.subr.bf16.mxu0 0
  %360 = vmatpush2.bf16.msra.mxu0 %v294
  %361 = vmatprep.subr.bf16.mxu0 0
  %362 = vmatpush2.bf16.msra.mxu0 %v293
  %363 = vmatprep.subr.bf16.mxu0 0
  %364 = vmatpush2.bf16.msra.mxu0 %v292
  %365 = vmatprep.subr.bf16.mxu0 0
  %366 = vmatpush2.bf16.msra.mxu0 %v291
  %367 = vmatprep.subr.bf16.mxu0 0
  %368 = vmatpush2.bf16.msra.mxu0 %v290
  %369 = vmatprep.subr.bf16.mxu0 0
  %370 = vmatpush2.bf16.msra.mxu0 %v289
  %371 = vmatprep.subr.bf16.mxu0 0
  %372 = vmatpush2.bf16.msra.mxu0 %v288
  %373 = vmatprep.subr.bf16.mxu0 0
  %374 = vmatpush2.bf16.msra.mxu0 %v287
  %375 = vmatprep.mubr.bf16.mxu0 %v136
  %376 = vmatmul.mubr.bf16.gmra.mxu0 %v135
  %v377 = vpop.f32.mrf.mxu0
  %v378 = vadd.f32 %v94, %v377
  %v379 = vpop.f32.mrf.mxu0
  %v380 = vpop.f32.mrf.mxu0
  %v381 = vadd.f32 %v99, %v380
  %v382 = vpop.f32.mrf.mxu0
  %383 = vmatprep.mubr.bf16.mxu0 %v140
  %384 = vmatmul.mubr.bf16.gmra.mxu0 %v139
  %v385 = vpop.f32.mrf.mxu0
  %v386 = vadd.f32 %v104, %v385
  %v387 = vpop.f32.mrf.mxu0
  %v388 = vpop.f32.mrf.mxu0
  %v389 = vadd.f32 %v109, %v388
  %v390 = vpop.f32.mrf.mxu0
  %391 = vdwg.mxu0
  %392 = vmatprep.subr.bf16.mxu0 0
  %393 = vmatpush1.bf16.msra.mxu0 %v302
  %394 = vmatprep.subr.bf16.mxu0 0
  %395 = vmatpush1.bf16.msra.mxu0 %v301
  %396 = vmatprep.subr.bf16.mxu0 0
  %397 = vmatpush1.bf16.msra.mxu0 %v300
  %398 = vmatprep.subr.bf16.mxu0 0
  %399 = vmatpush1.bf16.msra.mxu0 %v299
  %400 = vmatprep.subr.bf16.mxu0 0
  %401 = vmatpush1.bf16.msra.mxu0 %v298
  %402 = vmatprep.subr.bf16.mxu0 0
  %403 = vmatpush1.bf16.msra.mxu0 %v297
  %404 = vmatprep.subr.bf16.mxu0 0
  %405 = vmatpush1.bf16.msra.mxu0 %v296
  %406 = vmatprep.subr.bf16.mxu0 0
  %407 = vmatpush1.bf16.msra.mxu0 %v295
  %408 = vmatprep.subr.bf16.mxu0 0
  %409 = vmatpush2.bf16.msra.mxu0 %v310
  %410 = vmatprep.subr.bf16.mxu0 0
  %411 = vmatpush2.bf16.msra.mxu0 %v309
  %412 = vmatprep.subr.bf16.mxu0 0
  %413 = vmatpush2.bf16.msra.mxu0 %v308
  %414 = vmatprep.subr.bf16.mxu0 0
  %415 = vmatpush2.bf16.msra.mxu0 %v307
  %416 = vmatprep.subr.bf16.mxu0 0
  %417 = vmatpush2.bf16.msra.mxu0 %v306
  %418 = vmatprep.subr.bf16.mxu0 0
  %419 = vmatpush2.bf16.msra.mxu0 %v305
  %420 = vmatprep.subr.bf16.mxu0 0
  %421 = vmatpush2.bf16.msra.mxu0 %v304
  %422 = vmatprep.subr.bf16.mxu0 0
  %423 = vmatpush2.bf16.msra.mxu0 %v303
  %424 = vmatprep.mubr.bf16.mxu0 %v138
  %425 = vmatmul.mubr.bf16.gmra.mxu0 %v137
  %v426 = vpop.f32.mrf.mxu0
  %v427 = vadd.f32 %v378, %v426
  %v428 = vpop.f32.mrf.mxu0
  %v429 = vpop.f32.mrf.mxu0
  %v430 = vadd.f32 %v381, %v429
  %v431 = vpop.f32.mrf.mxu0
  %432 = vmatprep.mubr.bf16.mxu0 %v142
  %433 = vmatmul.mubr.bf16.gmra.mxu0 %v141
  %v434 = vpop.f32.mrf.mxu0
  %v435 = vadd.f32 %v386, %v434
  %v436 = vpop.f32.mrf.mxu0
  %v437 = vpop.f32.mrf.mxu0
  %v438 = vadd.f32 %v389, %v437
  %v439 = vpop.f32.mrf.mxu0
  %440 = vdwg.mxu0
  %v441 = vmax.f32 %v427, 0.0
  %v442 = vmax.f32 %v430, 0.0
  %v443 = vmax.f32 %v435, 0.0
  %v444 = vmax.f32 %v438, 0.0
  %445 = vst [vmem:[%s3] sm:$0xff] %v441
  %446 = vst [vmem:[%s3 + $0x8] sm:$0xff] %v442
  %447 = vst [vmem:[%s3 + $0x10] sm:$0xff] %v443
  %448 = vst [vmem:[%s3 + $0x18] sm:$0xff] %v444
  // Predicated region
  $region14: #{vqvae_forward.20} parent=0 // pred_check
    _
  $region15: #{vqvae_forward.20} parent=0 // pred_check_branch
    %450 = sbr.rel (0) target = $region17
  $region16: #{vqvae_forward.20} parent=0 // pred_region
    _
  $region17: #{vqvae_forward.20} parent=0 // pred_fallthru
    _
  // Predicated region
  $region18: #{vqvae_forward.20} parent=0 // pred_check
    _
  $region19: #{vqvae_forward.20} parent=0 // pred_check_branch
    %452 = sbr.rel (0) target = $region21
  $region20: #{vqvae_forward.20} parent=0 // pred_region
    _
  $region21: #{vqvae_forward.20} parent=0 // pred_fallthru
    _

// kernel: vqvae_forward.21
$region0: #{vqvae_forward.21}
  #allocation0 [shape = 'u32[]', space=smem, size = 0x4, offset = 0x4, fixed_abs, tag = 'smem constant byte address 0x4 - core index']
  #allocation1 [shape = 'u32[144,128]{1,0:T(1,128)}', space=vmem, size = 0x12000, scoped, tag = 'internal scratch']
  %s0 = inlined_call_operand.vmem [shape: bf16[32,512], index: 0, kind: input, shape index: {}]
  %s1 = inlined_call_operand.vmem [shape: bf16[512,32], index: 1, kind: input, shape index: {}]
  %s2 = inlined_call_operand.vmem [shape: f32[32,1], index: 2, kind: input, shape index: {}]
  %s3 = inlined_call_operand.vmem [shape: f32[32,32], index: 3, kind: output, shape index: {}]
  %s4 = sld [smem:[#allocation0]]
  $region22: #{vqvae_forward.21} parent=0
    _
  %s6 = ssub.s32 1, %s4
  %s7 = scalar_select 0, %s6, %s4
  // Predicated region
  $region2: #{vqvae_forward.21} parent=0 // pred_check
    _
  $region3: #{vqvae_forward.21} parent=0 // pred_check_branch
    %9 = sbr.rel (0) target = $region5
  $region4: #{vqvae_forward.21} parent=0 // pred_region
    _
  $region5: #{vqvae_forward.21} parent=0 // pred_fallthru
    _
  // Predicated region
  $region6: #{vqvae_forward.21} parent=0 // pred_check
    _
  $region7: #{vqvae_forward.21} parent=0 // pred_check_branch
    %11 = sbr.rel (0) target = $region9
  $region8: #{vqvae_forward.21} parent=0 // pred_region
    _
  $region9: #{vqvae_forward.21} parent=0 // pred_fallthru
    _
  // Predicated region
  $region10: #{vqvae_forward.21} parent=0 // pred_check
    _
  $region11: #{vqvae_forward.21} parent=0 // pred_check_branch
    %13 = sbr.rel (0) target = $region13
  $region12: #{vqvae_forward.21} parent=0 // pred_region
    _
  $region13: #{vqvae_forward.21} parent=0 // pred_fallthru
    _
  %v15 = vld [vmem:[%s1] sm:$0xf]
  %v16 = vld [vmem:[%s1 + $0x4] sm:$0xf]
  %v17 = vld [vmem:[%s1 + $0x8] sm:$0xf]
  %v18 = vld [vmem:[%s1 + $0xc] sm:$0xf]
  %v19 = vld [vmem:[%s1 + $0x10] sm:$0xf]
  %v20 = vld [vmem:[%s1 + $0x14] sm:$0xf]
  %v21 = vld [vmem:[%s1 + $0x18] sm:$0xf]
  %v22 = vld [vmem:[%s1 + $0x1c] sm:$0xf]
  %v23 = vld [vmem:[%s1 + $0x20] sm:$0xf]
  %v24 = vld [vmem:[%s1 + $0x24] sm:$0xf]
  %v25 = vld [vmem:[%s1 + $0x28] sm:$0xf]
  %v26 = vld [vmem:[%s1 + $0x2c] sm:$0xf]
  %v27 = vld [vmem:[%s1 + $0x30] sm:$0xf]
  %v28 = vld [vmem:[%s1 + $0x34] sm:$0xf]
  %v29 = vld [vmem:[%s1 + $0x38] sm:$0xf]
  %v30 = vld [vmem:[%s1 + $0x3c] sm:$0xf]
  %v31 = vld [vmem:[%s1 + $0x40] sm:$0xf]
  %v32 = vld [vmem:[%s1 + $0x44] sm:$0xf]
  %v33 = vld [vmem:[%s1 + $0x48] sm:$0xf]
  %v34 = vld [vmem:[%s1 + $0x4c] sm:$0xf]
  %v35 = vld [vmem:[%s1 + $0x50] sm:$0xf]
  %v36 = vld [vmem:[%s1 + $0x54] sm:$0xf]
  %v37 = vld [vmem:[%s1 + $0x58] sm:$0xf]
  %v38 = vld [vmem:[%s1 + $0x5c] sm:$0xf]
  %v39 = vld [vmem:[%s1 + $0x60] sm:$0xf]
  %v40 = vld [vmem:[%s1 + $0x64] sm:$0xf]
  %v41 = vld [vmem:[%s1 + $0x68] sm:$0xf]
  %v42 = vld [vmem:[%s1 + $0x6c] sm:$0xf]
  %v43 = vld [vmem:[%s1 + $0x70] sm:$0xf]
  %v44 = vld [vmem:[%s1 + $0x74] sm:$0xf]
  %v45 = vld [vmem:[%s1 + $0x78] sm:$0xf]
  %v46 = vld [vmem:[%s1 + $0x7c] sm:$0xf]
  %v47 = vld [vmem:[%s1 + $0x80] sm:$0xf]
  %v48 = vld [vmem:[%s1 + $0x84] sm:$0xf]
  %v49 = vld [vmem:[%s1 + $0x88] sm:$0xf]
  %v50 = vld [vmem:[%s1 + $0x8c] sm:$0xf]
  %v51 = vld [vmem:[%s1 + $0x90] sm:$0xf]
  %v52 = vld [vmem:[%s1 + $0x94] sm:$0xf]
  %v53 = vld [vmem:[%s1 + $0x98] sm:$0xf]
  %v54 = vld [vmem:[%s1 + $0x9c] sm:$0xf]
  %v55 = vld [vmem:[%s1 + $0xa0] sm:$0xf]
  %v56 = vld [vmem:[%s1 + $0xa4] sm:$0xf]
  %v57 = vld [vmem:[%s1 + $0xa8] sm:$0xf]
  %v58 = vld [vmem:[%s1 + $0xac] sm:$0xf]
  %v59 = vld [vmem:[%s1 + $0xb0] sm:$0xf]
  %v60 = vld [vmem:[%s1 + $0xb4] sm:$0xf]
  %v61 = vld [vmem:[%s1 + $0xb8] sm:$0xf]
  %v62 = vld [vmem:[%s1 + $0xbc] sm:$0xf]
  %v63 = vld [vmem:[%s1 + $0xc0] sm:$0xf]
  %v64 = vld [vmem:[%s1 + $0xc4] sm:$0xf]
  %v65 = vld [vmem:[%s1 + $0xc8] sm:$0xf]
  %v66 = vld [vmem:[%s1 + $0xcc] sm:$0xf]
  %v67 = vld [vmem:[%s1 + $0xd0] sm:$0xf]
  %v68 = vld [vmem:[%s1 + $0xd4] sm:$0xf]
  %v69 = vld [vmem:[%s1 + $0xd8] sm:$0xf]
  %v70 = vld [vmem:[%s1 + $0xdc] sm:$0xf]
  %v71 = vld [vmem:[%s1 + $0xe0] sm:$0xf]
  %v72 = vld [vmem:[%s1 + $0xe4] sm:$0xf]
  %v73 = vld [vmem:[%s1 + $0xe8] sm:$0xf]
  %v74 = vld [vmem:[%s1 + $0xec] sm:$0xf]
  %v75 = vld [vmem:[%s1 + $0xf0] sm:$0xf]
  %v76 = vld [vmem:[%s1 + $0xf4] sm:$0xf]
  %v77 = vld [vmem:[%s1 + $0xf8] sm:$0xf]
  %v78 = vld [vmem:[%s1 + $0xfc] sm:$0xf]
  %v79 = vld [vmem:[%s0] sm:$0xff]
  %v80 = vld [vmem:[%s0 + $0x8] sm:$0xff]
  %v81 = vld [vmem:[%s0 + $0x10] sm:$0xff]
  %v82 = vld [vmem:[%s0 + $0x18] sm:$0xff]
  %v83 = vld [vmem:[%s0 + $0x20] sm:$0xff]
  %v84 = vld [vmem:[%s0 + $0x28] sm:$0xff]
  %v85 = vld [vmem:[%s0 + $0x30] sm:$0xff]
  %v86 = vld [vmem:[%s0 + $0x38] sm:$0xff]
  %v87 = vld [vmem:[%s2] sm:$0xff]
  %v88 = vld [vmem:[%s2 + $0x8] sm:$0xff]
  %v89 = vld [vmem:[%s2 + $0x10] sm:$0xff]
  %v90 = vld [vmem:[%s2 + $0x18] sm:$0xff]
  %92 = vset.pattern.permute.xlu0 0
  %93 = vperm.xlu0 %92, %v87
  %v94 = vpop.permute.xlu0 %93
  %97 = vset.pattern.permute.xlu0 0
  %98 = vperm.xlu0 %97, %v88
  %v99 = vpop.permute.xlu0 %98
  %102 = vset.pattern.permute.xlu0 0
  %103 = vperm.xlu0 %102, %v89
  %v104 = vpop.permute.xlu0 %103
  %107 = vset.pattern.permute.xlu0 0
  %108 = vperm.xlu0 %107, %v90
  %v109 = vpop.permute.xlu0 %108
  %v119 = vunpack.c.l.b16 %v79
  %v120 = vunpack.c.h.b16 %v79
  %v121 = vunpack.c.l.b16 %v80
  %v122 = vunpack.c.h.b16 %v80
  %v123 = vunpack.c.l.b16 %v81
  %v124 = vunpack.c.h.b16 %v81
  %v125 = vunpack.c.l.b16 %v82
  %v126 = vunpack.c.h.b16 %v82
  %v127 = vunpack.c.l.b16 %v83
  %v128 = vunpack.c.h.b16 %v83
  %v129 = vunpack.c.l.b16 %v84
  %v130 = vunpack.c.h.b16 %v84
  %v131 = vunpack.c.l.b16 %v85
  %v132 = vunpack.c.h.b16 %v85
  %v133 = vunpack.c.l.b16 %v86
  %v134 = vunpack.c.h.b16 %v86
  %v135 = vpack.c.b16 %v123, %v119
  %v136 = vpack.c.b16 %v124, %v120
  %v137 = vpack.c.b16 %v125, %v121
  %v138 = vpack.c.b16 %v126, %v122
  %v139 = vpack.c.b16 %v131, %v127
  %v140 = vpack.c.b16 %v132, %v128
  %v141 = vpack.c.b16 %v133, %v129
  %v142 = vpack.c.b16 %v134, %v130
  %v215 = vunpack.c.l.b16 %v15
  %v216 = vunpack.c.l.b16 %v16
  %v217 = vunpack.c.l.b16 %v17
  %v218 = vunpack.c.l.b16 %v18
  %v219 = vunpack.c.l.b16 %v19
  %v220 = vunpack.c.l.b16 %v20
  %v221 = vunpack.c.l.b16 %v21
  %v222 = vunpack.c.l.b16 %v22
  %v223 = vunpack.c.l.b16 %v23
  %v224 = vunpack.c.l.b16 %v24
  %v225 = vunpack.c.l.b16 %v25
  %v226 = vunpack.c.l.b16 %v26
  %v227 = vunpack.c.l.b16 %v27
  %v228 = vunpack.c.l.b16 %v28
  %v229 = vunpack.c.l.b16 %v29
  %v230 = vunpack.c.l.b16 %v30
  %v231 = vunpack.c.l.b16 %v31
  %v232 = vunpack.c.l.b16 %v32
  %v233 = vunpack.c.l.b16 %v33
  %v234 = vunpack.c.l.b16 %v34
  %v235 = vunpack.c.l.b16 %v35
  %v236 = vunpack.c.l.b16 %v36
  %v237 = vunpack.c.l.b16 %v37
  %v238 = vunpack.c.l.b16 %v38
  %v239 = vunpack.c.l.b16 %v39
  %v240 = vunpack.c.l.b16 %v40
  %v241 = vunpack.c.l.b16 %v41
  %v242 = vunpack.c.l.b16 %v42
  %v243 = vunpack.c.l.b16 %v43
  %v244 = vunpack.c.l.b16 %v44
  %v245 = vunpack.c.l.b16 %v45
  %v246 = vunpack.c.l.b16 %v46
  %v247 = vunpack.c.l.b16 %v47
  %v248 = vunpack.c.l.b16 %v48
  %v249 = vunpack.c.l.b16 %v49
  %v250 = vunpack.c.l.b16 %v50
  %v251 = vunpack.c.l.b16 %v51
  %v252 = vunpack.c.l.b16 %v52
  %v253 = vunpack.c.l.b16 %v53
  %v254 = vunpack.c.l.b16 %v54
  %v255 = vunpack.c.l.b16 %v55
  %v256 = vunpack.c.l.b16 %v56
  %v257 = vunpack.c.l.b16 %v57
  %v258 = vunpack.c.l.b16 %v58
  %v259 = vunpack.c.l.b16 %v59
  %v260 = vunpack.c.l.b16 %v60
  %v261 = vunpack.c.l.b16 %v61
  %v262 = vunpack.c.l.b16 %v62
  %v263 = vunpack.c.l.b16 %v63
  %v264 = vunpack.c.l.b16 %v64
  %v265 = vunpack.c.l.b16 %v65
  %v266 = vunpack.c.l.b16 %v66
  %v267 = vunpack.c.l.b16 %v67
  %v268 = vunpack.c.l.b16 %v68
  %v269 = vunpack.c.l.b16 %v69
  %v270 = vunpack.c.l.b16 %v70
  %v271 = vunpack.c.l.b16 %v71
  %v272 = vunpack.c.l.b16 %v72
  %v273 = vunpack.c.l.b16 %v73
  %v274 = vunpack.c.l.b16 %v74
  %v275 = vunpack.c.l.b16 %v75
  %v276 = vunpack.c.l.b16 %v76
  %v277 = vunpack.c.l.b16 %v77
  %v278 = vunpack.c.l.b16 %v78
  %v279 = vpack.c.b16 %v216, %v215
  %v280 = vpack.c.b16 %v218, %v217
  %v281 = vpack.c.b16 %v220, %v219
  %v282 = vpack.c.b16 %v222, %v221
  %v283 = vpack.c.b16 %v224, %v223
  %v284 = vpack.c.b16 %v226, %v225
  %v285 = vpack.c.b16 %v228, %v227
  %v286 = vpack.c.b16 %v230, %v229
  %v287 = vpack.c.b16 %v232, %v231
  %v288 = vpack.c.b16 %v234, %v233
  %v289 = vpack.c.b16 %v236, %v235
  %v290 = vpack.c.b16 %v238, %v237
  %v291 = vpack.c.b16 %v240, %v239
  %v292 = vpack.c.b16 %v242, %v241
  %v293 = vpack.c.b16 %v244, %v243
  %v294 = vpack.c.b16 %v246, %v245
  %v295 = vpack.c.b16 %v248, %v247
  %v296 = vpack.c.b16 %v250, %v249
  %v297 = vpack.c.b16 %v252, %v251
  %v298 = vpack.c.b16 %v254, %v253
  %v299 = vpack.c.b16 %v256, %v255
  %v300 = vpack.c.b16 %v258, %v257
  %v301 = vpack.c.b16 %v260, %v259
  %v302 = vpack.c.b16 %v262, %v261
  %v303 = vpack.c.b16 %v264, %v263
  %v304 = vpack.c.b16 %v266, %v265
  %v305 = vpack.c.b16 %v268, %v267
  %v306 = vpack.c.b16 %v270, %v269
  %v307 = vpack.c.b16 %v272, %v271
  %v308 = vpack.c.b16 %v274, %v273
  %v309 = vpack.c.b16 %v276, %v275
  %v310 = vpack.c.b16 %v278, %v277
  %343 = vmatprep.subr.bf16.mxu0 0
  %344 = vmatpush1.bf16.msra.mxu0 %v286
  %345 = vmatprep.subr.bf16.mxu0 0
  %346 = vmatpush1.bf16.msra.mxu0 %v285
  %347 = vmatprep.subr.bf16.mxu0 0
  %348 = vmatpush1.bf16.msra.mxu0 %v284
  %349 = vmatprep.subr.bf16.mxu0 0
  %350 = vmatpush1.bf16.msra.mxu0 %v283
  %351 = vmatprep.subr.bf16.mxu0 0
  %352 = vmatpush1.bf16.msra.mxu0 %v282
  %353 = vmatprep.subr.bf16.mxu0 0
  %354 = vmatpush1.bf16.msra.mxu0 %v281
  %355 = vmatprep.subr.bf16.mxu0 0
  %356 = vmatpush1.bf16.msra.mxu0 %v280
  %357 = vmatprep.subr.bf16.mxu0 0
  %358 = vmatpush1.bf16.msra.mxu0 %v279
  %359 = vmatprep.subr.bf16.mxu0 0
  %360 = vmatpush2.bf16.msra.mxu0 %v294
  %361 = vmatprep.subr.bf16.mxu0 0
  %362 = vmatpush2.bf16.msra.mxu0 %v293
  %363 = vmatprep.subr.bf16.mxu0 0
  %364 = vmatpush2.bf16.msra.mxu0 %v292
  %365 = vmatprep.subr.bf16.mxu0 0
  %366 = vmatpush2.bf16.msra.mxu0 %v291
  %367 = vmatprep.subr.bf16.mxu0 0
  %368 = vmatpush2.bf16.msra.mxu0 %v290
  %369 = vmatprep.subr.bf16.mxu0 0
  %370 = vmatpush2.bf16.msra.mxu0 %v289
  %371 = vmatprep.subr.bf16.mxu0 0
  %372 = vmatpush2.bf16.msra.mxu0 %v288
  %373 = vmatprep.subr.bf16.mxu0 0
  %374 = vmatpush2.bf16.msra.mxu0 %v287
  %375 = vmatprep.mubr.bf16.mxu0 %v136
  %376 = vmatmul.mubr.bf16.gmra.mxu0 %v135
  %v377 = vpop.f32.mrf.mxu0
  %v378 = vadd.f32 %v94, %v377
  %v379 = vpop.f32.mrf.mxu0
  %v380 = vpop.f32.mrf.mxu0
  %v381 = vadd.f32 %v99, %v380
  %v382 = vpop.f32.mrf.mxu0
  %383 = vmatprep.mubr.bf16.mxu0 %v140
  %384 = vmatmul.mubr.bf16.gmra.mxu0 %v139
  %v385 = vpop.f32.mrf.mxu0
  %v386 = vadd.f32 %v104, %v385
  %v387 = vpop.f32.mrf.mxu0
  %v388 = vpop.f32.mrf.mxu0
  %v389 = vadd.f32 %v109, %v388
  %v390 = vpop.f32.mrf.mxu0
  %391 = vdwg.mxu0
  %392 = vmatprep.subr.bf16.mxu0 0
  %393 = vmatpush1.bf16.msra.mxu0 %v302
  %394 = vmatprep.subr.bf16.mxu0 0
  %395 = vmatpush1.bf16.msra.mxu0 %v301
  %396 = vmatprep.subr.bf16.mxu0 0
  %397 = vmatpush1.bf16.msra.mxu0 %v300
  %398 = vmatprep.subr.bf16.mxu0 0
  %399 = vmatpush1.bf16.msra.mxu0 %v299
  %400 = vmatprep.subr.bf16.mxu0 0
  %401 = vmatpush1.bf16.msra.mxu0 %v298
  %402 = vmatprep.subr.bf16.mxu0 0
  %403 = vmatpush1.bf16.msra.mxu0 %v297
  %404 = vmatprep.subr.bf16.mxu0 0
  %405 = vmatpush1.bf16.msra.mxu0 %v296
  %406 = vmatprep.subr.bf16.mxu0 0
  %407 = vmatpush1.bf16.msra.mxu0 %v295
  %408 = vmatprep.subr.bf16.mxu0 0
  %409 = vmatpush2.bf16.msra.mxu0 %v310
  %410 = vmatprep.subr.bf16.mxu0 0
  %411 = vmatpush2.bf16.msra.mxu0 %v309
  %412 = vmatprep.subr.bf16.mxu0 0
  %413 = vmatpush2.bf16.msra.mxu0 %v308
  %414 = vmatprep.subr.bf16.mxu0 0
  %415 = vmatpush2.bf16.msra.mxu0 %v307
  %416 = vmatprep.subr.bf16.mxu0 0
  %417 = vmatpush2.bf16.msra.mxu0 %v306
  %418 = vmatprep.subr.bf16.mxu0 0
  %419 = vmatpush2.bf16.msra.mxu0 %v305
  %420 = vmatprep.subr.bf16.mxu0 0
  %421 = vmatpush2.bf16.msra.mxu0 %v304
  %422 = vmatprep.subr.bf16.mxu0 0
  %423 = vmatpush2.bf16.msra.mxu0 %v303
  %424 = vmatprep.mubr.bf16.mxu0 %v138
  %425 = vmatmul.mubr.bf16.gmra.mxu0 %v137
  %v426 = vpop.f32.mrf.mxu0
  %v427 = vadd.f32 %v378, %v426
  %v428 = vpop.f32.mrf.mxu0
  %v429 = vpop.f32.mrf.mxu0
  %v430 = vadd.f32 %v381, %v429
  %v431 = vpop.f32.mrf.mxu0
  %432 = vmatprep.mubr.bf16.mxu0 %v142
  %433 = vmatmul.mubr.bf16.gmra.mxu0 %v141
  %v434 = vpop.f32.mrf.mxu0
  %v435 = vadd.f32 %v386, %v434
  %v436 = vpop.f32.mrf.mxu0
  %v437 = vpop.f32.mrf.mxu0
  %v438 = vadd.f32 %v389, %v437
  %v439 = vpop.f32.mrf.mxu0
  %440 = vdwg.mxu0
  %v441 = vmax.f32 %v427, 0.0
  %v442 = vmax.f32 %v430, 0.0
  %v443 = vmax.f32 %v435, 0.0
  %v444 = vmax.f32 %v438, 0.0
  %vm445 = vcmask 261120
  %446 = vst.msk [vmem:[%s3] sm:$0xff] %vm445, %v441
  %447 = vst.msk [vmem:[%s3 + $0x8] sm:$0xff] %vm445, %v442
  %448 = vst.msk [vmem:[%s3 + $0x10] sm:$0xff] %vm445, %v443
  %449 = vst.msk [vmem:[%s3 + $0x18] sm:$0xff] %vm445, %v444
  // Predicated region
  $region14: #{vqvae_forward.21} parent=0 // pred_check
    _
  $region15: #{vqvae_forward.21} parent=0 // pred_check_branch
    %451 = sbr.rel (0) target = $region17
  $region16: #{vqvae_forward.21} parent=0 // pred_region
    _
  $region17: #{vqvae_forward.21} parent=0 // pred_fallthru
    _
  // Predicated region
  $region18: #{vqvae_forward.21} parent=0 // pred_check
    _
  $region19: #{vqvae_forward.21} parent=0 // pred_check_branch
    %453 = sbr.rel (0) target = $region21
  $region20: #{vqvae_forward.21} parent=0 // pred_region
    _
  $region21: #{vqvae_forward.21} parent=0 // pred_fallthru
    _

// kernel: vqvae_forward.22
$region0: #{vqvae_forward.22}
  #allocation0 [shape = 'u32[]', space=smem, size = 0x4, offset = 0x4, fixed_abs, tag = 'smem constant byte address 0x4 - core index']
  #allocation1 [shape = 'u32[144,128]{1,0:T(1,128)}', space=vmem, size = 0x12000, scoped, tag = 'internal scratch']
  %s0 = inlined_call_operand.vmem [shape: bf16[32,512], index: 0, kind: input, shape index: {}]
  %s1 = inlined_call_operand.vmem [shape: bf16[512,8], index: 1, kind: input, shape index: {}]
  %s2 = inlined_call_operand.vmem [shape: f32[32,1], index: 2, kind: input, shape index: {}]
  %s3 = inlined_call_operand.vmem [shape: f32[32,8], index: 3, kind: output, shape index: {}]
  %s4 = sld [smem:[#allocation0]]
  $region22: #{vqvae_forward.22} parent=0
    _
  %s6 = ssub.s32 1, %s4
  %s7 = scalar_select 0, %s6, %s4
  // Predicated region
  $region2: #{vqvae_forward.22} parent=0 // pred_check
    _
  $region3: #{vqvae_forward.22} parent=0 // pred_check_branch
    %9 = sbr.rel (0) target = $region5
  $region4: #{vqvae_forward.22} parent=0 // pred_region
    _
  $region5: #{vqvae_forward.22} parent=0 // pred_fallthru
    _
  // Predicated region
  $region6: #{vqvae_forward.22} parent=0 // pred_check
    _
  $region7: #{vqvae_forward.22} parent=0 // pred_check_branch
    %11 = sbr.rel (0) target = $region9
  $region8: #{vqvae_forward.22} parent=0 // pred_region
    _
  $region9: #{vqvae_forward.22} parent=0 // pred_fallthru
    _
  // Predicated region
  $region10: #{vqvae_forward.22} parent=0 // pred_check
    _
  $region11: #{vqvae_forward.22} parent=0 // pred_check_branch
    %13 = sbr.rel (0) target = $region13
  $region12: #{vqvae_forward.22} parent=0 // pred_region
    _
  $region13: #{vqvae_forward.22} parent=0 // pred_fallthru
    _
  %v15 = vld [vmem:[%s1] sm:$0xf]
  %v16 = vld [vmem:[%s1 + $0x4] sm:$0xf]
  %v17 = vld [vmem:[%s1 + $0x8] sm:$0xf]
  %v18 = vld [vmem:[%s1 + $0xc] sm:$0xf]
  %v19 = vld [vmem:[%s1 + $0x10] sm:$0xf]
  %v20 = vld [vmem:[%s1 + $0x14] sm:$0xf]
  %v21 = vld [vmem:[%s1 + $0x18] sm:$0xf]
  %v22 = vld [vmem:[%s1 + $0x1c] sm:$0xf]
  %v23 = vld [vmem:[%s1 + $0x20] sm:$0xf]
  %v24 = vld [vmem:[%s1 + $0x24] sm:$0xf]
  %v25 = vld [vmem:[%s1 + $0x28] sm:$0xf]
  %v26 = vld [vmem:[%s1 + $0x2c] sm:$0xf]
  %v27 = vld [vmem:[%s1 + $0x30] sm:$0xf]
  %v28 = vld [vmem:[%s1 + $0x34] sm:$0xf]
  %v29 = vld [vmem:[%s1 + $0x38] sm:$0xf]
  %v30 = vld [vmem:[%s1 + $0x3c] sm:$0xf]
  %v31 = vld [vmem:[%s1 + $0x40] sm:$0xf]
  %v32 = vld [vmem:[%s1 + $0x44] sm:$0xf]
  %v33 = vld [vmem:[%s1 + $0x48] sm:$0xf]
  %v34 = vld [vmem:[%s1 + $0x4c] sm:$0xf]
  %v35 = vld [vmem:[%s1 + $0x50] sm:$0xf]
  %v36 = vld [vmem:[%s1 + $0x54] sm:$0xf]
  %v37 = vld [vmem:[%s1 + $0x58] sm:$0xf]
  %v38 = vld [vmem:[%s1 + $0x5c] sm:$0xf]
  %v39 = vld [vmem:[%s1 + $0x60] sm:$0xf]
  %v40 = vld [vmem:[%s1 + $0x64] sm:$0xf]
  %v41 = vld [vmem:[%s1 + $0x68] sm:$0xf]
  %v42 = vld [vmem:[%s1 + $0x6c] sm:$0xf]
  %v43 = vld [vmem:[%s1 + $0x70] sm:$0xf]
  %v44 = vld [vmem:[%s1 + $0x74] sm:$0xf]
  %v45 = vld [vmem:[%s1 + $0x78] sm:$0xf]
  %v46 = vld [vmem:[%s1 + $0x7c] sm:$0xf]
  %v47 = vld [vmem:[%s1 + $0x80] sm:$0xf]
  %v48 = vld [vmem:[%s1 + $0x84] sm:$0xf]
  %v49 = vld [vmem:[%s1 + $0x88] sm:$0xf]
  %v50 = vld [vmem:[%s1 + $0x8c] sm:$0xf]
  %v51 = vld [vmem:[%s1 + $0x90] sm:$0xf]
  %v52 = vld [vmem:[%s1 + $0x94] sm:$0xf]
  %v53 = vld [vmem:[%s1 + $0x98] sm:$0xf]
  %v54 = vld [vmem:[%s1 + $0x9c] sm:$0xf]
  %v55 = vld [vmem:[%s1 + $0xa0] sm:$0xf]
  %v56 = vld [vmem:[%s1 + $0xa4] sm:$0xf]
  %v57 = vld [vmem:[%s1 + $0xa8] sm:$0xf]
  %v58 = vld [vmem:[%s1 + $0xac] sm:$0xf]
  %v59 = vld [vmem:[%s1 + $0xb0] sm:$0xf]
  %v60 = vld [vmem:[%s1 + $0xb4] sm:$0xf]
  %v61 = vld [vmem:[%s1 + $0xb8] sm:$0xf]
  %v62 = vld [vmem:[%s1 + $0xbc] sm:$0xf]
  %v63 = vld [vmem:[%s1 + $0xc0] sm:$0xf]
  %v64 = vld [vmem:[%s1 + $0xc4] sm:$0xf]
  %v65 = vld [vmem:[%s1 + $0xc8] sm:$0xf]
  %v66 = vld [vmem:[%s1 + $0xcc] sm:$0xf]
  %v67 = vld [vmem:[%s1 + $0xd0] sm:$0xf]
  %v68 = vld [vmem:[%s1 + $0xd4] sm:$0xf]
  %v69 = vld [vmem:[%s1 + $0xd8] sm:$0xf]
  %v70 = vld [vmem:[%s1 + $0xdc] sm:$0xf]
  %v71 = vld [vmem:[%s1 + $0xe0] sm:$0xf]
  %v72 = vld [vmem:[%s1 + $0xe4] sm:$0xf]
  %v73 = vld [vmem:[%s1 + $0xe8] sm:$0xf]
  %v74 = vld [vmem:[%s1 + $0xec] sm:$0xf]
  %v75 = vld [vmem:[%s1 + $0xf0] sm:$0xf]
  %v76 = vld [vmem:[%s1 + $0xf4] sm:$0xf]
  %v77 = vld [vmem:[%s1 + $0xf8] sm:$0xf]
  %v78 = vld [vmem:[%s1 + $0xfc] sm:$0xf]
  %v79 = vld [vmem:[%s0] sm:$0xff]
  %v80 = vld [vmem:[%s0 + $0x8] sm:$0xff]
  %v81 = vld [vmem:[%s0 + $0x10] sm:$0xff]
  %v82 = vld [vmem:[%s0 + $0x18] sm:$0xff]
  %v83 = vld [vmem:[%s0 + $0x20] sm:$0xff]
  %v84 = vld [vmem:[%s0 + $0x28] sm:$0xff]
  %v85 = vld [vmem:[%s0 + $0x30] sm:$0xff]
  %v86 = vld [vmem:[%s0 + $0x38] sm:$0xff]
  %v87 = vld [vmem:[%s2] sm:$0xff]
  %v88 = vld [vmem:[%s2 + $0x8] sm:$0xff]
  %v89 = vld [vmem:[%s2 + $0x10] sm:$0xff]
  %v90 = vld [vmem:[%s2 + $0x18] sm:$0xff]
  %92 = vset.pattern.permute.xlu0 0
  %93 = vperm.xlu0 %92, %v87
  %v94 = vpop.permute.xlu0 %93
  %97 = vset.pattern.permute.xlu0 0
  %98 = vperm.xlu0 %97, %v88
  %v99 = vpop.permute.xlu0 %98
  %102 = vset.pattern.permute.xlu0 0
  %103 = vperm.xlu0 %102, %v89
  %v104 = vpop.permute.xlu0 %103
  %107 = vset.pattern.permute.xlu0 0
  %108 = vperm.xlu0 %107, %v90
  %v109 = vpop.permute.xlu0 %108
  %v119 = vunpack.c.l.b16 %v79
  %v120 = vunpack.c.h.b16 %v79
  %v121 = vunpack.c.l.b16 %v80
  %v122 = vunpack.c.h.b16 %v80
  %v123 = vunpack.c.l.b16 %v81
  %v124 = vunpack.c.h.b16 %v81
  %v125 = vunpack.c.l.b16 %v82
  %v126 = vunpack.c.h.b16 %v82
  %v127 = vunpack.c.l.b16 %v83
  %v128 = vunpack.c.h.b16 %v83
  %v129 = vunpack.c.l.b16 %v84
  %v130 = vunpack.c.h.b16 %v84
  %v131 = vunpack.c.l.b16 %v85
  %v132 = vunpack.c.h.b16 %v85
  %v133 = vunpack.c.l.b16 %v86
  %v134 = vunpack.c.h.b16 %v86
  %v135 = vpack.c.b16 %v123, %v119
  %v136 = vpack.c.b16 %v124, %v120
  %v137 = vpack.c.b16 %v125, %v121
  %v138 = vpack.c.b16 %v126, %v122
  %v139 = vpack.c.b16 %v131, %v127
  %v140 = vpack.c.b16 %v132, %v128
  %v141 = vpack.c.b16 %v133, %v129
  %v142 = vpack.c.b16 %v134, %v130
  %v215 = vunpack.c.l.b16 %v15
  %v216 = vunpack.c.l.b16 %v16
  %v217 = vunpack.c.l.b16 %v17
  %v218 = vunpack.c.l.b16 %v18
  %v219 = vunpack.c.l.b16 %v19
  %v220 = vunpack.c.l.b16 %v20
  %v221 = vunpack.c.l.b16 %v21
  %v222 = vunpack.c.l.b16 %v22
  %v223 = vunpack.c.l.b16 %v23
  %v224 = vunpack.c.l.b16 %v24
  %v225 = vunpack.c.l.b16 %v25
  %v226 = vunpack.c.l.b16 %v26
  %v227 = vunpack.c.l.b16 %v27
  %v228 = vunpack.c.l.b16 %v28
  %v229 = vunpack.c.l.b16 %v29
  %v230 = vunpack.c.l.b16 %v30
  %v231 = vunpack.c.l.b16 %v31
  %v232 = vunpack.c.l.b16 %v32
  %v233 = vunpack.c.l.b16 %v33
  %v234 = vunpack.c.l.b16 %v34
  %v235 = vunpack.c.l.b16 %v35
  %v236 = vunpack.c.l.b16 %v36
  %v237 = vunpack.c.l.b16 %v37
  %v238 = vunpack.c.l.b16 %v38
  %v239 = vunpack.c.l.b16 %v39
  %v240 = vunpack.c.l.b16 %v40
  %v241 = vunpack.c.l.b16 %v41
  %v242 = vunpack.c.l.b16 %v42
  %v243 = vunpack.c.l.b16 %v43
  %v244 = vunpack.c.l.b16 %v44
  %v245 = vunpack.c.l.b16 %v45
  %v246 = vunpack.c.l.b16 %v46
  %v247 = vunpack.c.l.b16 %v47
  %v248 = vunpack.c.l.b16 %v48
  %v249 = vunpack.c.l.b16 %v49
  %v250 = vunpack.c.l.b16 %v50
  %v251 = vunpack.c.l.b16 %v51
  %v252 = vunpack.c.l.b16 %v52
  %v253 = vunpack.c.l.b16 %v53
  %v254 = vunpack.c.l.b16 %v54
  %v255 = vunpack.c.l.b16 %v55
  %v256 = vunpack.c.l.b16 %v56
  %v257 = vunpack.c.l.b16 %v57
  %v258 = vunpack.c.l.b16 %v58
  %v259 = vunpack.c.l.b16 %v59
  %v260 = vunpack.c.l.b16 %v60
  %v261 = vunpack.c.l.b16 %v61
  %v262 = vunpack.c.l.b16 %v62
  %v263 = vunpack.c.l.b16 %v63
  %v264 = vunpack.c.l.b16 %v64
  %v265 = vunpack.c.l.b16 %v65
  %v266 = vunpack.c.l.b16 %v66
  %v267 = vunpack.c.l.b16 %v67
  %v268 = vunpack.c.l.b16 %v68
  %v269 = vunpack.c.l.b16 %v69
  %v270 = vunpack.c.l.b16 %v70
  %v271 = vunpack.c.l.b16 %v71
  %v272 = vunpack.c.l.b16 %v72
  %v273 = vunpack.c.l.b16 %v73
  %v274 = vunpack.c.l.b16 %v74
  %v275 = vunpack.c.l.b16 %v75
  %v276 = vunpack.c.l.b16 %v76
  %v277 = vunpack.c.l.b16 %v77
  %v278 = vunpack.c.l.b16 %v78
  %v279 = vpack.c.b16 %v216, %v215
  %v280 = vpack.c.b16 %v218, %v217
  %v281 = vpack.c.b16 %v220, %v219
  %v282 = vpack.c.b16 %v222, %v221
  %v283 = vpack.c.b16 %v224, %v223
  %v284 = vpack.c.b16 %v226, %v225
  %v285 = vpack.c.b16 %v228, %v227
  %v286 = vpack.c.b16 %v230, %v229
  %v287 = vpack.c.b16 %v232, %v231
  %v288 = vpack.c.b16 %v234, %v233
  %v289 = vpack.c.b16 %v236, %v235
  %v290 = vpack.c.b16 %v238, %v237
  %v291 = vpack.c.b16 %v240, %v239
  %v292 = vpack.c.b16 %v242, %v241
  %v293 = vpack.c.b16 %v244, %v243
  %v294 = vpack.c.b16 %v246, %v245
  %v295 = vpack.c.b16 %v248, %v247
  %v296 = vpack.c.b16 %v250, %v249
  %v297 = vpack.c.b16 %v252, %v251
  %v298 = vpack.c.b16 %v254, %v253
  %v299 = vpack.c.b16 %v256, %v255
  %v300 = vpack.c.b16 %v258, %v257
  %v301 = vpack.c.b16 %v260, %v259
  %v302 = vpack.c.b16 %v262, %v261
  %v303 = vpack.c.b16 %v264, %v263
  %v304 = vpack.c.b16 %v266, %v265
  %v305 = vpack.c.b16 %v268, %v267
  %v306 = vpack.c.b16 %v270, %v269
  %v307 = vpack.c.b16 %v272, %v271
  %v308 = vpack.c.b16 %v274, %v273
  %v309 = vpack.c.b16 %v276, %v275
  %v310 = vpack.c.b16 %v278, %v277
  %343 = vmatprep.subr.bf16.mxu0 0
  %344 = vmatpush1.bf16.msra.mxu0 %v286
  %345 = vmatprep.subr.bf16.mxu0 0
  %346 = vmatpush1.bf16.msra.mxu0 %v285
  %347 = vmatprep.subr.bf16.mxu0 0
  %348 = vmatpush1.bf16.msra.mxu0 %v284
  %349 = vmatprep.subr.bf16.mxu0 0
  %350 = vmatpush1.bf16.msra.mxu0 %v283
  %351 = vmatprep.subr.bf16.mxu0 0
  %352 = vmatpush1.bf16.msra.mxu0 %v282
  %353 = vmatprep.subr.bf16.mxu0 0
  %354 = vmatpush1.bf16.msra.mxu0 %v281
  %355 = vmatprep.subr.bf16.mxu0 0
  %356 = vmatpush1.bf16.msra.mxu0 %v280
  %357 = vmatprep.subr.bf16.mxu0 0
  %358 = vmatpush1.bf16.msra.mxu0 %v279
  %359 = vmatprep.subr.bf16.mxu0 0
  %360 = vmatpush2.bf16.msra.mxu0 %v294
  %361 = vmatprep.subr.bf16.mxu0 0
  %362 = vmatpush2.bf16.msra.mxu0 %v293
  %363 = vmatprep.subr.bf16.mxu0 0
  %364 = vmatpush2.bf16.msra.mxu0 %v292
  %365 = vmatprep.subr.bf16.mxu0 0
  %366 = vmatpush2.bf16.msra.mxu0 %v291
  %367 = vmatprep.subr.bf16.mxu0 0
  %368 = vmatpush2.bf16.msra.mxu0 %v290
  %369 = vmatprep.subr.bf16.mxu0 0
  %370 = vmatpush2.bf16.msra.mxu0 %v289
  %371 = vmatprep.subr.bf16.mxu0 0
  %372 = vmatpush2.bf16.msra.mxu0 %v288
  %373 = vmatprep.subr.bf16.mxu0 0
  %374 = vmatpush2.bf16.msra.mxu0 %v287
  %375 = vmatprep.mubr.bf16.mxu0 %v136
  %376 = vmatmul.mubr.bf16.gmra.mxu0 %v135
  %v377 = vpop.f32.mrf.mxu0
  %v378 = vadd.f32 %v94, %v377
  %v379 = vpop.f32.mrf.mxu0
  %v380 = vpop.f32.mrf.mxu0
  %v381 = vadd.f32 %v99, %v380
  %v382 = vpop.f32.mrf.mxu0
  %383 = vmatprep.mubr.bf16.mxu0 %v140
  %384 = vmatmul.mubr.bf16.gmra.mxu0 %v139
  %v385 = vpop.f32.mrf.mxu0
  %v386 = vadd.f32 %v104, %v385
  %v387 = vpop.f32.mrf.mxu0
  %v388 = vpop.f32.mrf.mxu0
  %v389 = vadd.f32 %v109, %v388
  %v390 = vpop.f32.mrf.mxu0
  %391 = vdwg.mxu0
  %392 = vmatprep.subr.bf16.mxu0 0
  %393 = vmatpush1.bf16.msra.mxu0 %v302
  %394 = vmatprep.subr.bf16.mxu0 0
  %395 = vmatpush1.bf16.msra.mxu0 %v301
  %396 = vmatprep.subr.bf16.mxu0 0
  %397 = vmatpush1.bf16.msra.mxu0 %v300
  %398 = vmatprep.subr.bf16.mxu0 0
  %399 = vmatpush1.bf16.msra.mxu0 %v299
  %400 = vmatprep.subr.bf16.mxu0 0
  %401 = vmatpush1.bf16.msra.mxu0 %v298
  %402 = vmatprep.subr.bf16.mxu0 0
  %403 = vmatpush1.bf16.msra.mxu0 %v297
  %404 = vmatprep.subr.bf16.mxu0 0
  %405 = vmatpush1.bf16.msra.mxu0 %v296
  %406 = vmatprep.subr.bf16.mxu0 0
  %407 = vmatpush1.bf16.msra.mxu0 %v295
  %408 = vmatprep.subr.bf16.mxu0 0
  %409 = vmatpush2.bf16.msra.mxu0 %v310
  %410 = vmatprep.subr.bf16.mxu0 0
  %411 = vmatpush2.bf16.msra.mxu0 %v309
  %412 = vmatprep.subr.bf16.mxu0 0
  %413 = vmatpush2.bf16.msra.mxu0 %v308
  %414 = vmatprep.subr.bf16.mxu0 0
  %415 = vmatpush2.bf16.msra.mxu0 %v307
  %416 = vmatprep.subr.bf16.mxu0 0
  %417 = vmatpush2.bf16.msra.mxu0 %v306
  %418 = vmatprep.subr.bf16.mxu0 0
  %419 = vmatpush2.bf16.msra.mxu0 %v305
  %420 = vmatprep.subr.bf16.mxu0 0
  %421 = vmatpush2.bf16.msra.mxu0 %v304
  %422 = vmatprep.subr.bf16.mxu0 0
  %423 = vmatpush2.bf16.msra.mxu0 %v303
  %424 = vmatprep.mubr.bf16.mxu0 %v138
  %425 = vmatmul.mubr.bf16.gmra.mxu0 %v137
  %v426 = vpop.f32.mrf.mxu0
  %v427 = vadd.f32 %v378, %v426
  %v428 = vpop.f32.mrf.mxu0
  %v429 = vpop.f32.mrf.mxu0
  %v430 = vadd.f32 %v381, %v429
  %v431 = vpop.f32.mrf.mxu0
  %432 = vmatprep.mubr.bf16.mxu0 %v142
  %433 = vmatmul.mubr.bf16.gmra.mxu0 %v141
  %v434 = vpop.f32.mrf.mxu0
  %v435 = vadd.f32 %v386, %v434
  %v436 = vpop.f32.mrf.mxu0
  %v437 = vpop.f32.mrf.mxu0
  %v438 = vadd.f32 %v389, %v437
  %v439 = vpop.f32.mrf.mxu0
  %440 = vdwg.mxu0
  %v441 = vmax.f32 %v427, 0.0
  %v442 = vmax.f32 %v430, 0.0
  %v443 = vmax.f32 %v435, 0.0
  %v444 = vmax.f32 %v438, 0.0
  %vm445 = vcmask 64512
  %446 = vst.msk [vmem:[%s3] sm:$0xff] %vm445, %v441
  %447 = vst.msk [vmem:[%s3 + $0x8] sm:$0xff] %vm445, %v442
  %448 = vst.msk [vmem:[%s3 + $0x10] sm:$0xff] %vm445, %v443
  %449 = vst.msk [vmem:[%s3 + $0x18] sm:$0xff] %vm445, %v444
  // Predicated region
  $region14: #{vqvae_forward.22} parent=0 // pred_check
    _
  $region15: #{vqvae_forward.22} parent=0 // pred_check_branch
    %451 = sbr.rel (0) target = $region17
  $region16: #{vqvae_forward.22} parent=0 // pred_region
    _
  $region17: #{vqvae_forward.22} parent=0 // pred_fallthru
    _
  // Predicated region
  $region18: #{vqvae_forward.22} parent=0 // pred_check
    _
  $region19: #{vqvae_forward.22} parent=0 // pred_check_branch
    %453 = sbr.rel (0) target = $region21
  $region20: #{vqvae_forward.22} parent=0 // pred_region
    _
  $region21: #{vqvae_forward.22} parent=0 // pred_fallthru
    _

// kernel: vqvae_forward.23
$region0: #{vqvae_forward.23}
  #allocation0 [shape = 'u32[]', space=smem, size = 0x4, offset = 0x4, fixed_abs, tag = 'smem constant byte address 0x4 - core index']
  #allocation1 [shape = 'u32[144,128]{1,0:T(1,128)}', space=vmem, size = 0x12000, scoped, tag = 'internal scratch']
  %s0 = inlined_call_operand.vmem [shape: bf16[32,288], index: 0, kind: input, shape index: {}]
  %s1 = inlined_call_operand.vmem [shape: bf16[288,8], index: 1, kind: input, shape index: {}]
  %s2 = inlined_call_operand.vmem [shape: f32[32,1], index: 2, kind: input, shape index: {}]
  %s3 = inlined_call_operand.vmem [shape: f32[32,8], index: 3, kind: output, shape index: {}]
  %s4 = sld [smem:[#allocation0]]
  $region22: #{vqvae_forward.23} parent=0
    _
  %s6 = ssub.s32 1, %s4
  %s7 = scalar_select 0, %s6, %s4
  // Predicated region
  $region2: #{vqvae_forward.23} parent=0 // pred_check
    _
  $region3: #{vqvae_forward.23} parent=0 // pred_check_branch
    %9 = sbr.rel (0) target = $region5
  $region4: #{vqvae_forward.23} parent=0 // pred_region
    _
  $region5: #{vqvae_forward.23} parent=0 // pred_fallthru
    _
  // Predicated region
  $region6: #{vqvae_forward.23} parent=0 // pred_check
    _
  $region7: #{vqvae_forward.23} parent=0 // pred_check_branch
    %11 = sbr.rel (0) target = $region9
  $region8: #{vqvae_forward.23} parent=0 // pred_region
    _
  $region9: #{vqvae_forward.23} parent=0 // pred_fallthru
    _
  // Predicated region
  $region10: #{vqvae_forward.23} parent=0 // pred_check
    _
  $region11: #{vqvae_forward.23} parent=0 // pred_check_branch
    %13 = sbr.rel (0) target = $region13
  $region12: #{vqvae_forward.23} parent=0 // pred_region
    _
  $region13: #{vqvae_forward.23} parent=0 // pred_fallthru
    _
  %v15 = vld [vmem:[%s1] sm:$0xf]
  %v16 = vld [vmem:[%s1 + $0x4] sm:$0xf]
  %v17 = vld [vmem:[%s1 + $0x8] sm:$0xf]
  %v18 = vld [vmem:[%s1 + $0xc] sm:$0xf]
  %v19 = vld [vmem:[%s1 + $0x10] sm:$0xf]
  %v20 = vld [vmem:[%s1 + $0x14] sm:$0xf]
  %v21 = vld [vmem:[%s1 + $0x18] sm:$0xf]
  %v22 = vld [vmem:[%s1 + $0x1c] sm:$0xf]
  %v23 = vld [vmem:[%s1 + $0x20] sm:$0xf]
  %v24 = vld [vmem:[%s1 + $0x24] sm:$0xf]
  %v25 = vld [vmem:[%s1 + $0x28] sm:$0xf]
  %v26 = vld [vmem:[%s1 + $0x2c] sm:$0xf]
  %v27 = vld [vmem:[%s1 + $0x30] sm:$0xf]
  %v28 = vld [vmem:[%s1 + $0x34] sm:$0xf]
  %v29 = vld [vmem:[%s1 + $0x38] sm:$0xf]
  %v30 = vld [vmem:[%s1 + $0x3c] sm:$0xf]
  %v31 = vld [vmem:[%s1 + $0x40] sm:$0xf]
  %v32 = vld [vmem:[%s1 + $0x44] sm:$0xf]
  %v33 = vld [vmem:[%s1 + $0x48] sm:$0xf]
  %v34 = vld [vmem:[%s1 + $0x4c] sm:$0xf]
  %v35 = vld [vmem:[%s1 + $0x50] sm:$0xf]
  %v36 = vld [vmem:[%s1 + $0x54] sm:$0xf]
  %v37 = vld [vmem:[%s1 + $0x58] sm:$0xf]
  %v38 = vld [vmem:[%s1 + $0x5c] sm:$0xf]
  %v39 = vld [vmem:[%s1 + $0x60] sm:$0xf]
  %v40 = vld [vmem:[%s1 + $0x64] sm:$0xf]
  %v41 = vld [vmem:[%s1 + $0x68] sm:$0xf]
  %v42 = vld [vmem:[%s1 + $0x6c] sm:$0xf]
  %v43 = vld [vmem:[%s1 + $0x70] sm:$0xf]
  %v44 = vld [vmem:[%s1 + $0x74] sm:$0xf]
  %v45 = vld [vmem:[%s1 + $0x78] sm:$0xf]
  %v46 = vld [vmem:[%s1 + $0x7c] sm:$0xf]
  %v47 = vld [vmem:[%s1 + $0x80] sm:$0xf]
  %v48 = vld [vmem:[%s1 + $0x84] sm:$0xf]
  %v49 = vld [vmem:[%s1 + $0x88] sm:$0xf]
  %v50 = vld [vmem:[%s1 + $0x8c] sm:$0xf]
  %v51 = vld [vmem:[%s0] sm:$0xff]
  %v52 = vld [vmem:[%s0 + $0x8] sm:$0xf]
  %v53 = vld [vmem:[%s0 + $0xc] sm:$0xff]
  %v54 = vld [vmem:[%s0 + $0x14] sm:$0xf]
  %v55 = vld [vmem:[%s0 + $0x18] sm:$0xff]
  %v56 = vld [vmem:[%s0 + $0x20] sm:$0xf]
  %v57 = vld [vmem:[%s0 + $0x24] sm:$0xff]
  %v58 = vld [vmem:[%s0 + $0x2c] sm:$0xf]
  %v59 = vld [vmem:[%s2] sm:$0xff]
  %v60 = vld [vmem:[%s2 + $0x8] sm:$0xff]
  %v61 = vld [vmem:[%s2 + $0x10] sm:$0xff]
  %v62 = vld [vmem:[%s2 + $0x18] sm:$0xff]
  %64 = vset.pattern.permute.xlu0 0
  %65 = vperm.xlu0 %64, %v59
  %v66 = vpop.permute.xlu0 %65
  %69 = vset.pattern.permute.xlu0 0
  %70 = vperm.xlu0 %69, %v60
  %v71 = vpop.permute.xlu0 %70
  %74 = vset.pattern.permute.xlu0 0
  %75 = vperm.xlu0 %74, %v61
  %v76 = vpop.permute.xlu0 %75
  %79 = vset.pattern.permute.xlu0 0
  %80 = vperm.xlu0 %79, %v62
  %v81 = vpop.permute.xlu0 %80
  %v91 = vunpack.c.l.b16 %v51
  %v92 = vunpack.c.h.b16 %v51
  %v93 = vunpack.c.l.b16 %v52
  %v94 = vunpack.c.l.b16 %v53
  %v95 = vunpack.c.h.b16 %v53
  %v96 = vunpack.c.l.b16 %v54
  %v97 = vunpack.c.l.b16 %v55
  %v98 = vunpack.c.h.b16 %v55
  %v99 = vunpack.c.l.b16 %v56
  %v100 = vunpack.c.l.b16 %v57
  %v101 = vunpack.c.h.b16 %v57
  %v102 = vunpack.c.l.b16 %v58
  %v103 = vpack.c.b16 %v94, %v91
  %v104 = vpack.c.b16 %v95, %v92
  %v105 = vpack.c.b16 %v96, %v93
  %v106 = vpack.c.b16 %v100, %v97
  %v107 = vpack.c.b16 %v101, %v98
  %v108 = vpack.c.b16 %v102, %v99
  %v149 = vunpack.c.l.b16 %v15
  %v150 = vunpack.c.l.b16 %v16
  %v151 = vunpack.c.l.b16 %v17
  %v152 = vunpack.c.l.b16 %v18
  %v153 = vunpack.c.l.b16 %v19
  %v154 = vunpack.c.l.b16 %v20
  %v155 = vunpack.c.l.b16 %v21
  %v156 = vunpack.c.l.b16 %v22
  %v157 = vunpack.c.l.b16 %v23
  %v158 = vunpack.c.l.b16 %v24
  %v159 = vunpack.c.l.b16 %v25
  %v160 = vunpack.c.l.b16 %v26
  %v161 = vunpack.c.l.b16 %v27
  %v162 = vunpack.c.l.b16 %v28
  %v163 = vunpack.c.l.b16 %v29
  %v164 = vunpack.c.l.b16 %v30
  %v165 = vunpack.c.l.b16 %v31
  %v166 = vunpack.c.l.b16 %v32
  %v167 = vunpack.c.l.b16 %v33
  %v168 = vunpack.c.l.b16 %v34
  %v169 = vunpack.c.l.b16 %v35
  %v170 = vunpack.c.l.b16 %v36
  %v171 = vunpack.c.l.b16 %v37
  %v172 = vunpack.c.l.b16 %v38
  %v173 = vunpack.c.l.b16 %v39
  %v174 = vunpack.c.l.b16 %v40
  %v175 = vunpack.c.l.b16 %v41
  %v176 = vunpack.c.l.b16 %v42
  %v177 = vunpack.c.l.b16 %v43
  %v178 = vunpack.c.l.b16 %v44
  %v179 = vunpack.c.l.b16 %v45
  %v180 = vunpack.c.l.b16 %v46
  %v181 = vunpack.c.l.b16 %v47
  %v182 = vunpack.c.l.b16 %v48
  %v183 = vunpack.c.l.b16 %v49
  %v184 = vunpack.c.l.b16 %v50
  %v185 = vpack.c.b16 %v150, %v149
  %v186 = vpack.c.b16 %v152, %v151
  %v187 = vpack.c.b16 %v154, %v153
  %v188 = vpack.c.b16 %v156, %v155
  %v189 = vpack.c.b16 %v158, %v157
  %v190 = vpack.c.b16 %v160, %v159
  %v191 = vpack.c.b16 %v162, %v161
  %v192 = vpack.c.b16 %v164, %v163
  %v193 = vpack.c.b16 %v166, %v165
  %v194 = vpack.c.b16 %v168, %v167
  %v195 = vpack.c.b16 %v170, %v169
  %v196 = vpack.c.b16 %v172, %v171
  %v197 = vpack.c.b16 %v174, %v173
  %v198 = vpack.c.b16 %v176, %v175
  %v199 = vpack.c.b16 %v178, %v177
  %v200 = vpack.c.b16 %v180, %v179
  %v201 = vpack.c.b16 %v182, %v181
  %v202 = vpack.c.b16 %v184, %v183
  %vm221 = vcmask 261120
  %v223 = vsel %vm221, %v105, 0
  %v226 = vsel %vm221, %v108, 0
  %228 = vmatprep.subr.bf16.mxu0 0
  %229 = vmatpush1.bf16.msra.mxu0 %v192
  %230 = vmatprep.subr.bf16.mxu0 0
  %231 = vmatpush1.bf16.msra.mxu0 %v191
  %232 = vmatprep.subr.bf16.mxu0 0
  %233 = vmatpush1.bf16.msra.mxu0 %v190
  %234 = vmatprep.subr.bf16.mxu0 0
  %235 = vmatpush1.bf16.msra.mxu0 %v189
  %236 = vmatprep.subr.bf16.mxu0 0
  %237 = vmatpush1.bf16.msra.mxu0 %v188
  %238 = vmatprep.subr.bf16.mxu0 0
  %239 = vmatpush1.bf16.msra.mxu0 %v187
  %240 = vmatprep.subr.bf16.mxu0 0
  %241 = vmatpush1.bf16.msra.mxu0 %v186
  %242 = vmatprep.subr.bf16.mxu0 0
  %243 = vmatpush1.bf16.msra.mxu0 %v185
  %244 = vmatprep.subr.bf16.mxu0 0
  %245 = vmatpush2.bf16.msra.mxu0 %v200
  %246 = vmatprep.subr.bf16.mxu0 0
  %247 = vmatpush2.bf16.msra.mxu0 %v199
  %248 = vmatprep.subr.bf16.mxu0 0
  %249 = vmatpush2.bf16.msra.mxu0 %v198
  %250 = vmatprep.subr.bf16.mxu0 0
  %251 = vmatpush2.bf16.msra.mxu0 %v197
  %252 = vmatprep.subr.bf16.mxu0 0
  %253 = vmatpush2.bf16.msra.mxu0 %v196
  %254 = vmatprep.subr.bf16.mxu0 0
  %255 = vmatpush2.bf16.msra.mxu0 %v195
  %256 = vmatprep.subr.bf16.mxu0 0
  %257 = vmatpush2.bf16.msra.mxu0 %v194
  %258 = vmatprep.subr.bf16.mxu0 0
  %259 = vmatpush2.bf16.msra.mxu0 %v193
  %260 = vmatprep.mubr.bf16.mxu0 %v104
  %261 = vmatmul.mubr.bf16.gmra.mxu0 %v103
  %v262 = vpop.f32.mrf.mxu0
  %v263 = vadd.f32 %v66, %v262
  %v264 = vpop.f32.mrf.mxu0
  %v265 = vpop.f32.mrf.mxu0
  %v266 = vadd.f32 %v71, %v265
  %v267 = vpop.f32.mrf.mxu0
  %268 = vmatprep.mubr.bf16.mxu0 %v107
  %269 = vmatmul.mubr.bf16.gmra.mxu0 %v106
  %v270 = vpop.f32.mrf.mxu0
  %v271 = vadd.f32 %v76, %v270
  %v272 = vpop.f32.mrf.mxu0
  %v273 = vpop.f32.mrf.mxu0
  %v274 = vadd.f32 %v81, %v273
  %v275 = vpop.f32.mrf.mxu0
  %276 = vdwg.mxu0
  %277 = vmatprep.subr.bf16.mxu0 0
  %278 = vmatpush1.bf16.msra.mxu0 0
  %279 = vmatprep.subr.bf16.mxu0 0
  %280 = vmatpush1.bf16.msra.mxu0 0
  %281 = vmatprep.subr.bf16.mxu0 0
  %282 = vmatpush1.bf16.msra.mxu0 0
  %283 = vmatprep.subr.bf16.mxu0 0
  %284 = vmatpush1.bf16.msra.mxu0 0
  %285 = vmatprep.subr.bf16.mxu0 0
  %286 = vmatpush1.bf16.msra.mxu0 0
  %287 = vmatprep.subr.bf16.mxu0 0
  %288 = vmatpush1.bf16.msra.mxu0 0
  %289 = vmatprep.subr.bf16.mxu0 0
  %290 = vmatpush1.bf16.msra.mxu0 %v202
  %291 = vmatprep.subr.bf16.mxu0 0
  %292 = vmatpush1.bf16.msra.mxu0 %v201
  %293 = vmatprep.subr.bf16.mxu0 0
  %294 = vmatpush2.bf16.msra.mxu0 0
  %295 = vmatprep.subr.bf16.mxu0 0
  %296 = vmatpush2.bf16.msra.mxu0 0
  %297 = vmatprep.subr.bf16.mxu0 0
  %298 = vmatpush2.bf16.msra.mxu0 0
  %299 = vmatprep.subr.bf16.mxu0 0
  %300 = vmatpush2.bf16.msra.mxu0 0
  %301 = vmatprep.subr.bf16.mxu0 0
  %302 = vmatpush2.bf16.msra.mxu0 0
  %303 = vmatprep.subr.bf16.mxu0 0
  %304 = vmatpush2.bf16.msra.mxu0 0
  %305 = vmatprep.subr.bf16.mxu0 0
  %306 = vmatpush2.bf16.msra.mxu0 0
  %307 = vmatprep.subr.bf16.mxu0 0
  %308 = vmatpush2.bf16.msra.mxu0 0
  %309 = vmatprep.mubr.bf16.mxu0 0
  %310 = vmatmul.mubr.bf16.gmra.mxu0 %v223
  %v311 = vpop.f32.mrf.mxu0
  %v312 = vadd.f32 %v263, %v311
  %v313 = vpop.f32.mrf.mxu0
  %v314 = vpop.f32.mrf.mxu0
  %v315 = vadd.f32 %v266, %v314
  %v316 = vpop.f32.mrf.mxu0
  %317 = vmatprep.mubr.bf16.mxu0 0
  %318 = vmatmul.mubr.bf16.gmra.mxu0 %v226
  %v319 = vpop.f32.mrf.mxu0
  %v320 = vadd.f32 %v271, %v319
  %v321 = vpop.f32.mrf.mxu0
  %v322 = vpop.f32.mrf.mxu0
  %v323 = vadd.f32 %v274, %v322
  %v324 = vpop.f32.mrf.mxu0
  %325 = vdwg.mxu0
  %vm326 = vcmask 64512
  %327 = vst.msk [vmem:[%s3] sm:$0xff] %vm326, %v312
  %328 = vst.msk [vmem:[%s3 + $0x8] sm:$0xff] %vm326, %v315
  %329 = vst.msk [vmem:[%s3 + $0x10] sm:$0xff] %vm326, %v320
  %330 = vst.msk [vmem:[%s3 + $0x18] sm:$0xff] %vm326, %v323
  // Predicated region
  $region14: #{vqvae_forward.23} parent=0 // pred_check
    _
  $region15: #{vqvae_forward.23} parent=0 // pred_check_branch
    %332 = sbr.rel (0) target = $region17
  $region16: #{vqvae_forward.23} parent=0 // pred_region
    _
  $region17: #{vqvae_forward.23} parent=0 // pred_fallthru
    _
  // Predicated region
  $region18: #{vqvae_forward.23} parent=0 // pred_check
    _
  $region19: #{vqvae_forward.23} parent=0 // pred_check_branch
    %334 = sbr.rel (0) target = $region21
  $region20: #{vqvae_forward.23} parent=0 // pred_region
    _
  $region21: #{vqvae_forward.23} parent=0 // pred_fallthru
    _

// kernel: vqvae_forward.24
$region0: #{vqvae_forward.24}
  #allocation0 [shape = 'u32[]', space=smem, size = 0x4, offset = 0x4, fixed_abs, tag = 'smem constant byte address 0x4 - core index']
  #allocation1 [shape = 'u32[144,128]{1,0:T(1,128)}', space=vmem, size = 0x12000, scoped, tag = 'internal scratch']
  %s0 = inlined_call_operand.vmem [shape: bf16[32,288], index: 0, kind: input, shape index: {}]
  %s1 = inlined_call_operand.vmem [shape: bf16[288,8], index: 1, kind: input, shape index: {}]
  %s2 = inlined_call_operand.vmem [shape: f32[32,1], index: 2, kind: input, shape index: {}]
  %s3 = inlined_call_operand.vmem [shape: f32[32,8], index: 3, kind: output, shape index: {}]
  %s4 = sld [smem:[#allocation0]]
  $region22: #{vqvae_forward.24} parent=0
    _
  %s6 = ssub.s32 1, %s4
  %s7 = scalar_select 0, %s6, %s4
  // Predicated region
  $region2: #{vqvae_forward.24} parent=0 // pred_check
    _
  $region3: #{vqvae_forward.24} parent=0 // pred_check_branch
    %9 = sbr.rel (0) target = $region5
  $region4: #{vqvae_forward.24} parent=0 // pred_region
    _
  $region5: #{vqvae_forward.24} parent=0 // pred_fallthru
    _
  // Predicated region
  $region6: #{vqvae_forward.24} parent=0 // pred_check
    _
  $region7: #{vqvae_forward.24} parent=0 // pred_check_branch
    %11 = sbr.rel (0) target = $region9
  $region8: #{vqvae_forward.24} parent=0 // pred_region
    _
  $region9: #{vqvae_forward.24} parent=0 // pred_fallthru
    _
  // Predicated region
  $region10: #{vqvae_forward.24} parent=0 // pred_check
    _
  $region11: #{vqvae_forward.24} parent=0 // pred_check_branch
    %13 = sbr.rel (0) target = $region13
  $region12: #{vqvae_forward.24} parent=0 // pred_region
    _
  $region13: #{vqvae_forward.24} parent=0 // pred_fallthru
    _
  %v15 = vld [vmem:[%s1] sm:$0xf]
  %v16 = vld [vmem:[%s1 + $0x4] sm:$0xf]
  %v17 = vld [vmem:[%s1 + $0x8] sm:$0xf]
  %v18 = vld [vmem:[%s1 + $0xc] sm:$0xf]
  %v19 = vld [vmem:[%s1 + $0x10] sm:$0xf]
  %v20 = vld [vmem:[%s1 + $0x14] sm:$0xf]
  %v21 = vld [vmem:[%s1 + $0x18] sm:$0xf]
  %v22 = vld [vmem:[%s1 + $0x1c] sm:$0xf]
  %v23 = vld [vmem:[%s1 + $0x20] sm:$0xf]
  %v24 = vld [vmem:[%s1 + $0x24] sm:$0xf]
  %v25 = vld [vmem:[%s1 + $0x28] sm:$0xf]
  %v26 = vld [vmem:[%s1 + $0x2c] sm:$0xf]
  %v27 = vld [vmem:[%s1 + $0x30] sm:$0xf]
  %v28 = vld [vmem:[%s1 + $0x34] sm:$0xf]
  %v29 = vld [vmem:[%s1 + $0x38] sm:$0xf]
  %v30 = vld [vmem:[%s1 + $0x3c] sm:$0xf]
  %v31 = vld [vmem:[%s1 + $0x40] sm:$0xf]
  %v32 = vld [vmem:[%s1 + $0x44] sm:$0xf]
  %v33 = vld [vmem:[%s1 + $0x48] sm:$0xf]
  %v34 = vld [vmem:[%s1 + $0x4c] sm:$0xf]
  %v35 = vld [vmem:[%s1 + $0x50] sm:$0xf]
  %v36 = vld [vmem:[%s1 + $0x54] sm:$0xf]
  %v37 = vld [vmem:[%s1 + $0x58] sm:$0xf]
  %v38 = vld [vmem:[%s1 + $0x5c] sm:$0xf]
  %v39 = vld [vmem:[%s1 + $0x60] sm:$0xf]
  %v40 = vld [vmem:[%s1 + $0x64] sm:$0xf]
  %v41 = vld [vmem:[%s1 + $0x68] sm:$0xf]
  %v42 = vld [vmem:[%s1 + $0x6c] sm:$0xf]
  %v43 = vld [vmem:[%s1 + $0x70] sm:$0xf]
  %v44 = vld [vmem:[%s1 + $0x74] sm:$0xf]
  %v45 = vld [vmem:[%s1 + $0x78] sm:$0xf]
  %v46 = vld [vmem:[%s1 + $0x7c] sm:$0xf]
  %v47 = vld [vmem:[%s1 + $0x80] sm:$0xf]
  %v48 = vld [vmem:[%s1 + $0x84] sm:$0xf]
  %v49 = vld [vmem:[%s1 + $0x88] sm:$0xf]
  %v50 = vld [vmem:[%s1 + $0x8c] sm:$0xf]
  %v51 = vmax.bf16 %v15, 0
  %v52 = vmax.bf16 %v16, 0
  %v53 = vmax.bf16 %v17, 0
  %v54 = vmax.bf16 %v18, 0
  %v55 = vmax.bf16 %v19, 0
  %v56 = vmax.bf16 %v20, 0
  %v57 = vmax.bf16 %v21, 0
  %v58 = vmax.bf16 %v22, 0
  %v59 = vmax.bf16 %v23, 0
  %v60 = vmax.bf16 %v24, 0
  %v61 = vmax.bf16 %v25, 0
  %v62 = vmax.bf16 %v26, 0
  %v63 = vmax.bf16 %v27, 0
  %v64 = vmax.bf16 %v28, 0
  %v65 = vmax.bf16 %v29, 0
  %v66 = vmax.bf16 %v30, 0
  %v67 = vmax.bf16 %v31, 0
  %v68 = vmax.bf16 %v32, 0
  %v69 = vmax.bf16 %v33, 0
  %v70 = vmax.bf16 %v34, 0
  %v71 = vmax.bf16 %v35, 0
  %v72 = vmax.bf16 %v36, 0
  %v73 = vmax.bf16 %v37, 0
  %v74 = vmax.bf16 %v38, 0
  %v75 = vmax.bf16 %v39, 0
  %v76 = vmax.bf16 %v40, 0
  %v77 = vmax.bf16 %v41, 0
  %v78 = vmax.bf16 %v42, 0
  %v79 = vmax.bf16 %v43, 0
  %v80 = vmax.bf16 %v44, 0
  %v81 = vmax.bf16 %v45, 0
  %v82 = vmax.bf16 %v46, 0
  %v83 = vmax.bf16 %v47, 0
  %v84 = vmax.bf16 %v48, 0
  %v85 = vmax.bf16 %v49, 0
  %v86 = vmax.bf16 %v50, 0
  %v87 = vld [vmem:[%s0] sm:$0xff]
  %v88 = vld [vmem:[%s0 + $0x8] sm:$0xf]
  %v89 = vld [vmem:[%s0 + $0xc] sm:$0xff]
  %v90 = vld [vmem:[%s0 + $0x14] sm:$0xf]
  %v91 = vld [vmem:[%s0 + $0x18] sm:$0xff]
  %v92 = vld [vmem:[%s0 + $0x20] sm:$0xf]
  %v93 = vld [vmem:[%s0 + $0x24] sm:$0xff]
  %v94 = vld [vmem:[%s0 + $0x2c] sm:$0xf]
  %v95 = vld [vmem:[%s2] sm:$0xff]
  %v96 = vld [vmem:[%s2 + $0x8] sm:$0xff]
  %v97 = vld [vmem:[%s2 + $0x10] sm:$0xff]
  %v98 = vld [vmem:[%s2 + $0x18] sm:$0xff]
  %100 = vset.pattern.permute.xlu0 0
  %101 = vperm.xlu0 %100, %v95
  %v102 = vpop.permute.xlu0 %101
  %105 = vset.pattern.permute.xlu0 0
  %106 = vperm.xlu0 %105, %v96
  %v107 = vpop.permute.xlu0 %106
  %110 = vset.pattern.permute.xlu0 0
  %111 = vperm.xlu0 %110, %v97
  %v112 = vpop.permute.xlu0 %111
  %115 = vset.pattern.permute.xlu0 0
  %116 = vperm.xlu0 %115, %v98
  %v117 = vpop.permute.xlu0 %116
  %v127 = vunpack.c.l.b16 %v87
  %v128 = vunpack.c.h.b16 %v87
  %v129 = vunpack.c.l.b16 %v88
  %v130 = vunpack.c.l.b16 %v89
  %v131 = vunpack.c.h.b16 %v89
  %v132 = vunpack.c.l.b16 %v90
  %v133 = vunpack.c.l.b16 %v91
  %v134 = vunpack.c.h.b16 %v91
  %v135 = vunpack.c.l.b16 %v92
  %v136 = vunpack.c.l.b16 %v93
  %v137 = vunpack.c.h.b16 %v93
  %v138 = vunpack.c.l.b16 %v94
  %v139 = vpack.c.b16 %v130, %v127
  %v140 = vpack.c.b16 %v131, %v128
  %v141 = vpack.c.b16 %v132, %v129
  %v142 = vpack.c.b16 %v136, %v133
  %v143 = vpack.c.b16 %v137, %v134
  %v144 = vpack.c.b16 %v138, %v135
  %v185 = vunpack.c.l.b16 %v51
  %v186 = vunpack.c.l.b16 %v52
  %v187 = vunpack.c.l.b16 %v53
  %v188 = vunpack.c.l.b16 %v54
  %v189 = vunpack.c.l.b16 %v55
  %v190 = vunpack.c.l.b16 %v56
  %v191 = vunpack.c.l.b16 %v57
  %v192 = vunpack.c.l.b16 %v58
  %v193 = vunpack.c.l.b16 %v59
  %v194 = vunpack.c.l.b16 %v60
  %v195 = vunpack.c.l.b16 %v61
  %v196 = vunpack.c.l.b16 %v62
  %v197 = vunpack.c.l.b16 %v63
  %v198 = vunpack.c.l.b16 %v64
  %v199 = vunpack.c.l.b16 %v65
  %v200 = vunpack.c.l.b16 %v66
  %v201 = vunpack.c.l.b16 %v67
  %v202 = vunpack.c.l.b16 %v68
  %v203 = vunpack.c.l.b16 %v69
  %v204 = vunpack.c.l.b16 %v70
  %v205 = vunpack.c.l.b16 %v71
  %v206 = vunpack.c.l.b16 %v72
  %v207 = vunpack.c.l.b16 %v73
  %v208 = vunpack.c.l.b16 %v74
  %v209 = vunpack.c.l.b16 %v75
  %v210 = vunpack.c.l.b16 %v76
  %v211 = vunpack.c.l.b16 %v77
  %v212 = vunpack.c.l.b16 %v78
  %v213 = vunpack.c.l.b16 %v79
  %v214 = vunpack.c.l.b16 %v80
  %v215 = vunpack.c.l.b16 %v81
  %v216 = vunpack.c.l.b16 %v82
  %v217 = vunpack.c.l.b16 %v83
  %v218 = vunpack.c.l.b16 %v84
  %v219 = vunpack.c.l.b16 %v85
  %v220 = vunpack.c.l.b16 %v86
  %v221 = vpack.c.b16 %v186, %v185
  %v222 = vpack.c.b16 %v188, %v187
  %v223 = vpack.c.b16 %v190, %v189
  %v224 = vpack.c.b16 %v192, %v191
  %v225 = vpack.c.b16 %v194, %v193
  %v226 = vpack.c.b16 %v196, %v195
  %v227 = vpack.c.b16 %v198, %v197
  %v228 = vpack.c.b16 %v200, %v199
  %v229 = vpack.c.b16 %v202, %v201
  %v230 = vpack.c.b16 %v204, %v203
  %v231 = vpack.c.b16 %v206, %v205
  %v232 = vpack.c.b16 %v208, %v207
  %v233 = vpack.c.b16 %v210, %v209
  %v234 = vpack.c.b16 %v212, %v211
  %v235 = vpack.c.b16 %v214, %v213
  %v236 = vpack.c.b16 %v216, %v215
  %v237 = vpack.c.b16 %v218, %v217
  %v238 = vpack.c.b16 %v220, %v219
  %vm257 = vcmask 261120
  %v259 = vsel %vm257, %v141, 0
  %v262 = vsel %vm257, %v144, 0
  %264 = vmatprep.subr.bf16.mxu0 0
  %265 = vmatpush1.bf16.msra.mxu0 %v228
  %266 = vmatprep.subr.bf16.mxu0 0
  %267 = vmatpush1.bf16.msra.mxu0 %v227
  %268 = vmatprep.subr.bf16.mxu0 0
  %269 = vmatpush1.bf16.msra.mxu0 %v226
  %270 = vmatprep.subr.bf16.mxu0 0
  %271 = vmatpush1.bf16.msra.mxu0 %v225
  %272 = vmatprep.subr.bf16.mxu0 0
  %273 = vmatpush1.bf16.msra.mxu0 %v224
  %274 = vmatprep.subr.bf16.mxu0 0
  %275 = vmatpush1.bf16.msra.mxu0 %v223
  %276 = vmatprep.subr.bf16.mxu0 0
  %277 = vmatpush1.bf16.msra.mxu0 %v222
  %278 = vmatprep.subr.bf16.mxu0 0
  %279 = vmatpush1.bf16.msra.mxu0 %v221
  %280 = vmatprep.subr.bf16.mxu0 0
  %281 = vmatpush2.bf16.msra.mxu0 %v236
  %282 = vmatprep.subr.bf16.mxu0 0
  %283 = vmatpush2.bf16.msra.mxu0 %v235
  %284 = vmatprep.subr.bf16.mxu0 0
  %285 = vmatpush2.bf16.msra.mxu0 %v234
  %286 = vmatprep.subr.bf16.mxu0 0
  %287 = vmatpush2.bf16.msra.mxu0 %v233
  %288 = vmatprep.subr.bf16.mxu0 0
  %289 = vmatpush2.bf16.msra.mxu0 %v232
  %290 = vmatprep.subr.bf16.mxu0 0
  %291 = vmatpush2.bf16.msra.mxu0 %v231
  %292 = vmatprep.subr.bf16.mxu0 0
  %293 = vmatpush2.bf16.msra.mxu0 %v230
  %294 = vmatprep.subr.bf16.mxu0 0
  %295 = vmatpush2.bf16.msra.mxu0 %v229
  %296 = vmatprep.mubr.bf16.mxu0 %v140
  %297 = vmatmul.mubr.bf16.gmra.mxu0 %v139
  %v298 = vpop.f32.mrf.mxu0
  %v299 = vadd.f32 %v102, %v298
  %v300 = vpop.f32.mrf.mxu0
  %v301 = vpop.f32.mrf.mxu0
  %v302 = vadd.f32 %v107, %v301
  %v303 = vpop.f32.mrf.mxu0
  %304 = vmatprep.mubr.bf16.mxu0 %v143
  %305 = vmatmul.mubr.bf16.gmra.mxu0 %v142
  %v306 = vpop.f32.mrf.mxu0
  %v307 = vadd.f32 %v112, %v306
  %v308 = vpop.f32.mrf.mxu0
  %v309 = vpop.f32.mrf.mxu0
  %v310 = vadd.f32 %v117, %v309
  %v311 = vpop.f32.mrf.mxu0
  %312 = vdwg.mxu0
  %313 = vmatprep.subr.bf16.mxu0 0
  %314 = vmatpush1.bf16.msra.mxu0 0
  %315 = vmatprep.subr.bf16.mxu0 0
  %316 = vmatpush1.bf16.msra.mxu0 0
  %317 = vmatprep.subr.bf16.mxu0 0
  %318 = vmatpush1.bf16.msra.mxu0 0
  %319 = vmatprep.subr.bf16.mxu0 0
  %320 = vmatpush1.bf16.msra.mxu0 0
  %321 = vmatprep.subr.bf16.mxu0 0
  %322 = vmatpush1.bf16.msra.mxu0 0
  %323 = vmatprep.subr.bf16.mxu0 0
  %324 = vmatpush1.bf16.msra.mxu0 0
  %325 = vmatprep.subr.bf16.mxu0 0
  %326 = vmatpush1.bf16.msra.mxu0 %v238
  %327 = vmatprep.subr.bf16.mxu0 0
  %328 = vmatpush1.bf16.msra.mxu0 %v237
  %329 = vmatprep.subr.bf16.mxu0 0
  %330 = vmatpush2.bf16.msra.mxu0 0
  %331 = vmatprep.subr.bf16.mxu0 0
  %332 = vmatpush2.bf16.msra.mxu0 0
  %333 = vmatprep.subr.bf16.mxu0 0
  %334 = vmatpush2.bf16.msra.mxu0 0
  %335 = vmatprep.subr.bf16.mxu0 0
  %336 = vmatpush2.bf16.msra.mxu0 0
  %337 = vmatprep.subr.bf16.mxu0 0
  %338 = vmatpush2.bf16.msra.mxu0 0
  %339 = vmatprep.subr.bf16.mxu0 0
  %340 = vmatpush2.bf16.msra.mxu0 0
  %341 = vmatprep.subr.bf16.mxu0 0
  %342 = vmatpush2.bf16.msra.mxu0 0
  %343 = vmatprep.subr.bf16.mxu0 0
  %344 = vmatpush2.bf16.msra.mxu0 0
  %345 = vmatprep.mubr.bf16.mxu0 0
  %346 = vmatmul.mubr.bf16.gmra.mxu0 %v259
  %v347 = vpop.f32.mrf.mxu0
  %v348 = vadd.f32 %v299, %v347
  %v349 = vpop.f32.mrf.mxu0
  %v350 = vpop.f32.mrf.mxu0
  %v351 = vadd.f32 %v302, %v350
  %v352 = vpop.f32.mrf.mxu0
  %353 = vmatprep.mubr.bf16.mxu0 0
  %354 = vmatmul.mubr.bf16.gmra.mxu0 %v262
  %v355 = vpop.f32.mrf.mxu0
  %v356 = vadd.f32 %v307, %v355
  %v357 = vpop.f32.mrf.mxu0
  %v358 = vpop.f32.mrf.mxu0
  %v359 = vadd.f32 %v310, %v358
  %v360 = vpop.f32.mrf.mxu0
  %361 = vdwg.mxu0
  %v362 = vmax.f32 %v348, 0.0
  %v363 = vmax.f32 %v351, 0.0
  %v364 = vmax.f32 %v356, 0.0
  %v365 = vmax.f32 %v359, 0.0
  %vm366 = vcmask 64512
  %367 = vst.msk [vmem:[%s3] sm:$0xff] %vm366, %v362
  %368 = vst.msk [vmem:[%s3 + $0x8] sm:$0xff] %vm366, %v363
  %369 = vst.msk [vmem:[%s3 + $0x10] sm:$0xff] %vm366, %v364
  %370 = vst.msk [vmem:[%s3 + $0x18] sm:$0xff] %vm366, %v365
  // Predicated region
  $region14: #{vqvae_forward.24} parent=0 // pred_check
    _
  $region15: #{vqvae_forward.24} parent=0 // pred_check_branch
    %372 = sbr.rel (0) target = $region17
  $region16: #{vqvae_forward.24} parent=0 // pred_region
    _
  $region17: #{vqvae_forward.24} parent=0 // pred_fallthru
    _
  // Predicated region
  $region18: #{vqvae_forward.24} parent=0 // pred_check
    _
  $region19: #{vqvae_forward.24} parent=0 // pred_check_branch
    %374 = sbr.rel (0) target = $region21
  $region20: #{vqvae_forward.24} parent=0 // pred_region
    _
  $region21: #{vqvae_forward.24} parent=0 // pred_fallthru
    _

// kernel: vqvae_forward.25
$region0: #{vqvae_forward.25}
  #allocation0 [shape = 'u32[]', space=smem, size = 0x4, offset = 0x4, fixed_abs, tag = 'smem constant byte address 0x4 - core index']
  #allocation1 [shape = 'u32[144,128]{1,0:T(1,128)}', space=vmem, size = 0x12000, scoped, tag = 'internal scratch']
  %s0 = inlined_call_operand.vmem [shape: bf16[32,32], index: 0, kind: input, shape index: {}]
  %s1 = inlined_call_operand.vmem [shape: bf16[32,8], index: 1, kind: input, shape index: {}]
  %s2 = inlined_call_operand.vmem [shape: f32[32,1], index: 2, kind: input, shape index: {}]
  %s3 = inlined_call_operand.vmem [shape: f32[32,8], index: 3, kind: input, shape index: {}]
  %s4 = inlined_call_operand.vmem [shape: f32[32,8], index: 4, kind: output, shape index: {}]
  %s5 = sld [smem:[#allocation0]]
  $region26: #{vqvae_forward.25} parent=0
    _
  %s7 = ssub.s32 1, %s5
  %s8 = scalar_select 0, %s7, %s5
  // Predicated region
  $region2: #{vqvae_forward.25} parent=0 // pred_check
    _
  $region3: #{vqvae_forward.25} parent=0 // pred_check_branch
    %10 = sbr.rel (0) target = $region5
  $region4: #{vqvae_forward.25} parent=0 // pred_region
    _
  $region5: #{vqvae_forward.25} parent=0 // pred_fallthru
    _
  // Predicated region
  $region6: #{vqvae_forward.25} parent=0 // pred_check
    _
  $region7: #{vqvae_forward.25} parent=0 // pred_check_branch
    %12 = sbr.rel (0) target = $region9
  $region8: #{vqvae_forward.25} parent=0 // pred_region
    _
  $region9: #{vqvae_forward.25} parent=0 // pred_fallthru
    _
  // Predicated region
  $region10: #{vqvae_forward.25} parent=0 // pred_check
    _
  $region11: #{vqvae_forward.25} parent=0 // pred_check_branch
    %14 = sbr.rel (0) target = $region13
  $region12: #{vqvae_forward.25} parent=0 // pred_region
    _
  $region13: #{vqvae_forward.25} parent=0 // pred_fallthru
    _
  // Predicated region
  $region14: #{vqvae_forward.25} parent=0 // pred_check
    _
  $region15: #{vqvae_forward.25} parent=0 // pred_check_branch
    %16 = sbr.rel (0) target = $region17
  $region16: #{vqvae_forward.25} parent=0 // pred_region
    _
  $region17: #{vqvae_forward.25} parent=0 // pred_fallthru
    _
  %v18 = vld [vmem:[%s1] sm:$0xf]
  %v19 = vld [vmem:[%s1 + $0x4] sm:$0xf]
  %v20 = vld [vmem:[%s1 + $0x8] sm:$0xf]
  %v21 = vld [vmem:[%s1 + $0xc] sm:$0xf]
  %v22 = vld [vmem:[%s0] sm:$0xf]
  %v23 = vld [vmem:[%s0 + $0x4] sm:$0xf]
  %v24 = vld [vmem:[%s0 + $0x8] sm:$0xf]
  %v25 = vld [vmem:[%s0 + $0xc] sm:$0xf]
  %v26 = vld [vmem:[%s2] sm:$0xff]
  %v27 = vld [vmem:[%s2 + $0x8] sm:$0xff]
  %v28 = vld [vmem:[%s2 + $0x10] sm:$0xff]
  %v29 = vld [vmem:[%s2 + $0x18] sm:$0xff]
  %31 = vset.pattern.permute.xlu0 0
  %32 = vperm.xlu0 %31, %v26
  %v33 = vpop.permute.xlu0 %32
  %36 = vset.pattern.permute.xlu0 0
  %37 = vperm.xlu0 %36, %v27
  %v38 = vpop.permute.xlu0 %37
  %41 = vset.pattern.permute.xlu0 0
  %42 = vperm.xlu0 %41, %v28
  %v43 = vpop.permute.xlu0 %42
  %46 = vset.pattern.permute.xlu0 0
  %47 = vperm.xlu0 %46, %v29
  %v48 = vpop.permute.xlu0 %47
  %v54 = vunpack.c.l.b16 %v22
  %v55 = vunpack.c.l.b16 %v23
  %v56 = vunpack.c.l.b16 %v24
  %v57 = vunpack.c.l.b16 %v25
  %v58 = vpack.c.b16 %v55, %v54
  %v59 = vpack.c.b16 %v57, %v56
  %v64 = vunpack.c.l.b16 %v18
  %v65 = vunpack.c.l.b16 %v19
  %v66 = vunpack.c.l.b16 %v20
  %v67 = vunpack.c.l.b16 %v21
  %v68 = vpack.c.b16 %v65, %v64
  %v69 = vpack.c.b16 %v67, %v66
  %vm72 = vcmask 261120
  %v74 = vsel %vm72, %v58, 0
  %v77 = vsel %vm72, %v59, 0
  %79 = vmatprep.subr.bf16.mxu0 0
  %80 = vmatpush1.bf16.msra.mxu0 0
  %81 = vmatprep.subr.bf16.mxu0 0
  %82 = vmatpush1.bf16.msra.mxu0 0
  %83 = vmatprep.subr.bf16.mxu0 0
  %84 = vmatpush1.bf16.msra.mxu0 0
  %85 = vmatprep.subr.bf16.mxu0 0
  %86 = vmatpush1.bf16.msra.mxu0 0
  %87 = vmatprep.subr.bf16.mxu0 0
  %88 = vmatpush1.bf16.msra.mxu0 0
  %89 = vmatprep.subr.bf16.mxu0 0
  %90 = vmatpush1.bf16.msra.mxu0 0
  %91 = vmatprep.subr.bf16.mxu0 0
  %92 = vmatpush1.bf16.msra.mxu0 %v69
  %93 = vmatprep.subr.bf16.mxu0 0
  %94 = vmatpush1.bf16.msra.mxu0 %v68
  %95 = vmatprep.subr.bf16.mxu0 0
  %96 = vmatpush2.bf16.msra.mxu0 0
  %97 = vmatprep.subr.bf16.mxu0 0
  %98 = vmatpush2.bf16.msra.mxu0 0
  %99 = vmatprep.subr.bf16.mxu0 0
  %100 = vmatpush2.bf16.msra.mxu0 0
  %101 = vmatprep.subr.bf16.mxu0 0
  %102 = vmatpush2.bf16.msra.mxu0 0
  %103 = vmatprep.subr.bf16.mxu0 0
  %104 = vmatpush2.bf16.msra.mxu0 0
  %105 = vmatprep.subr.bf16.mxu0 0
  %106 = vmatpush2.bf16.msra.mxu0 0
  %107 = vmatprep.subr.bf16.mxu0 0
  %108 = vmatpush2.bf16.msra.mxu0 0
  %109 = vmatprep.subr.bf16.mxu0 0
  %110 = vmatpush2.bf16.msra.mxu0 0
  %111 = vmatprep.mubr.bf16.mxu0 0
  %112 = vmatmul.mubr.bf16.gmra.mxu0 %v74
  %v113 = vpop.f32.mrf.mxu0
  %v114 = vadd.f32 %v33, %v113
  %v115 = vpop.f32.mrf.mxu0
  %v116 = vpop.f32.mrf.mxu0
  %v117 = vadd.f32 %v38, %v116
  %v118 = vpop.f32.mrf.mxu0
  %119 = vmatprep.mubr.bf16.mxu0 0
  %120 = vmatmul.mubr.bf16.gmra.mxu0 %v77
  %v121 = vpop.f32.mrf.mxu0
  %v122 = vadd.f32 %v43, %v121
  %v123 = vpop.f32.mrf.mxu0
  %v124 = vpop.f32.mrf.mxu0
  %v125 = vadd.f32 %v48, %v124
  %v126 = vpop.f32.mrf.mxu0
  %127 = vdwg.mxu0
  %v128 = vld [vmem:[%s3] sm:$0xff]
  %v129 = vld [vmem:[%s3 + $0x8] sm:$0xff]
  %v130 = vld [vmem:[%s3 + $0x10] sm:$0xff]
  %v131 = vld [vmem:[%s3 + $0x18] sm:$0xff]
  %v132 = vadd.f32 %v114, %v128
  %v133 = vadd.f32 %v117, %v129
  %v134 = vadd.f32 %v122, %v130
  %v135 = vadd.f32 %v125, %v131
  %vm136 = vcmask 64512
  %137 = vst.msk [vmem:[%s4] sm:$0xff] %vm136, %v132
  %138 = vst.msk [vmem:[%s4 + $0x8] sm:$0xff] %vm136, %v133
  %139 = vst.msk [vmem:[%s4 + $0x10] sm:$0xff] %vm136, %v134
  %140 = vst.msk [vmem:[%s4 + $0x18] sm:$0xff] %vm136, %v135
  // Predicated region
  $region18: #{vqvae_forward.25} parent=0 // pred_check
    _
  $region19: #{vqvae_forward.25} parent=0 // pred_check_branch
    %142 = sbr.rel (0) target = $region21
  $region20: #{vqvae_forward.25} parent=0 // pred_region
    _
  $region21: #{vqvae_forward.25} parent=0 // pred_fallthru
    _
  // Predicated region
  $region22: #{vqvae_forward.25} parent=0 // pred_check
    _
  $region23: #{vqvae_forward.25} parent=0 // pred_check_branch
    %144 = sbr.rel (0) target = $region25
  $region24: #{vqvae_forward.25} parent=0 // pred_region
    _
  $region25: #{vqvae_forward.25} parent=0 // pred_fallthru
    _

// kernel: vqvae_forward.28
$region0: #{vqvae_forward.28}
  #allocation0 [shape = 'u32[]', space=smem, size = 0x4, offset = 0x4, fixed_abs, tag = 'smem constant byte address 0x4 - core index']
  #allocation1 [shape = 'u32[144,128]{1,0:T(1,128)}', space=vmem, size = 0x12000, scoped, tag = 'internal scratch']
  %s0 = inlined_call_operand.vmem [shape: bf16[32,8], index: 0, kind: input, shape index: {}]
  %s1 = inlined_call_operand.vmem [shape: f32[8,32], index: 1, kind: input, shape index: {}]
  %s2 = inlined_call_operand.vmem [shape: f32[32,8], index: 2, kind: input, shape index: {}]
  %s3 = inlined_call_operand.vmem [shape: f32[32,8], index: 3, kind: output, shape index: {}]
  %s4 = sld [smem:[#allocation0]]
  $region22: #{vqvae_forward.28} parent=0
    _
  %s6 = ssub.s32 1, %s4
  %s7 = scalar_select 0, %s6, %s4
  // Predicated region
  $region2: #{vqvae_forward.28} parent=0 // pred_check
    _
  $region3: #{vqvae_forward.28} parent=0 // pred_check_branch
    %9 = sbr.rel (0) target = $region5
  $region4: #{vqvae_forward.28} parent=0 // pred_region
    _
  $region5: #{vqvae_forward.28} parent=0 // pred_fallthru
    _
  // Predicated region
  $region6: #{vqvae_forward.28} parent=0 // pred_check
    _
  $region7: #{vqvae_forward.28} parent=0 // pred_check_branch
    %11 = sbr.rel (0) target = $region9
  $region8: #{vqvae_forward.28} parent=0 // pred_region
    _
  $region9: #{vqvae_forward.28} parent=0 // pred_fallthru
    _
  // Predicated region
  $region10: #{vqvae_forward.28} parent=0 // pred_check
    _
  $region11: #{vqvae_forward.28} parent=0 // pred_check_branch
    %13 = sbr.rel (0) target = $region13
  $region12: #{vqvae_forward.28} parent=0 // pred_region
    _
  $region13: #{vqvae_forward.28} parent=0 // pred_fallthru
    _
  %v15 = vld [vmem:[%s0] sm:$0xf]
  %v16 = vld [vmem:[%s0 + $0x4] sm:$0xf]
  %v17 = vld [vmem:[%s0 + $0x8] sm:$0xf]
  %v18 = vld [vmem:[%s0 + $0xc] sm:$0xf]
  %v19 = vld [vmem:[%s1] sm:$0xff]
  %v20 = vpack.c.bf16 %v19, %v19
  %v25 = vunpack.c.l.b16 %v15
  %v26 = vunpack.c.l.b16 %v16
  %v27 = vunpack.c.l.b16 %v17
  %v28 = vunpack.c.l.b16 %v18
  %v29 = vpack.c.b16 %v26, %v25
  %v30 = vpack.c.b16 %v28, %v27
  %vm33 = vcmask 261120
  %v35 = vsel %vm33, %v20, 0
  %37 = vmatprep.subr.bf16.mxu0 0
  %38 = vmatpush1.bf16.msra.mxu0 0
  %39 = vmatprep.subr.bf16.mxu0 0
  %40 = vmatpush1.bf16.msra.mxu0 0
  %41 = vmatprep.subr.bf16.mxu0 0
  %42 = vmatpush1.bf16.msra.mxu0 0
  %43 = vmatprep.subr.bf16.mxu0 0
  %44 = vmatpush1.bf16.msra.mxu0 0
  %45 = vmatprep.subr.bf16.mxu0 0
  %46 = vmatpush1.bf16.msra.mxu0 0
  %47 = vmatprep.subr.bf16.mxu0 0
  %48 = vmatpush1.bf16.msra.mxu0 0
  %49 = vmatprep.subr.bf16.mxu0 0
  %50 = vmatpush1.bf16.msra.mxu0 %v30
  %51 = vmatprep.subr.bf16.mxu0 0
  %52 = vmatpush1.bf16.msra.mxu0 %v29
  %53 = vmatprep.subr.bf16.mxu0 0
  %54 = vmatpush2.bf16.msra.mxu0 0
  %55 = vmatprep.subr.bf16.mxu0 0
  %56 = vmatpush2.bf16.msra.mxu0 0
  %57 = vmatprep.subr.bf16.mxu0 0
  %58 = vmatpush2.bf16.msra.mxu0 0
  %59 = vmatprep.subr.bf16.mxu0 0
  %60 = vmatpush2.bf16.msra.mxu0 0
  %61 = vmatprep.subr.bf16.mxu0 0
  %62 = vmatpush2.bf16.msra.mxu0 0
  %63 = vmatprep.subr.bf16.mxu0 0
  %64 = vmatpush2.bf16.msra.mxu0 0
  %65 = vmatprep.subr.bf16.mxu0 0
  %66 = vmatpush2.bf16.msra.mxu0 0
  %67 = vmatprep.subr.bf16.mxu0 0
  %68 = vmatpush2.bf16.msra.mxu0 0
  %69 = vmatprep.mubr.bf16.mxu0 0
  %70 = vmatmul.mubr.bf16.gmra.mxu0 %v35
  %v71 = vpop.f32.mrf.mxu0
  %v72 = vadd.f32 0.0, %v71
  %v73 = vpop.f32.mrf.mxu0
  %v74 = vpop.f32.mrf.mxu0
  %v75 = vpop.f32.mrf.mxu0
  %76 = vdwg.mxu0
  %v77 = vunpack.c.l.bf16 %v15
  %v78 = vunpack.c.l.bf16 %v16
  %v79 = vunpack.c.l.bf16 %v17
  %v80 = vunpack.c.l.bf16 %v18
  %v81 = vmul.f32 %v77, %v77
  %v82 = vmul.f32 %v78, %v78
  %v83 = vmul.f32 %v79, %v79
  %v84 = vmul.f32 %v80, %v80
  %vm85 = vcmask 64512
  %v86 = vsel %vm85, %v81, 0.0
  %v87 = vsel %vm85, %v82, 0.0
  %v88 = vadd.f32 %v86, %v87
  %v89 = vsel %vm85, %v83, 0.0
  %v90 = vadd.f32 %v88, %v89
  %v91 = vsel %vm85, %v84, 0.0
  %v92 = vadd.f32 %v90, %v91
  %v93 = vrot.slane %v92, 4
  %v94 = vadd.f32 %v92, %v93
  %v95 = vrot.slane %v94, 2
  %v96 = vadd.f32 %v94, %v95
  %v97 = vrot.slane %v96, 1
  %v98 = vadd.f32 %v96, %v97
  %v99 = vmul.f32 %v19, %v19
  %v100 = vsel %vm33, %v99, 0.0
  %101 = vadd.xlane.f32.xlu0 %v100
  %v102 = vpop.xlane.xlu0 %101
  %v103 = vmul.f32 %v72, 2.0
  %v104 = vsub.f32 %v98, %v103
  %v105 = vadd.f32 %v104, %v102
  %v106 = vsel %vm85, %v105, inf
  %v107 = vrot.slane %v106, 4
  %v108 = vmin.f32 %v106, %v107
  %v109 = vrot.slane %v108, 2
  %v110 = vmin.f32 %v108, %v109
  %v111 = vrot.slane %v110, 1
  %v112 = vmin.f32 %v110, %v111
  %v113 = vlaneseq
  %v114 = vshrl.u32 %v113, 7
  %vm115 = vcmp.le.f32.partialorder %v105, %v112
  %v116 = vsel %vm115, %v114, 8
  %v117 = vsel %vm85, %v116, 2147483647
  %v118 = vrot.slane %v117, 4
  %vm119 = vcmp.lt.s32.totalorder %v117, %v118
  %v120 = vsel %vm119, %v117, %v118
  %v121 = vrot.slane %v120, 2
  %vm122 = vcmp.lt.s32.totalorder %v120, %v121
  %v123 = vsel %vm122, %v120, %v121
  %v124 = vrot.slane %v123, 1
  %vm125 = vcmp.lt.s32.totalorder %v123, %v124
  %v126 = vsel %vm125, %v123, %v124
  %vm127 = vcmp.eq.s32.totalorder %v114, %v126
  %v128 = vsel %vm127, 1, 0
  %v129 = vcvt.s32.f32 %v128
  %v130 = vld [vmem:[%s2] sm:$0xff]
  %v131 = vld [vmem:[%s2 + $0x8] sm:$0xff]
  %v132 = vld [vmem:[%s2 + $0x10] sm:$0xff]
  %v133 = vld [vmem:[%s2 + $0x18] sm:$0xff]
  %v135 = vsel %vm85, %v130, 0
  %v138 = vsel %vm85, %v131, 0
  %v141 = vsel %vm85, %v132, 0
  %v144 = vsel %vm85, %v133, 0
  %146 = vmatprep.subr.mxu0 0.0
  %147 = vmatpush1.msra.mxu0 0.0
  %148 = vmatprep.subr.mxu0 0.0
  %149 = vmatpush1.msra.mxu0 0.0
  %150 = vmatprep.subr.mxu0 0.0
  %151 = vmatpush1.msra.mxu0 0.0
  %152 = vmatprep.subr.mxu0 0.0
  %153 = vmatpush1.msra.mxu0 0.0
  %154 = vmatprep.subr.mxu0 0.0
  %155 = vmatpush1.msra.mxu0 0.0
  %156 = vmatprep.subr.mxu0 0.0
  %157 = vmatpush1.msra.mxu0 0.0
  %158 = vmatprep.subr.mxu0 0.0
  %159 = vmatpush1.msra.mxu0 0.0
  %160 = vmatprep.subr.mxu0 0.0
  %161 = vmatpush1.msra.mxu0 0.0
  %162 = vmatprep.subr.mxu0 0.0
  %163 = vmatpush1.msra.mxu0 0.0
  %164 = vmatprep.subr.mxu0 0.0
  %165 = vmatpush1.msra.mxu0 0.0
  %166 = vmatprep.subr.mxu0 0.0
  %167 = vmatpush1.msra.mxu0 0.0
  %168 = vmatprep.subr.mxu0 0.0
  %169 = vmatpush1.msra.mxu0 0.0
  %170 = vmatprep.subr.mxu0 0.0
  %171 = vmatpush1.msra.mxu0 0.0
  %172 = vmatprep.subr.mxu0 0.0
  %173 = vmatpush1.msra.mxu0 0.0
  %174 = vmatprep.subr.mxu0 0.0
  %175 = vmatpush1.msra.mxu0 0.0
  %176 = vmatprep.subr.mxu0 0.0
  %177 = vmatpush1.msra.mxu0 %v129
  %178 = vmatprep.subr.mxu0 0.0
  %179 = vmatpush2.msra.mxu0 0.0
  %180 = vmatprep.subr.mxu0 0.0
  %181 = vmatpush2.msra.mxu0 0.0
  %182 = vmatprep.subr.mxu0 0.0
  %183 = vmatpush2.msra.mxu0 0.0
  %184 = vmatprep.subr.mxu0 0.0
  %185 = vmatpush2.msra.mxu0 0.0
  %186 = vmatprep.subr.mxu0 0.0
  %187 = vmatpush2.msra.mxu0 0.0
  %188 = vmatprep.subr.mxu0 0.0
  %189 = vmatpush2.msra.mxu0 0.0
  %190 = vmatprep.subr.mxu0 0.0
  %191 = vmatpush2.msra.mxu0 0.0
  %192 = vmatprep.subr.mxu0 0.0
  %193 = vmatpush2.msra.mxu0 0.0
  %194 = vmatprep.subr.mxu0 0.0
  %195 = vmatpush2.msra.mxu0 0.0
  %196 = vmatprep.subr.mxu0 0.0
  %197 = vmatpush2.msra.mxu0 0.0
  %198 = vmatprep.subr.mxu0 0.0
  %199 = vmatpush2.msra.mxu0 0.0
  %200 = vmatprep.subr.mxu0 0.0
  %201 = vmatpush2.msra.mxu0 0.0
  %202 = vmatprep.subr.mxu0 0.0
  %203 = vmatpush2.msra.mxu0 0.0
  %204 = vmatprep.subr.mxu0 0.0
  %205 = vmatpush2.msra.mxu0 0.0
  %206 = vmatprep.subr.mxu0 0.0
  %207 = vmatpush2.msra.mxu0 0.0
  %208 = vmatprep.subr.mxu0 0.0
  %209 = vmatpush2.msra.mxu0 0.0
  %210 = vmatprep.mubr.f32.mxu0 0.0
  %211 = vmatmul.mubr.f32.gmra.mxu0 %v135
  %v212 = vpop.f32.mrf.mxu0
  %v213 = vadd.f32 0.0, %v212
  %v214 = vpop.f32.mrf.mxu0
  %215 = vmatprep.mubr.f32.mxu0 0.0
  %216 = vmatmul.mubr.f32.gmra.mxu0 %v138
  %v217 = vpop.f32.mrf.mxu0
  %v218 = vadd.f32 0.0, %v217
  %v219 = vpop.f32.mrf.mxu0
  %220 = vmatprep.mubr.f32.mxu0 0.0
  %221 = vmatmul.mubr.f32.gmra.mxu0 %v141
  %v222 = vpop.f32.mrf.mxu0
  %v223 = vadd.f32 0.0, %v222
  %v224 = vpop.f32.mrf.mxu0
  %225 = vmatprep.mubr.f32.mxu0 0.0
  %226 = vmatmul.mubr.f32.gmra.mxu0 %v144
  %v227 = vpop.f32.mrf.mxu0
  %v228 = vadd.f32 0.0, %v227
  %v229 = vpop.f32.mrf.mxu0
  %230 = vdwg.mxu0
  %231 = vst.msk [vmem:[%s3] sm:$0xff] %vm85, %v213
  %232 = vst.msk [vmem:[%s3 + $0x8] sm:$0xff] %vm85, %v218
  %233 = vst.msk [vmem:[%s3 + $0x10] sm:$0xff] %vm85, %v223
  %234 = vst.msk [vmem:[%s3 + $0x18] sm:$0xff] %vm85, %v228
  // Predicated region
  $region14: #{vqvae_forward.28} parent=0 // pred_check
    _
  $region15: #{vqvae_forward.28} parent=0 // pred_check_branch
    %236 = sbr.rel (0) target = $region17
  $region16: #{vqvae_forward.28} parent=0 // pred_region
    _
  $region17: #{vqvae_forward.28} parent=0 // pred_fallthru
    _
  // Predicated region
  $region18: #{vqvae_forward.28} parent=0 // pred_check
    _
  $region19: #{vqvae_forward.28} parent=0 // pred_check_branch
    %238 = sbr.rel (0) target = $region21
  $region20: #{vqvae_forward.28} parent=0 // pred_region
    _
  $region21: #{vqvae_forward.28} parent=0 // pred_fallthru
    _

// kernel: tile.23
$region0: #{tile.23}
  #allocation0 [shape = 's32[1]{0}', space=sflag, size = 0x4, scoped, tag = 'scoped memory for tile.23']
  %s0 = inlined_call_operand.vmem [shape: f32[32], index: 0, kind: input, shape index: {}]
  %s1 = inlined_call_operand.vmem [shape: f32[4,32], index: 1, kind: output, shape index: {}]
  // Predicated region
  $region2: #{tile.23} parent=0 // pred_check
    _
  $region3: #{tile.23} parent=0 // pred_check_branch
    %3 = sbr.rel (0) target = $region5
  $region4: #{tile.23} parent=0 // pred_region
    _
  $region5: #{tile.23} parent=0 // pred_fallthru
    _
  %v4 = vld [vmem:[%s0] ss:$0 sm:$0xff]
  %5 = vst [vmem:[%s1] sm:$0xf] %v4

// kernel: tile.0
$region0: #{tile.0}
  %s0 = inlined_call_operand.vmem [shape: f32[4,32], index: 0, kind: input, shape index: {}]
  %s1 = inlined_call_operand.vmem [shape: f32[128,1], index: 1, kind: output, shape index: {}]
  $region1: #{tile.0} parent=0
    #allocation0 [shape = 'u8[4096]{0}', space=vmem, size = 0x1000, scoped, tag = 'scoped mem for input reshape']
    %s3 = sshll.u32 1, 4
    %s4 = ssub.s32 %s3, 1
    %v5 = vld [vmem:[%s0] sm:%s4]
    %6 = vst [vmem:[#allocation0] sm:%s4] %v5
    %v7 = vld [vmem:[#allocation0] sm:$0xf]
    %vm8 = vcmask 7168
    %9 = vst.msk [vmem:[%s1] sm:$0x1] %vm8, %v7
    %s10 = scalar_lea.vmem %s1, 31
    %11 = vst.msk [vmem:[%s10] sm:$0x2] %vm8, %v7
    %s12 = scalar_lea.vmem %s1, 62
    %13 = vst.msk [vmem:[%s12] sm:$0x4] %vm8, %v7
    %s14 = scalar_lea.vmem %s1, 93
    %15 = vst.msk [vmem:[%s14] sm:$0x8] %vm8, %v7
    %v16 = vld [vmem:[#allocation0] sm:$0xf]
    %17 = vrot.lane.b32.xlu0 %v16, 127
    %v18 = vpop.permute.xlu0 %17
    %vm19 = vcmask 7168
    %s20 = scalar_lea.vmem %s1, 1
    %21 = vst.msk [vmem:[%s20] sm:$0x1] %vm19, %v18
    %s22 = scalar_lea.vmem %s1, 32
    %23 = vst.msk [vmem:[%s22] sm:$0x2] %vm19, %v18
    %s24 = scalar_lea.vmem %s1, 63
    %25 = vst.msk [vmem:[%s24] sm:$0x4] %vm19, %v18
    %s26 = scalar_lea.vmem %s1, 94
    %27 = vst.msk [vmem:[%s26] sm:$0x8] %vm19, %v18
    %v28 = vld [vmem:[#allocation0] sm:$0xf]
    %29 = vrot.lane.b32.xlu0 %v28, 126
    %v30 = vpop.permute.xlu0 %29
    %vm31 = vcmask 7168
    %s32 = scalar_lea.vmem %s1, 2
    %33 = vst.msk [vmem:[%s32] sm:$0x1] %vm31, %v30
    %s34 = scalar_lea.vmem %s1, 33
    %35 = vst.msk [vmem:[%s34] sm:$0x2] %vm31, %v30
    %s36 = scalar_lea.vmem %s1, 64
    %37 = vst.msk [vmem:[%s36] sm:$0x4] %vm31, %v30
    %s38 = scalar_lea.vmem %s1, 95
    %39 = vst.msk [vmem:[%s38] sm:$0x8] %vm31, %v30
    %v40 = vld [vmem:[#allocation0] sm:$0xf]
    %41 = vrot.lane.b32.xlu0 %v40, 125
    %v42 = vpop.permute.xlu0 %41
    %vm43 = vcmask 7168
    %s44 = scalar_lea.vmem %s1, 3
    %45 = vst.msk [vmem:[%s44] sm:$0x1] %vm43, %v42
    %s46 = scalar_lea.vmem %s1, 34
    %47 = vst.msk [vmem:[%s46] sm:$0x2] %vm43, %v42
    %s48 = scalar_lea.vmem %s1, 65
    %49 = vst.msk [vmem:[%s48] sm:$0x4] %vm43, %v42
    %s50 = scalar_lea.vmem %s1, 96
    %51 = vst.msk [vmem:[%s50] sm:$0x8] %vm43, %v42
    %v52 = vld [vmem:[#allocation0] sm:$0xf]
    %53 = vrot.lane.b32.xlu0 %v52, 124
    %v54 = vpop.permute.xlu0 %53
    %vm55 = vcmask 7168
    %s56 = scalar_lea.vmem %s1, 4
    %57 = vst.msk [vmem:[%s56] sm:$0x1] %vm55, %v54
    %s58 = scalar_lea.vmem %s1, 35
    %59 = vst.msk [vmem:[%s58] sm:$0x2] %vm55, %v54
    %s60 = scalar_lea.vmem %s1, 66
    %61 = vst.msk [vmem:[%s60] sm:$0x4] %vm55, %v54
    %s62 = scalar_lea.vmem %s1, 97
    %63 = vst.msk [vmem:[%s62] sm:$0x8] %vm55, %v54
    %v64 = vld [vmem:[#allocation0] sm:$0xf]
    %65 = vrot.lane.b32.xlu0 %v64, 123
    %v66 = vpop.permute.xlu0 %65
    %vm67 = vcmask 7168
    %s68 = scalar_lea.vmem %s1, 5
    %69 = vst.msk [vmem:[%s68] sm:$0x1] %vm67, %v66
    %s70 = scalar_lea.vmem %s1, 36
    %71 = vst.msk [vmem:[%s70] sm:$0x2] %vm67, %v66
    %s72 = scalar_lea.vmem %s1, 67
    %73 = vst.msk [vmem:[%s72] sm:$0x4] %vm67, %v66
    %s74 = scalar_lea.vmem %s1, 98
    %75 = vst.msk [vmem:[%s74] sm:$0x8] %vm67, %v66
    %v76 = vld [vmem:[#allocation0] sm:$0xf]
    %77 = vrot.lane.b32.xlu0 %v76, 122
    %v78 = vpop.permute.xlu0 %77
    %vm79 = vcmask 7168
    %s80 = scalar_lea.vmem %s1, 6
    %81 = vst.msk [vmem:[%s80] sm:$0x1] %vm79, %v78
    %s82 = scalar_lea.vmem %s1, 37
    %83 = vst.msk [vmem:[%s82] sm:$0x2] %vm79, %v78
    %s84 = scalar_lea.vmem %s1, 68
    %85 = vst.msk [vmem:[%s84] sm:$0x4] %vm79, %v78
    %s86 = scalar_lea.vmem %s1, 99
    %87 = vst.msk [vmem:[%s86] sm:$0x8] %vm79, %v78
    %v88 = vld [vmem:[#allocation0] sm:$0xf]
    %89 = vrot.lane.b32.xlu0 %v88, 121
    %v90 = vpop.permute.xlu0 %89
    %vm91 = vcmask 7168
    %s92 = scalar_lea.vmem %s1, 7
    %93 = vst.msk [vmem:[%s92] sm:$0x1] %vm91, %v90
    %s94 = scalar_lea.vmem %s1, 38
    %95 = vst.msk [vmem:[%s94] sm:$0x2] %vm91, %v90
    %s96 = scalar_lea.vmem %s1, 69
    %97 = vst.msk [vmem:[%s96] sm:$0x4] %vm91, %v90
    %s98 = scalar_lea.vmem %s1, 100
    %99 = vst.msk [vmem:[%s98] sm:$0x8] %vm91, %v90
    %v100 = vld [vmem:[#allocation0] sm:$0xf]
    %101 = vrot.lane.b32.xlu0 %v100, 120
    %v102 = vpop.permute.xlu0 %101
    %vm103 = vcmask 7168
    %s104 = scalar_lea.vmem %s1, 8
    %105 = vst.msk [vmem:[%s104] sm:$0x1] %vm103, %v102
    %s106 = scalar_lea.vmem %s1, 39
    %107 = vst.msk [vmem:[%s106] sm:$0x2] %vm103, %v102
    %s108 = scalar_lea.vmem %s1, 70
    %109 = vst.msk [vmem:[%s108] sm:$0x4] %vm103, %v102
    %s110 = scalar_lea.vmem %s1, 101
    %111 = vst.msk [vmem:[%s110] sm:$0x8] %vm103, %v102
    %v112 = vld [vmem:[#allocation0] sm:$0xf]
    %113 = vrot.lane.b32.xlu0 %v112, 119
    %v114 = vpop.permute.xlu0 %113
    %vm115 = vcmask 7168
    %s116 = scalar_lea.vmem %s1, 9
    %117 = vst.msk [vmem:[%s116] sm:$0x1] %vm115, %v114
    %s118 = scalar_lea.vmem %s1, 40
    %119 = vst.msk [vmem:[%s118] sm:$0x2] %vm115, %v114
    %s120 = scalar_lea.vmem %s1, 71
    %121 = vst.msk [vmem:[%s120] sm:$0x4] %vm115, %v114
    %s122 = scalar_lea.vmem %s1, 102
    %123 = vst.msk [vmem:[%s122] sm:$0x8] %vm115, %v114
    %v124 = vld [vmem:[#allocation0] sm:$0xf]
    %125 = vrot.lane.b32.xlu0 %v124, 118
    %v126 = vpop.permute.xlu0 %125
    %vm127 = vcmask 7168
    %s128 = scalar_lea.vmem %s1, 10
    %129 = vst.msk [vmem:[%s128] sm:$0x1] %vm127, %v126
    %s130 = scalar_lea.vmem %s1, 41
    %131 = vst.msk [vmem:[%s130] sm:$0x2] %vm127, %v126
    %s132 = scalar_lea.vmem %s1, 72
    %133 = vst.msk [vmem:[%s132] sm:$0x4] %vm127, %v126
    %s134 = scalar_lea.vmem %s1, 103
    %135 = vst.msk [vmem:[%s134] sm:$0x8] %vm127, %v126
    %v136 = vld [vmem:[#allocation0] sm:$0xf]
    %137 = vrot.lane.b32.xlu0 %v136, 117
    %v138 = vpop.permute.xlu0 %137
    %vm139 = vcmask 7168
    %s140 = scalar_lea.vmem %s1, 11
    %141 = vst.msk [vmem:[%s140] sm:$0x1] %vm139, %v138
    %s142 = scalar_lea.vmem %s1, 42
    %143 = vst.msk [vmem:[%s142] sm:$0x2] %vm139, %v138
    %s144 = scalar_lea.vmem %s1, 73
    %145 = vst.msk [vmem:[%s144] sm:$0x4] %vm139, %v138
    %s146 = scalar_lea.vmem %s1, 104
    %147 = vst.msk [vmem:[%s146] sm:$0x8] %vm139, %v138
    %v148 = vld [vmem:[#allocation0] sm:$0xf]
    %149 = vrot.lane.b32.xlu0 %v148, 116
    %v150 = vpop.permute.xlu0 %149
    %vm151 = vcmask 7168
    %s152 = scalar_lea.vmem %s1, 12
    %153 = vst.msk [vmem:[%s152] sm:$0x1] %vm151, %v150
    %s154 = scalar_lea.vmem %s1, 43
    %155 = vst.msk [vmem:[%s154] sm:$0x2] %vm151, %v150
    %s156 = scalar_lea.vmem %s1, 74
    %157 = vst.msk [vmem:[%s156] sm:$0x4] %vm151, %v150
    %s158 = scalar_lea.vmem %s1, 105
    %159 = vst.msk [vmem:[%s158] sm:$0x8] %vm151, %v150
    %v160 = vld [vmem:[#allocation0] sm:$0xf]
    %161 = vrot.lane.b32.xlu0 %v160, 115
    %v162 = vpop.permute.xlu0 %161
    %vm163 = vcmask 7168
    %s164 = scalar_lea.vmem %s1, 13
    %165 = vst.msk [vmem:[%s164] sm:$0x1] %vm163, %v162
    %s166 = scalar_lea.vmem %s1, 44
    %167 = vst.msk [vmem:[%s166] sm:$0x2] %vm163, %v162
    %s168 = scalar_lea.vmem %s1, 75
    %169 = vst.msk [vmem:[%s168] sm:$0x4] %vm163, %v162
    %s170 = scalar_lea.vmem %s1, 106
    %171 = vst.msk [vmem:[%s170] sm:$0x8] %vm163, %v162
    %v172 = vld [vmem:[#allocation0] sm:$0xf]
    %173 = vrot.lane.b32.xlu0 %v172, 114
    %v174 = vpop.permute.xlu0 %173
    %vm175 = vcmask 7168
    %s176 = scalar_lea.vmem %s1, 14
    %177 = vst.msk [vmem:[%s176] sm:$0x1] %vm175, %v174
    %s178 = scalar_lea.vmem %s1, 45
    %179 = vst.msk [vmem:[%s178] sm:$0x2] %vm175, %v174
    %s180 = scalar_lea.vmem %s1, 76
    %181 = vst.msk [vmem:[%s180] sm:$0x4] %vm175, %v174
    %s182 = scalar_lea.vmem %s1, 107
    %183 = vst.msk [vmem:[%s182] sm:$0x8] %vm175, %v174
    %v184 = vld [vmem:[#allocation0] sm:$0xf]
    %185 = vrot.lane.b32.xlu0 %v184, 113
    %v186 = vpop.permute.xlu0 %185
    %vm187 = vcmask 7168
    %s188 = scalar_lea.vmem %s1, 15
    %189 = vst.msk [vmem:[%s188] sm:$0x1] %vm187, %v186
    %s190 = scalar_lea.vmem %s1, 46
    %191 = vst.msk [vmem:[%s190] sm:$0x2] %vm187, %v186
    %s192 = scalar_lea.vmem %s1, 77
    %193 = vst.msk [vmem:[%s192] sm:$0x4] %vm187, %v186
    %s194 = scalar_lea.vmem %s1, 108
    %195 = vst.msk [vmem:[%s194] sm:$0x8] %vm187, %v186
    %v196 = vld [vmem:[#allocation0] sm:$0xf]
    %197 = vrot.lane.b32.xlu0 %v196, 112
    %v198 = vpop.permute.xlu0 %197
    %vm199 = vcmask 7168
    %s200 = scalar_lea.vmem %s1, 16
    %201 = vst.msk [vmem:[%s200] sm:$0x1] %vm199, %v198
    %s202 = scalar_lea.vmem %s1, 47
    %203 = vst.msk [vmem:[%s202] sm:$0x2] %vm199, %v198
    %s204 = scalar_lea.vmem %s1, 78
    %205 = vst.msk [vmem:[%s204] sm:$0x4] %vm199, %v198
    %s206 = scalar_lea.vmem %s1, 109
    %207 = vst.msk [vmem:[%s206] sm:$0x8] %vm199, %v198
    %v208 = vld [vmem:[#allocation0] sm:$0xf]
    %209 = vrot.lane.b32.xlu0 %v208, 111
    %v210 = vpop.permute.xlu0 %209
    %vm211 = vcmask 7168
    %s212 = scalar_lea.vmem %s1, 17
    %213 = vst.msk [vmem:[%s212] sm:$0x1] %vm211, %v210
    %s214 = scalar_lea.vmem %s1, 48
    %215 = vst.msk [vmem:[%s214] sm:$0x2] %vm211, %v210
    %s216 = scalar_lea.vmem %s1, 79
    %217 = vst.msk [vmem:[%s216] sm:$0x4] %vm211, %v210
    %s218 = scalar_lea.vmem %s1, 110
    %219 = vst.msk [vmem:[%s218] sm:$0x8] %vm211, %v210
    %v220 = vld [vmem:[#allocation0] sm:$0xf]
    %221 = vrot.lane.b32.xlu0 %v220, 110
    %v222 = vpop.permute.xlu0 %221
    %vm223 = vcmask 7168
    %s224 = scalar_lea.vmem %s1, 18
    %225 = vst.msk [vmem:[%s224] sm:$0x1] %vm223, %v222
    %s226 = scalar_lea.vmem %s1, 49
    %227 = vst.msk [vmem:[%s226] sm:$0x2] %vm223, %v222
    %s228 = scalar_lea.vmem %s1, 80
    %229 = vst.msk [vmem:[%s228] sm:$0x4] %vm223, %v222
    %s230 = scalar_lea.vmem %s1, 111
    %231 = vst.msk [vmem:[%s230] sm:$0x8] %vm223, %v222
    %v232 = vld [vmem:[#allocation0] sm:$0xf]
    %233 = vrot.lane.b32.xlu0 %v232, 109
    %v234 = vpop.permute.xlu0 %233
    %vm235 = vcmask 7168
    %s236 = scalar_lea.vmem %s1, 19
    %237 = vst.msk [vmem:[%s236] sm:$0x1] %vm235, %v234
    %s238 = scalar_lea.vmem %s1, 50
    %239 = vst.msk [vmem:[%s238] sm:$0x2] %vm235, %v234
    %s240 = scalar_lea.vmem %s1, 81
    %241 = vst.msk [vmem:[%s240] sm:$0x4] %vm235, %v234
    %s242 = scalar_lea.vmem %s1, 112
    %243 = vst.msk [vmem:[%s242] sm:$0x8] %vm235, %v234
    %v244 = vld [vmem:[#allocation0] sm:$0xf]
    %245 = vrot.lane.b32.xlu0 %v244, 108
    %v246 = vpop.permute.xlu0 %245
    %vm247 = vcmask 7168
    %s248 = scalar_lea.vmem %s1, 20
    %249 = vst.msk [vmem:[%s248] sm:$0x1] %vm247, %v246
    %s250 = scalar_lea.vmem %s1, 51
    %251 = vst.msk [vmem:[%s250] sm:$0x2] %vm247, %v246
    %s252 = scalar_lea.vmem %s1, 82
    %253 = vst.msk [vmem:[%s252] sm:$0x4] %vm247, %v246
    %s254 = scalar_lea.vmem %s1, 113
    %255 = vst.msk [vmem:[%s254] sm:$0x8] %vm247, %v246
    %v256 = vld [vmem:[#allocation0] sm:$0xf]
    %257 = vrot.lane.b32.xlu0 %v256, 107
    %v258 = vpop.permute.xlu0 %257
    %vm259 = vcmask 7168
    %s260 = scalar_lea.vmem %s1, 21
    %261 = vst.msk [vmem:[%s260] sm:$0x1] %vm259, %v258
    %s262 = scalar_lea.vmem %s1, 52
    %263 = vst.msk [vmem:[%s262] sm:$0x2] %vm259, %v258
    %s264 = scalar_lea.vmem %s1, 83
    %265 = vst.msk [vmem:[%s264] sm:$0x4] %vm259, %v258
    %s266 = scalar_lea.vmem %s1, 114
    %267 = vst.msk [vmem:[%s266] sm:$0x8] %vm259, %v258
    %v268 = vld [vmem:[#allocation0] sm:$0xf]
    %269 = vrot.lane.b32.xlu0 %v268, 106
    %v270 = vpop.permute.xlu0 %269
    %vm271 = vcmask 7168
    %s272 = scalar_lea.vmem %s1, 22
    %273 = vst.msk [vmem:[%s272] sm:$0x1] %vm271, %v270
    %s274 = scalar_lea.vmem %s1, 53
    %275 = vst.msk [vmem:[%s274] sm:$0x2] %vm271, %v270
    %s276 = scalar_lea.vmem %s1, 84
    %277 = vst.msk [vmem:[%s276] sm:$0x4] %vm271, %v270
    %s278 = scalar_lea.vmem %s1, 115
    %279 = vst.msk [vmem:[%s278] sm:$0x8] %vm271, %v270
    %v280 = vld [vmem:[#allocation0] sm:$0xf]
    %281 = vrot.lane.b32.xlu0 %v280, 105
    %v282 = vpop.permute.xlu0 %281
    %vm283 = vcmask 7168
    %s284 = scalar_lea.vmem %s1, 23
    %285 = vst.msk [vmem:[%s284] sm:$0x1] %vm283, %v282
    %s286 = scalar_lea.vmem %s1, 54
    %287 = vst.msk [vmem:[%s286] sm:$0x2] %vm283, %v282
    %s288 = scalar_lea.vmem %s1, 85
    %289 = vst.msk [vmem:[%s288] sm:$0x4] %vm283, %v282
    %s290 = scalar_lea.vmem %s1, 116
    %291 = vst.msk [vmem:[%s290] sm:$0x8] %vm283, %v282
    %v292 = vld [vmem:[#allocation0] sm:$0xf]
    %293 = vrot.lane.b32.xlu0 %v292, 104
    %v294 = vpop.permute.xlu0 %293
    %vm295 = vcmask 7168
    %s296 = scalar_lea.vmem %s1, 24
    %297 = vst.msk [vmem:[%s296] sm:$0x1] %vm295, %v294
    %s298 = scalar_lea.vmem %s1, 55
    %299 = vst.msk [vmem:[%s298] sm:$0x2] %vm295, %v294
    %s300 = scalar_lea.vmem %s1, 86
    %301 = vst.msk [vmem:[%s300] sm:$0x4] %vm295, %v294
    %s302 = scalar_lea.vmem %s1, 117
    %303 = vst.msk [vmem:[%s302] sm:$0x8] %vm295, %v294
    %v304 = vld [vmem:[#allocation0] sm:$0xf]
    %305 = vrot.lane.b32.xlu0 %v304, 103
    %v306 = vpop.permute.xlu0 %305
    %vm307 = vcmask 7168
    %s308 = scalar_lea.vmem %s1, 25
    %309 = vst.msk [vmem:[%s308] sm:$0x1] %vm307, %v306
    %s310 = scalar_lea.vmem %s1, 56
    %311 = vst.msk [vmem:[%s310] sm:$0x2] %vm307, %v306
    %s312 = scalar_lea.vmem %s1, 87
    %313 = vst.msk [vmem:[%s312] sm:$0x4] %vm307, %v306
    %s314 = scalar_lea.vmem %s1, 118
    %315 = vst.msk [vmem:[%s314] sm:$0x8] %vm307, %v306
    %v316 = vld [vmem:[#allocation0] sm:$0xf]
    %317 = vrot.lane.b32.xlu0 %v316, 102
    %v318 = vpop.permute.xlu0 %317
    %vm319 = vcmask 7168
    %s320 = scalar_lea.vmem %s1, 26
    %321 = vst.msk [vmem:[%s320] sm:$0x1] %vm319, %v318
    %s322 = scalar_lea.vmem %s1, 57
    %323 = vst.msk [vmem:[%s322] sm:$0x2] %vm319, %v318
    %s324 = scalar_lea.vmem %s1, 88
    %325 = vst.msk [vmem:[%s324] sm:$0x4] %vm319, %v318
    %s326 = scalar_lea.vmem %s1, 119
    %327 = vst.msk [vmem:[%s326] sm:$0x8] %vm319, %v318
    %v328 = vld [vmem:[#allocation0] sm:$0xf]
    %329 = vrot.lane.b32.xlu0 %v328, 101
    %v330 = vpop.permute.xlu0 %329
    %vm331 = vcmask 7168
    %s332 = scalar_lea.vmem %s1, 27
    %333 = vst.msk [vmem:[%s332] sm:$0x1] %vm331, %v330
    %s334 = scalar_lea.vmem %s1, 58
    %335 = vst.msk [vmem:[%s334] sm:$0x2] %vm331, %v330
    %s336 = scalar_lea.vmem %s1, 89
    %337 = vst.msk [vmem:[%s336] sm:$0x4] %vm331, %v330
    %s338 = scalar_lea.vmem %s1, 120
    %339 = vst.msk [vmem:[%s338] sm:$0x8] %vm331, %v330
    %v340 = vld [vmem:[#allocation0] sm:$0xf]
    %341 = vrot.lane.b32.xlu0 %v340, 100
    %v342 = vpop.permute.xlu0 %341
    %vm343 = vcmask 7168
    %s344 = scalar_lea.vmem %s1, 28
    %345 = vst.msk [vmem:[%s344] sm:$0x1] %vm343, %v342
    %s346 = scalar_lea.vmem %s1, 59
    %347 = vst.msk [vmem:[%s346] sm:$0x2] %vm343, %v342
    %s348 = scalar_lea.vmem %s1, 90
    %349 = vst.msk [vmem:[%s348] sm:$0x4] %vm343, %v342
    %s350 = scalar_lea.vmem %s1, 121
    %351 = vst.msk [vmem:[%s350] sm:$0x8] %vm343, %v342
    %v352 = vld [vmem:[#allocation0] sm:$0xf]
    %353 = vrot.lane.b32.xlu0 %v352, 99
    %v354 = vpop.permute.xlu0 %353
    %vm355 = vcmask 7168
    %s356 = scalar_lea.vmem %s1, 29
    %357 = vst.msk [vmem:[%s356] sm:$0x1] %vm355, %v354
    %s358 = scalar_lea.vmem %s1, 60
    %359 = vst.msk [vmem:[%s358] sm:$0x2] %vm355, %v354
    %s360 = scalar_lea.vmem %s1, 91
    %361 = vst.msk [vmem:[%s360] sm:$0x4] %vm355, %v354
    %s362 = scalar_lea.vmem %s1, 122
    %363 = vst.msk [vmem:[%s362] sm:$0x8] %vm355, %v354
    %v364 = vld [vmem:[#allocation0] sm:$0xf]
    %365 = vrot.lane.b32.xlu0 %v364, 98
    %v366 = vpop.permute.xlu0 %365
    %vm367 = vcmask 7168
    %s368 = scalar_lea.vmem %s1, 30
    %369 = vst.msk [vmem:[%s368] sm:$0x1] %vm367, %v366
    %s370 = scalar_lea.vmem %s1, 61
    %371 = vst.msk [vmem:[%s370] sm:$0x2] %vm367, %v366
    %s372 = scalar_lea.vmem %s1, 92
    %373 = vst.msk [vmem:[%s372] sm:$0x4] %vm367, %v366
    %s374 = scalar_lea.vmem %s1, 123
    %375 = vst.msk [vmem:[%s374] sm:$0x8] %vm367, %v366
    %v376 = vld [vmem:[#allocation0] sm:$0xf]
    %377 = vrot.lane.b32.xlu0 %v376, 97
    %v378 = vpop.permute.xlu0 %377
    %vm379 = vcmask 7168
    %s380 = scalar_lea.vmem %s1, 31
    %381 = vst.msk [vmem:[%s380] sm:$0x1] %vm379, %v378
    %s382 = scalar_lea.vmem %s1, 62
    %383 = vst.msk [vmem:[%s382] sm:$0x2] %vm379, %v378
    %s384 = scalar_lea.vmem %s1, 93
    %385 = vst.msk [vmem:[%s384] sm:$0x4] %vm379, %v378
    %s386 = scalar_lea.vmem %s1, 124
    %387 = vst.msk [vmem:[%s386] sm:$0x8] %vm379, %v378

// kernel: vqvae_forward.34
$region0: #{vqvae_forward.34}
  #allocation0 [shape = 'u32[]', space=smem, size = 0x4, offset = 0x4, fixed_abs, tag = 'smem constant byte address 0x4 - core index']
  #allocation1 [shape = 'u32[144,128]{1,0:T(1,128)}', space=vmem, size = 0x12000, scoped, tag = 'internal scratch']
  %s0 = inlined_call_operand.vmem [shape: bf16[128,288], index: 0, kind: input, shape index: {}]
  %s1 = inlined_call_operand.vmem [shape: bf16[288,8], index: 1, kind: input, shape index: {}]
  %s2 = inlined_call_operand.vmem [shape: f32[128,1], index: 2, kind: input, shape index: {}]
  %s3 = inlined_call_operand.vmem [shape: f32[128,8], index: 3, kind: output, shape index: {}]
  %s4 = sld [smem:[#allocation0]]
  $region22: #{vqvae_forward.34} parent=0
    _
  %s6 = ssub.s32 1, %s4
  %s7 = scalar_select 0, %s6, %s4
  // Predicated region
  $region2: #{vqvae_forward.34} parent=0 // pred_check
    _
  $region3: #{vqvae_forward.34} parent=0 // pred_check_branch
    %9 = sbr.rel (0) target = $region5
  $region4: #{vqvae_forward.34} parent=0 // pred_region
    _
  $region5: #{vqvae_forward.34} parent=0 // pred_fallthru
    _
  // Predicated region
  $region6: #{vqvae_forward.34} parent=0 // pred_check
    _
  $region7: #{vqvae_forward.34} parent=0 // pred_check_branch
    %11 = sbr.rel (0) target = $region9
  $region8: #{vqvae_forward.34} parent=0 // pred_region
    _
  $region9: #{vqvae_forward.34} parent=0 // pred_fallthru
    _
  // Predicated region
  $region10: #{vqvae_forward.34} parent=0 // pred_check
    _
  $region11: #{vqvae_forward.34} parent=0 // pred_check_branch
    %13 = sbr.rel (0) target = $region13
  $region12: #{vqvae_forward.34} parent=0 // pred_region
    _
  $region13: #{vqvae_forward.34} parent=0 // pred_fallthru
    _
  %v15 = vld [vmem:[%s1] sm:$0xf]
  %v16 = vld [vmem:[%s1 + $0x4] sm:$0xf]
  %v17 = vld [vmem:[%s1 + $0x8] sm:$0xf]
  %v18 = vld [vmem:[%s1 + $0xc] sm:$0xf]
  %v19 = vld [vmem:[%s1 + $0x10] sm:$0xf]
  %v20 = vld [vmem:[%s1 + $0x14] sm:$0xf]
  %v21 = vld [vmem:[%s1 + $0x18] sm:$0xf]
  %v22 = vld [vmem:[%s1 + $0x1c] sm:$0xf]
  %v23 = vld [vmem:[%s1 + $0x20] sm:$0xf]
  %v24 = vld [vmem:[%s1 + $0x24] sm:$0xf]
  %v25 = vld [vmem:[%s1 + $0x28] sm:$0xf]
  %v26 = vld [vmem:[%s1 + $0x2c] sm:$0xf]
  %v27 = vld [vmem:[%s1 + $0x30] sm:$0xf]
  %v28 = vld [vmem:[%s1 + $0x34] sm:$0xf]
  %v29 = vld [vmem:[%s1 + $0x38] sm:$0xf]
  %v30 = vld [vmem:[%s1 + $0x3c] sm:$0xf]
  %v31 = vld [vmem:[%s1 + $0x40] sm:$0xf]
  %v32 = vld [vmem:[%s1 + $0x44] sm:$0xf]
  %v33 = vld [vmem:[%s1 + $0x48] sm:$0xf]
  %v34 = vld [vmem:[%s1 + $0x4c] sm:$0xf]
  %v35 = vld [vmem:[%s1 + $0x50] sm:$0xf]
  %v36 = vld [vmem:[%s1 + $0x54] sm:$0xf]
  %v37 = vld [vmem:[%s1 + $0x58] sm:$0xf]
  %v38 = vld [vmem:[%s1 + $0x5c] sm:$0xf]
  %v39 = vld [vmem:[%s1 + $0x60] sm:$0xf]
  %v40 = vld [vmem:[%s1 + $0x64] sm:$0xf]
  %v41 = vld [vmem:[%s1 + $0x68] sm:$0xf]
  %v42 = vld [vmem:[%s1 + $0x6c] sm:$0xf]
  %v43 = vld [vmem:[%s1 + $0x70] sm:$0xf]
  %v44 = vld [vmem:[%s1 + $0x74] sm:$0xf]
  %v45 = vld [vmem:[%s1 + $0x78] sm:$0xf]
  %v46 = vld [vmem:[%s1 + $0x7c] sm:$0xf]
  %v47 = vld [vmem:[%s1 + $0x80] sm:$0xf]
  %v48 = vld [vmem:[%s1 + $0x84] sm:$0xf]
  %v49 = vld [vmem:[%s1 + $0x88] sm:$0xf]
  %v50 = vld [vmem:[%s1 + $0x8c] sm:$0xf]
  %v51 = vld [vmem:[%s0] sm:$0xff]
  %v52 = vld [vmem:[%s0 + $0x8] sm:$0xf]
  %v53 = vld [vmem:[%s0 + $0xc] sm:$0xff]
  %v54 = vld [vmem:[%s0 + $0x14] sm:$0xf]
  %v55 = vld [vmem:[%s0 + $0x18] sm:$0xff]
  %v56 = vld [vmem:[%s0 + $0x20] sm:$0xf]
  %v57 = vld [vmem:[%s0 + $0x24] sm:$0xff]
  %v58 = vld [vmem:[%s0 + $0x2c] sm:$0xf]
  %v59 = vld [vmem:[%s0 + $0x30] sm:$0xff]
  %v60 = vld [vmem:[%s0 + $0x38] sm:$0xf]
  %v61 = vld [vmem:[%s0 + $0x3c] sm:$0xff]
  %v62 = vld [vmem:[%s0 + $0x44] sm:$0xf]
  %v63 = vld [vmem:[%s0 + $0x48] sm:$0xff]
  %v64 = vld [vmem:[%s0 + $0x50] sm:$0xf]
  %v65 = vld [vmem:[%s0 + $0x54] sm:$0xff]
  %v66 = vld [vmem:[%s0 + $0x5c] sm:$0xf]
  %v67 = vld [vmem:[%s0 + $0x60] sm:$0xff]
  %v68 = vld [vmem:[%s0 + $0x68] sm:$0xf]
  %v69 = vld [vmem:[%s0 + $0x6c] sm:$0xff]
  %v70 = vld [vmem:[%s0 + $0x74] sm:$0xf]
  %v71 = vld [vmem:[%s0 + $0x78] sm:$0xff]
  %v72 = vld [vmem:[%s0 + $0x80] sm:$0xf]
  %v73 = vld [vmem:[%s0 + $0x84] sm:$0xff]
  %v74 = vld [vmem:[%s0 + $0x8c] sm:$0xf]
  %v75 = vld [vmem:[%s0 + $0x90] sm:$0xff]
  %v76 = vld [vmem:[%s0 + $0x98] sm:$0xf]
  %v77 = vld [vmem:[%s0 + $0x9c] sm:$0xff]
  %v78 = vld [vmem:[%s0 + $0xa4] sm:$0xf]
  %v79 = vld [vmem:[%s0 + $0xa8] sm:$0xff]
  %v80 = vld [vmem:[%s0 + $0xb0] sm:$0xf]
  %v81 = vld [vmem:[%s0 + $0xb4] sm:$0xff]
  %v82 = vld [vmem:[%s0 + $0xbc] sm:$0xf]
  %v83 = vld [vmem:[%s2] sm:$0xff]
  %v84 = vld [vmem:[%s2 + $0x8] sm:$0xff]
  %v85 = vld [vmem:[%s2 + $0x10] sm:$0xff]
  %v86 = vld [vmem:[%s2 + $0x18] sm:$0xff]
  %v87 = vld [vmem:[%s2 + $0x20] sm:$0xff]
  %v88 = vld [vmem:[%s2 + $0x28] sm:$0xff]
  %v89 = vld [vmem:[%s2 + $0x30] sm:$0xff]
  %v90 = vld [vmem:[%s2 + $0x38] sm:$0xff]
  %v91 = vld [vmem:[%s2 + $0x40] sm:$0xff]
  %v92 = vld [vmem:[%s2 + $0x48] sm:$0xff]
  %v93 = vld [vmem:[%s2 + $0x50] sm:$0xff]
  %v94 = vld [vmem:[%s2 + $0x58] sm:$0xff]
  %v95 = vld [vmem:[%s2 + $0x60] sm:$0xff]
  %v96 = vld [vmem:[%s2 + $0x68] sm:$0xff]
  %v97 = vld [vmem:[%s2 + $0x70] sm:$0xff]
  %v98 = vld [vmem:[%s2 + $0x78] sm:$0xff]
  %100 = vset.pattern.permute.xlu0 0
  %101 = vperm.xlu0 %100, %v83
  %v102 = vpop.permute.xlu0 %101
  %105 = vset.pattern.permute.xlu0 0
  %106 = vperm.xlu0 %105, %v84
  %v107 = vpop.permute.xlu0 %106
  %110 = vset.pattern.permute.xlu0 0
  %111 = vperm.xlu0 %110, %v85
  %v112 = vpop.permute.xlu0 %111
  %115 = vset.pattern.permute.xlu0 0
  %116 = vperm.xlu0 %115, %v86
  %v117 = vpop.permute.xlu0 %116
  %120 = vset.pattern.permute.xlu0 0
  %121 = vperm.xlu0 %120, %v87
  %v122 = vpop.permute.xlu0 %121
  %125 = vset.pattern.permute.xlu0 0
  %126 = vperm.xlu0 %125, %v88
  %v127 = vpop.permute.xlu0 %126
  %130 = vset.pattern.permute.xlu0 0
  %131 = vperm.xlu0 %130, %v89
  %v132 = vpop.permute.xlu0 %131
  %135 = vset.pattern.permute.xlu0 0
  %136 = vperm.xlu0 %135, %v90
  %v137 = vpop.permute.xlu0 %136
  %140 = vset.pattern.permute.xlu0 0
  %141 = vperm.xlu0 %140, %v91
  %v142 = vpop.permute.xlu0 %141
  %145 = vset.pattern.permute.xlu0 0
  %146 = vperm.xlu0 %145, %v92
  %v147 = vpop.permute.xlu0 %146
  %150 = vset.pattern.permute.xlu0 0
  %151 = vperm.xlu0 %150, %v93
  %v152 = vpop.permute.xlu0 %151
  %155 = vset.pattern.permute.xlu0 0
  %156 = vperm.xlu0 %155, %v94
  %v157 = vpop.permute.xlu0 %156
  %160 = vset.pattern.permute.xlu0 0
  %161 = vperm.xlu0 %160, %v95
  %v162 = vpop.permute.xlu0 %161
  %165 = vset.pattern.permute.xlu0 0
  %166 = vperm.xlu0 %165, %v96
  %v167 = vpop.permute.xlu0 %166
  %170 = vset.pattern.permute.xlu0 0
  %171 = vperm.xlu0 %170, %v97
  %v172 = vpop.permute.xlu0 %171
  %175 = vset.pattern.permute.xlu0 0
  %176 = vperm.xlu0 %175, %v98
  %v177 = vpop.permute.xlu0 %176
  %v211 = vunpack.c.l.b16 %v51
  %v212 = vunpack.c.h.b16 %v51
  %v213 = vunpack.c.l.b16 %v52
  %v214 = vunpack.c.l.b16 %v53
  %v215 = vunpack.c.h.b16 %v53
  %v216 = vunpack.c.l.b16 %v54
  %v217 = vunpack.c.l.b16 %v55
  %v218 = vunpack.c.h.b16 %v55
  %v219 = vunpack.c.l.b16 %v56
  %v220 = vunpack.c.l.b16 %v57
  %v221 = vunpack.c.h.b16 %v57
  %v222 = vunpack.c.l.b16 %v58
  %v223 = vunpack.c.l.b16 %v59
  %v224 = vunpack.c.h.b16 %v59
  %v225 = vunpack.c.l.b16 %v60
  %v226 = vunpack.c.l.b16 %v61
  %v227 = vunpack.c.h.b16 %v61
  %v228 = vunpack.c.l.b16 %v62
  %v229 = vunpack.c.l.b16 %v63
  %v230 = vunpack.c.h.b16 %v63
  %v231 = vunpack.c.l.b16 %v64
  %v232 = vunpack.c.l.b16 %v65
  %v233 = vunpack.c.h.b16 %v65
  %v234 = vunpack.c.l.b16 %v66
  %v235 = vunpack.c.l.b16 %v67
  %v236 = vunpack.c.h.b16 %v67
  %v237 = vunpack.c.l.b16 %v68
  %v238 = vunpack.c.l.b16 %v69
  %v239 = vunpack.c.h.b16 %v69
  %v240 = vunpack.c.l.b16 %v70
  %v241 = vunpack.c.l.b16 %v71
  %v242 = vunpack.c.h.b16 %v71
  %v243 = vunpack.c.l.b16 %v72
  %v244 = vunpack.c.l.b16 %v73
  %v245 = vunpack.c.h.b16 %v73
  %v246 = vunpack.c.l.b16 %v74
  %v247 = vunpack.c.l.b16 %v75
  %v248 = vunpack.c.h.b16 %v75
  %v249 = vunpack.c.l.b16 %v76
  %v250 = vunpack.c.l.b16 %v77
  %v251 = vunpack.c.h.b16 %v77
  %v252 = vunpack.c.l.b16 %v78
  %v253 = vunpack.c.l.b16 %v79
  %v254 = vunpack.c.h.b16 %v79
  %v255 = vunpack.c.l.b16 %v80
  %v256 = vunpack.c.l.b16 %v81
  %v257 = vunpack.c.h.b16 %v81
  %v258 = vunpack.c.l.b16 %v82
  %v259 = vpack.c.b16 %v214, %v211
  %v260 = vpack.c.b16 %v215, %v212
  %v261 = vpack.c.b16 %v216, %v213
  %v262 = vpack.c.b16 %v220, %v217
  %v263 = vpack.c.b16 %v221, %v218
  %v264 = vpack.c.b16 %v222, %v219
  %v265 = vpack.c.b16 %v226, %v223
  %v266 = vpack.c.b16 %v227, %v224
  %v267 = vpack.c.b16 %v228, %v225
  %v268 = vpack.c.b16 %v232, %v229
  %v269 = vpack.c.b16 %v233, %v230
  %v270 = vpack.c.b16 %v234, %v231
  %v271 = vpack.c.b16 %v238, %v235
  %v272 = vpack.c.b16 %v239, %v236
  %v273 = vpack.c.b16 %v240, %v237
  %v274 = vpack.c.b16 %v244, %v241
  %v275 = vpack.c.b16 %v245, %v242
  %v276 = vpack.c.b16 %v246, %v243
  %v277 = vpack.c.b16 %v250, %v247
  %v278 = vpack.c.b16 %v251, %v248
  %v279 = vpack.c.b16 %v252, %v249
  %v280 = vpack.c.b16 %v256, %v253
  %v281 = vpack.c.b16 %v257, %v254
  %v282 = vpack.c.b16 %v258, %v255
  %v335 = vunpack.c.l.b16 %v15
  %v336 = vunpack.c.l.b16 %v16
  %v337 = vunpack.c.l.b16 %v17
  %v338 = vunpack.c.l.b16 %v18
  %v339 = vunpack.c.l.b16 %v19
  %v340 = vunpack.c.l.b16 %v20
  %v341 = vunpack.c.l.b16 %v21
  %v342 = vunpack.c.l.b16 %v22
  %v343 = vunpack.c.l.b16 %v23
  %v344 = vunpack.c.l.b16 %v24
  %v345 = vunpack.c.l.b16 %v25
  %v346 = vunpack.c.l.b16 %v26
  %v347 = vunpack.c.l.b16 %v27
  %v348 = vunpack.c.l.b16 %v28
  %v349 = vunpack.c.l.b16 %v29
  %v350 = vunpack.c.l.b16 %v30
  %v351 = vunpack.c.l.b16 %v31
  %v352 = vunpack.c.l.b16 %v32
  %v353 = vunpack.c.l.b16 %v33
  %v354 = vunpack.c.l.b16 %v34
  %v355 = vunpack.c.l.b16 %v35
  %v356 = vunpack.c.l.b16 %v36
  %v357 = vunpack.c.l.b16 %v37
  %v358 = vunpack.c.l.b16 %v38
  %v359 = vunpack.c.l.b16 %v39
  %v360 = vunpack.c.l.b16 %v40
  %v361 = vunpack.c.l.b16 %v41
  %v362 = vunpack.c.l.b16 %v42
  %v363 = vunpack.c.l.b16 %v43
  %v364 = vunpack.c.l.b16 %v44
  %v365 = vunpack.c.l.b16 %v45
  %v366 = vunpack.c.l.b16 %v46
  %v367 = vunpack.c.l.b16 %v47
  %v368 = vunpack.c.l.b16 %v48
  %v369 = vunpack.c.l.b16 %v49
  %v370 = vunpack.c.l.b16 %v50
  %v371 = vpack.c.b16 %v336, %v335
  %v372 = vpack.c.b16 %v338, %v337
  %v373 = vpack.c.b16 %v340, %v339
  %v374 = vpack.c.b16 %v342, %v341
  %v375 = vpack.c.b16 %v344, %v343
  %v376 = vpack.c.b16 %v346, %v345
  %v377 = vpack.c.b16 %v348, %v347
  %v378 = vpack.c.b16 %v350, %v349
  %v379 = vpack.c.b16 %v352, %v351
  %v380 = vpack.c.b16 %v354, %v353
  %v381 = vpack.c.b16 %v356, %v355
  %v382 = vpack.c.b16 %v358, %v357
  %v383 = vpack.c.b16 %v360, %v359
  %v384 = vpack.c.b16 %v362, %v361
  %v385 = vpack.c.b16 %v364, %v363
  %v386 = vpack.c.b16 %v366, %v365
  %v387 = vpack.c.b16 %v368, %v367
  %v388 = vpack.c.b16 %v370, %v369
  %vm407 = vcmask 261120
  %v409 = vsel %vm407, %v261, 0
  %v412 = vsel %vm407, %v264, 0
  %v415 = vsel %vm407, %v267, 0
  %v418 = vsel %vm407, %v270, 0
  %v421 = vsel %vm407, %v273, 0
  %v424 = vsel %vm407, %v276, 0
  %v427 = vsel %vm407, %v279, 0
  %v430 = vsel %vm407, %v282, 0
  %432 = vmatprep.subr.bf16.mxu0 0
  %433 = vmatpush1.bf16.msra.mxu0 %v378
  %434 = vmatprep.subr.bf16.mxu0 0
  %435 = vmatpush1.bf16.msra.mxu0 %v377
  %436 = vmatprep.subr.bf16.mxu0 0
  %437 = vmatpush1.bf16.msra.mxu0 %v376
  %438 = vmatprep.subr.bf16.mxu0 0
  %439 = vmatpush1.bf16.msra.mxu0 %v375
  %440 = vmatprep.subr.bf16.mxu0 0
  %441 = vmatpush1.bf16.msra.mxu0 %v374
  %442 = vmatprep.subr.bf16.mxu0 0
  %443 = vmatpush1.bf16.msra.mxu0 %v373
  %444 = vmatprep.subr.bf16.mxu0 0
  %445 = vmatpush1.bf16.msra.mxu0 %v372
  %446 = vmatprep.subr.bf16.mxu0 0
  %447 = vmatpush1.bf16.msra.mxu0 %v371
  %448 = vmatprep.subr.bf16.mxu0 0
  %449 = vmatpush2.bf16.msra.mxu0 %v386
  %450 = vmatprep.subr.bf16.mxu0 0
  %451 = vmatpush2.bf16.msra.mxu0 %v385
  %452 = vmatprep.subr.bf16.mxu0 0
  %453 = vmatpush2.bf16.msra.mxu0 %v384
  %454 = vmatprep.subr.bf16.mxu0 0
  %455 = vmatpush2.bf16.msra.mxu0 %v383
  %456 = vmatprep.subr.bf16.mxu0 0
  %457 = vmatpush2.bf16.msra.mxu0 %v382
  %458 = vmatprep.subr.bf16.mxu0 0
  %459 = vmatpush2.bf16.msra.mxu0 %v381
  %460 = vmatprep.subr.bf16.mxu0 0
  %461 = vmatpush2.bf16.msra.mxu0 %v380
  %462 = vmatprep.subr.bf16.mxu0 0
  %463 = vmatpush2.bf16.msra.mxu0 %v379
  %464 = vmatprep.mubr.bf16.mxu0 %v260
  %465 = vmatmul.mubr.bf16.gmra.mxu0 %v259
  %v466 = vpop.f32.mrf.mxu0
  %v467 = vadd.f32 %v102, %v466
  %v468 = vpop.f32.mrf.mxu0
  %v469 = vpop.f32.mrf.mxu0
  %v470 = vadd.f32 %v107, %v469
  %v471 = vpop.f32.mrf.mxu0
  %472 = vmatprep.mubr.bf16.mxu0 %v263
  %473 = vmatmul.mubr.bf16.gmra.mxu0 %v262
  %v474 = vpop.f32.mrf.mxu0
  %v475 = vadd.f32 %v112, %v474
  %v476 = vpop.f32.mrf.mxu0
  %v477 = vpop.f32.mrf.mxu0
  %v478 = vadd.f32 %v117, %v477
  %v479 = vpop.f32.mrf.mxu0
  %480 = vmatprep.mubr.bf16.mxu0 %v266
  %481 = vmatmul.mubr.bf16.gmra.mxu0 %v265
  %v482 = vpop.f32.mrf.mxu0
  %v483 = vadd.f32 %v122, %v482
  %v484 = vpop.f32.mrf.mxu0
  %v485 = vpop.f32.mrf.mxu0
  %v486 = vadd.f32 %v127, %v485
  %v487 = vpop.f32.mrf.mxu0
  %488 = vmatprep.mubr.bf16.mxu0 %v269
  %489 = vmatmul.mubr.bf16.gmra.mxu0 %v268
  %v490 = vpop.f32.mrf.mxu0
  %v491 = vadd.f32 %v132, %v490
  %v492 = vpop.f32.mrf.mxu0
  %v493 = vpop.f32.mrf.mxu0
  %v494 = vadd.f32 %v137, %v493
  %v495 = vpop.f32.mrf.mxu0
  %496 = vmatprep.mubr.bf16.mxu0 %v272
  %497 = vmatmul.mubr.bf16.gmra.mxu0 %v271
  %v498 = vpop.f32.mrf.mxu0
  %v499 = vadd.f32 %v142, %v498
  %v500 = vpop.f32.mrf.mxu0
  %v501 = vpop.f32.mrf.mxu0
  %v502 = vadd.f32 %v147, %v501
  %v503 = vpop.f32.mrf.mxu0
  %504 = vmatprep.mubr.bf16.mxu0 %v275
  %505 = vmatmul.mubr.bf16.gmra.mxu0 %v274
  %v506 = vpop.f32.mrf.mxu0
  %v507 = vadd.f32 %v152, %v506
  %v508 = vpop.f32.mrf.mxu0
  %v509 = vpop.f32.mrf.mxu0
  %v510 = vadd.f32 %v157, %v509
  %v511 = vpop.f32.mrf.mxu0
  %512 = vmatprep.mubr.bf16.mxu0 %v278
  %513 = vmatmul.mubr.bf16.gmra.mxu0 %v277
  %v514 = vpop.f32.mrf.mxu0
  %v515 = vadd.f32 %v162, %v514
  %v516 = vpop.f32.mrf.mxu0
  %v517 = vpop.f32.mrf.mxu0
  %v518 = vadd.f32 %v167, %v517
  %v519 = vpop.f32.mrf.mxu0
  %520 = vmatprep.mubr.bf16.mxu0 %v281
  %521 = vmatmul.mubr.bf16.gmra.mxu0 %v280
  %v522 = vpop.f32.mrf.mxu0
  %v523 = vadd.f32 %v172, %v522
  %v524 = vpop.f32.mrf.mxu0
  %v525 = vpop.f32.mrf.mxu0
  %v526 = vadd.f32 %v177, %v525
  %v527 = vpop.f32.mrf.mxu0
  %528 = vdwg.mxu0
  %529 = vmatprep.subr.bf16.mxu0 0
  %530 = vmatpush1.bf16.msra.mxu0 0
  %531 = vmatprep.subr.bf16.mxu0 0
  %532 = vmatpush1.bf16.msra.mxu0 0
  %533 = vmatprep.subr.bf16.mxu0 0
  %534 = vmatpush1.bf16.msra.mxu0 0
  %535 = vmatprep.subr.bf16.mxu0 0
  %536 = vmatpush1.bf16.msra.mxu0 0
  %537 = vmatprep.subr.bf16.mxu0 0
  %538 = vmatpush1.bf16.msra.mxu0 0
  %539 = vmatprep.subr.bf16.mxu0 0
  %540 = vmatpush1.bf16.msra.mxu0 0
  %541 = vmatprep.subr.bf16.mxu0 0
  %542 = vmatpush1.bf16.msra.mxu0 %v388
  %543 = vmatprep.subr.bf16.mxu0 0
  %544 = vmatpush1.bf16.msra.mxu0 %v387
  %545 = vmatprep.subr.bf16.mxu0 0
  %546 = vmatpush2.bf16.msra.mxu0 0
  %547 = vmatprep.subr.bf16.mxu0 0
  %548 = vmatpush2.bf16.msra.mxu0 0
  %549 = vmatprep.subr.bf16.mxu0 0
  %550 = vmatpush2.bf16.msra.mxu0 0
  %551 = vmatprep.subr.bf16.mxu0 0
  %552 = vmatpush2.bf16.msra.mxu0 0
  %553 = vmatprep.subr.bf16.mxu0 0
  %554 = vmatpush2.bf16.msra.mxu0 0
  %555 = vmatprep.subr.bf16.mxu0 0
  %556 = vmatpush2.bf16.msra.mxu0 0
  %557 = vmatprep.subr.bf16.mxu0 0
  %558 = vmatpush2.bf16.msra.mxu0 0
  %559 = vmatprep.subr.bf16.mxu0 0
  %560 = vmatpush2.bf16.msra.mxu0 0
  %561 = vmatprep.mubr.bf16.mxu0 0
  %562 = vmatmul.mubr.bf16.gmra.mxu0 %v409
  %v563 = vpop.f32.mrf.mxu0
  %v564 = vadd.f32 %v467, %v563
  %v565 = vpop.f32.mrf.mxu0
  %v566 = vpop.f32.mrf.mxu0
  %v567 = vadd.f32 %v470, %v566
  %v568 = vpop.f32.mrf.mxu0
  %569 = vmatprep.mubr.bf16.mxu0 0
  %570 = vmatmul.mubr.bf16.gmra.mxu0 %v412
  %v571 = vpop.f32.mrf.mxu0
  %v572 = vadd.f32 %v475, %v571
  %v573 = vpop.f32.mrf.mxu0
  %v574 = vpop.f32.mrf.mxu0
  %v575 = vadd.f32 %v478, %v574
  %v576 = vpop.f32.mrf.mxu0
  %577 = vmatprep.mubr.bf16.mxu0 0
  %578 = vmatmul.mubr.bf16.gmra.mxu0 %v415
  %v579 = vpop.f32.mrf.mxu0
  %v580 = vadd.f32 %v483, %v579
  %v581 = vpop.f32.mrf.mxu0
  %v582 = vpop.f32.mrf.mxu0
  %v583 = vadd.f32 %v486, %v582
  %v584 = vpop.f32.mrf.mxu0
  %585 = vmatprep.mubr.bf16.mxu0 0
  %586 = vmatmul.mubr.bf16.gmra.mxu0 %v418
  %v587 = vpop.f32.mrf.mxu0
  %v588 = vadd.f32 %v491, %v587
  %v589 = vpop.f32.mrf.mxu0
  %v590 = vpop.f32.mrf.mxu0
  %v591 = vadd.f32 %v494, %v590
  %v592 = vpop.f32.mrf.mxu0
  %593 = vmatprep.mubr.bf16.mxu0 0
  %594 = vmatmul.mubr.bf16.gmra.mxu0 %v421
  %v595 = vpop.f32.mrf.mxu0
  %v596 = vadd.f32 %v499, %v595
  %v597 = vpop.f32.mrf.mxu0
  %v598 = vpop.f32.mrf.mxu0
  %v599 = vadd.f32 %v502, %v598
  %v600 = vpop.f32.mrf.mxu0
  %601 = vmatprep.mubr.bf16.mxu0 0
  %602 = vmatmul.mubr.bf16.gmra.mxu0 %v424
  %v603 = vpop.f32.mrf.mxu0
  %v604 = vadd.f32 %v507, %v603
  %v605 = vpop.f32.mrf.mxu0
  %v606 = vpop.f32.mrf.mxu0
  %v607 = vadd.f32 %v510, %v606
  %v608 = vpop.f32.mrf.mxu0
  %609 = vmatprep.mubr.bf16.mxu0 0
  %610 = vmatmul.mubr.bf16.gmra.mxu0 %v427
  %v611 = vpop.f32.mrf.mxu0
  %v612 = vadd.f32 %v515, %v611
  %v613 = vpop.f32.mrf.mxu0
  %v614 = vpop.f32.mrf.mxu0
  %v615 = vadd.f32 %v518, %v614
  %v616 = vpop.f32.mrf.mxu0
  %617 = vmatprep.mubr.bf16.mxu0 0
  %618 = vmatmul.mubr.bf16.gmra.mxu0 %v430
  %v619 = vpop.f32.mrf.mxu0
  %v620 = vadd.f32 %v523, %v619
  %v621 = vpop.f32.mrf.mxu0
  %v622 = vpop.f32.mrf.mxu0
  %v623 = vadd.f32 %v526, %v622
  %v624 = vpop.f32.mrf.mxu0
  %625 = vdwg.mxu0
  %v626 = vmax.f32 %v564, 0.0
  %v627 = vmax.f32 %v567, 0.0
  %v628 = vmax.f32 %v572, 0.0
  %v629 = vmax.f32 %v575, 0.0
  %v630 = vmax.f32 %v580, 0.0
  %v631 = vmax.f32 %v583, 0.0
  %v632 = vmax.f32 %v588, 0.0
  %v633 = vmax.f32 %v591, 0.0
  %v634 = vmax.f32 %v596, 0.0
  %v635 = vmax.f32 %v599, 0.0
  %v636 = vmax.f32 %v604, 0.0
  %v637 = vmax.f32 %v607, 0.0
  %v638 = vmax.f32 %v612, 0.0
  %v639 = vmax.f32 %v615, 0.0
  %v640 = vmax.f32 %v620, 0.0
  %v641 = vmax.f32 %v623, 0.0
  %vm642 = vcmask 64512
  %643 = vst.msk [vmem:[%s3] sm:$0xff] %vm642, %v626
  %644 = vst.msk [vmem:[%s3 + $0x8] sm:$0xff] %vm642, %v627
  %645 = vst.msk [vmem:[%s3 + $0x10] sm:$0xff] %vm642, %v628
  %646 = vst.msk [vmem:[%s3 + $0x18] sm:$0xff] %vm642, %v629
  %647 = vst.msk [vmem:[%s3 + $0x20] sm:$0xff] %vm642, %v630
  %648 = vst.msk [vmem:[%s3 + $0x28] sm:$0xff] %vm642, %v631
  %649 = vst.msk [vmem:[%s3 + $0x30] sm:$0xff] %vm642, %v632
  %650 = vst.msk [vmem:[%s3 + $0x38] sm:$0xff] %vm642, %v633
  %651 = vst.msk [vmem:[%s3 + $0x40] sm:$0xff] %vm642, %v634
  %652 = vst.msk [vmem:[%s3 + $0x48] sm:$0xff] %vm642, %v635
  %653 = vst.msk [vmem:[%s3 + $0x50] sm:$0xff] %vm642, %v636
  %654 = vst.msk [vmem:[%s3 + $0x58] sm:$0xff] %vm642, %v637
  %655 = vst.msk [vmem:[%s3 + $0x60] sm:$0xff] %vm642, %v638
  %656 = vst.msk [vmem:[%s3 + $0x68] sm:$0xff] %vm642, %v639
  %657 = vst.msk [vmem:[%s3 + $0x70] sm:$0xff] %vm642, %v640
  %658 = vst.msk [vmem:[%s3 + $0x78] sm:$0xff] %vm642, %v641
  // Predicated region
  $region14: #{vqvae_forward.34} parent=0 // pred_check
    _
  $region15: #{vqvae_forward.34} parent=0 // pred_check_branch
    %660 = sbr.rel (0) target = $region17
  $region16: #{vqvae_forward.34} parent=0 // pred_region
    _
  $region17: #{vqvae_forward.34} parent=0 // pred_fallthru
    _
  // Predicated region
  $region18: #{vqvae_forward.34} parent=0 // pred_check
    _
  $region19: #{vqvae_forward.34} parent=0 // pred_check_branch
    %662 = sbr.rel (0) target = $region21
  $region20: #{vqvae_forward.34} parent=0 // pred_region
    _
  $region21: #{vqvae_forward.34} parent=0 // pred_fallthru
    _

// kernel: vqvae_forward.35
$region0: #{vqvae_forward.35}
  #allocation0 [shape = 'u32[]', space=smem, size = 0x4, offset = 0x4, fixed_abs, tag = 'smem constant byte address 0x4 - core index']
  #allocation1 [shape = 'u32[144,128]{1,0:T(1,128)}', space=vmem, size = 0x12000, scoped, tag = 'internal scratch']
  %s0 = inlined_call_operand.vmem [shape: bf16[128,288], index: 0, kind: input, shape index: {}]
  %s1 = inlined_call_operand.vmem [shape: bf16[288,32], index: 1, kind: input, shape index: {}]
  %s2 = inlined_call_operand.vmem [shape: f32[128,1], index: 2, kind: input, shape index: {}]
  %s3 = inlined_call_operand.vmem [shape: f32[128,32], index: 3, kind: output, shape index: {}]
  %s4 = sld [smem:[#allocation0]]
  $region22: #{vqvae_forward.35} parent=0
    _
  %s6 = ssub.s32 1, %s4
  %s7 = scalar_select 0, %s6, %s4
  // Predicated region
  $region2: #{vqvae_forward.35} parent=0 // pred_check
    _
  $region3: #{vqvae_forward.35} parent=0 // pred_check_branch
    %9 = sbr.rel (0) target = $region5
  $region4: #{vqvae_forward.35} parent=0 // pred_region
    _
  $region5: #{vqvae_forward.35} parent=0 // pred_fallthru
    _
  // Predicated region
  $region6: #{vqvae_forward.35} parent=0 // pred_check
    _
  $region7: #{vqvae_forward.35} parent=0 // pred_check_branch
    %11 = sbr.rel (0) target = $region9
  $region8: #{vqvae_forward.35} parent=0 // pred_region
    _
  $region9: #{vqvae_forward.35} parent=0 // pred_fallthru
    _
  // Predicated region
  $region10: #{vqvae_forward.35} parent=0 // pred_check
    _
  $region11: #{vqvae_forward.35} parent=0 // pred_check_branch
    %13 = sbr.rel (0) target = $region13
  $region12: #{vqvae_forward.35} parent=0 // pred_region
    _
  $region13: #{vqvae_forward.35} parent=0 // pred_fallthru
    _
  %v15 = vld [vmem:[%s1] sm:$0xf]
  %v16 = vld [vmem:[%s1 + $0x4] sm:$0xf]
  %v17 = vld [vmem:[%s1 + $0x8] sm:$0xf]
  %v18 = vld [vmem:[%s1 + $0xc] sm:$0xf]
  %v19 = vld [vmem:[%s1 + $0x10] sm:$0xf]
  %v20 = vld [vmem:[%s1 + $0x14] sm:$0xf]
  %v21 = vld [vmem:[%s1 + $0x18] sm:$0xf]
  %v22 = vld [vmem:[%s1 + $0x1c] sm:$0xf]
  %v23 = vld [vmem:[%s1 + $0x20] sm:$0xf]
  %v24 = vld [vmem:[%s1 + $0x24] sm:$0xf]
  %v25 = vld [vmem:[%s1 + $0x28] sm:$0xf]
  %v26 = vld [vmem:[%s1 + $0x2c] sm:$0xf]
  %v27 = vld [vmem:[%s1 + $0x30] sm:$0xf]
  %v28 = vld [vmem:[%s1 + $0x34] sm:$0xf]
  %v29 = vld [vmem:[%s1 + $0x38] sm:$0xf]
  %v30 = vld [vmem:[%s1 + $0x3c] sm:$0xf]
  %v31 = vld [vmem:[%s1 + $0x40] sm:$0xf]
  %v32 = vld [vmem:[%s1 + $0x44] sm:$0xf]
  %v33 = vld [vmem:[%s1 + $0x48] sm:$0xf]
  %v34 = vld [vmem:[%s1 + $0x4c] sm:$0xf]
  %v35 = vld [vmem:[%s1 + $0x50] sm:$0xf]
  %v36 = vld [vmem:[%s1 + $0x54] sm:$0xf]
  %v37 = vld [vmem:[%s1 + $0x58] sm:$0xf]
  %v38 = vld [vmem:[%s1 + $0x5c] sm:$0xf]
  %v39 = vld [vmem:[%s1 + $0x60] sm:$0xf]
  %v40 = vld [vmem:[%s1 + $0x64] sm:$0xf]
  %v41 = vld [vmem:[%s1 + $0x68] sm:$0xf]
  %v42 = vld [vmem:[%s1 + $0x6c] sm:$0xf]
  %v43 = vld [vmem:[%s1 + $0x70] sm:$0xf]
  %v44 = vld [vmem:[%s1 + $0x74] sm:$0xf]
  %v45 = vld [vmem:[%s1 + $0x78] sm:$0xf]
  %v46 = vld [vmem:[%s1 + $0x7c] sm:$0xf]
  %v47 = vld [vmem:[%s1 + $0x80] sm:$0xf]
  %v48 = vld [vmem:[%s1 + $0x84] sm:$0xf]
  %v49 = vld [vmem:[%s1 + $0x88] sm:$0xf]
  %v50 = vld [vmem:[%s1 + $0x8c] sm:$0xf]
  %v51 = vld [vmem:[%s0] sm:$0xff]
  %v52 = vld [vmem:[%s0 + $0x8] sm:$0xf]
  %v53 = vld [vmem:[%s0 + $0xc] sm:$0xff]
  %v54 = vld [vmem:[%s0 + $0x14] sm:$0xf]
  %v55 = vld [vmem:[%s0 + $0x18] sm:$0xff]
  %v56 = vld [vmem:[%s0 + $0x20] sm:$0xf]
  %v57 = vld [vmem:[%s0 + $0x24] sm:$0xff]
  %v58 = vld [vmem:[%s0 + $0x2c] sm:$0xf]
  %v59 = vld [vmem:[%s0 + $0x30] sm:$0xff]
  %v60 = vld [vmem:[%s0 + $0x38] sm:$0xf]
  %v61 = vld [vmem:[%s0 + $0x3c] sm:$0xff]
  %v62 = vld [vmem:[%s0 + $0x44] sm:$0xf]
  %v63 = vld [vmem:[%s0 + $0x48] sm:$0xff]
  %v64 = vld [vmem:[%s0 + $0x50] sm:$0xf]
  %v65 = vld [vmem:[%s0 + $0x54] sm:$0xff]
  %v66 = vld [vmem:[%s0 + $0x5c] sm:$0xf]
  %v67 = vld [vmem:[%s0 + $0x60] sm:$0xff]
  %v68 = vld [vmem:[%s0 + $0x68] sm:$0xf]
  %v69 = vld [vmem:[%s0 + $0x6c] sm:$0xff]
  %v70 = vld [vmem:[%s0 + $0x74] sm:$0xf]
  %v71 = vld [vmem:[%s0 + $0x78] sm:$0xff]
  %v72 = vld [vmem:[%s0 + $0x80] sm:$0xf]
  %v73 = vld [vmem:[%s0 + $0x84] sm:$0xff]
  %v74 = vld [vmem:[%s0 + $0x8c] sm:$0xf]
  %v75 = vld [vmem:[%s0 + $0x90] sm:$0xff]
  %v76 = vld [vmem:[%s0 + $0x98] sm:$0xf]
  %v77 = vld [vmem:[%s0 + $0x9c] sm:$0xff]
  %v78 = vld [vmem:[%s0 + $0xa4] sm:$0xf]
  %v79 = vld [vmem:[%s0 + $0xa8] sm:$0xff]
  %v80 = vld [vmem:[%s0 + $0xb0] sm:$0xf]
  %v81 = vld [vmem:[%s0 + $0xb4] sm:$0xff]
  %v82 = vld [vmem:[%s0 + $0xbc] sm:$0xf]
  %v83 = vld [vmem:[%s2] sm:$0xff]
  %v84 = vld [vmem:[%s2 + $0x8] sm:$0xff]
  %v85 = vld [vmem:[%s2 + $0x10] sm:$0xff]
  %v86 = vld [vmem:[%s2 + $0x18] sm:$0xff]
  %v87 = vld [vmem:[%s2 + $0x20] sm:$0xff]
  %v88 = vld [vmem:[%s2 + $0x28] sm:$0xff]
  %v89 = vld [vmem:[%s2 + $0x30] sm:$0xff]
  %v90 = vld [vmem:[%s2 + $0x38] sm:$0xff]
  %v91 = vld [vmem:[%s2 + $0x40] sm:$0xff]
  %v92 = vld [vmem:[%s2 + $0x48] sm:$0xff]
  %v93 = vld [vmem:[%s2 + $0x50] sm:$0xff]
  %v94 = vld [vmem:[%s2 + $0x58] sm:$0xff]
  %v95 = vld [vmem:[%s2 + $0x60] sm:$0xff]
  %v96 = vld [vmem:[%s2 + $0x68] sm:$0xff]
  %v97 = vld [vmem:[%s2 + $0x70] sm:$0xff]
  %v98 = vld [vmem:[%s2 + $0x78] sm:$0xff]
  %100 = vset.pattern.permute.xlu0 0
  %101 = vperm.xlu0 %100, %v83
  %v102 = vpop.permute.xlu0 %101
  %105 = vset.pattern.permute.xlu0 0
  %106 = vperm.xlu0 %105, %v84
  %v107 = vpop.permute.xlu0 %106
  %110 = vset.pattern.permute.xlu0 0
  %111 = vperm.xlu0 %110, %v85
  %v112 = vpop.permute.xlu0 %111
  %115 = vset.pattern.permute.xlu0 0
  %116 = vperm.xlu0 %115, %v86
  %v117 = vpop.permute.xlu0 %116
  %120 = vset.pattern.permute.xlu0 0
  %121 = vperm.xlu0 %120, %v87
  %v122 = vpop.permute.xlu0 %121
  %125 = vset.pattern.permute.xlu0 0
  %126 = vperm.xlu0 %125, %v88
  %v127 = vpop.permute.xlu0 %126
  %130 = vset.pattern.permute.xlu0 0
  %131 = vperm.xlu0 %130, %v89
  %v132 = vpop.permute.xlu0 %131
  %135 = vset.pattern.permute.xlu0 0
  %136 = vperm.xlu0 %135, %v90
  %v137 = vpop.permute.xlu0 %136
  %140 = vset.pattern.permute.xlu0 0
  %141 = vperm.xlu0 %140, %v91
  %v142 = vpop.permute.xlu0 %141
  %145 = vset.pattern.permute.xlu0 0
  %146 = vperm.xlu0 %145, %v92
  %v147 = vpop.permute.xlu0 %146
  %150 = vset.pattern.permute.xlu0 0
  %151 = vperm.xlu0 %150, %v93
  %v152 = vpop.permute.xlu0 %151
  %155 = vset.pattern.permute.xlu0 0
  %156 = vperm.xlu0 %155, %v94
  %v157 = vpop.permute.xlu0 %156
  %160 = vset.pattern.permute.xlu0 0
  %161 = vperm.xlu0 %160, %v95
  %v162 = vpop.permute.xlu0 %161
  %165 = vset.pattern.permute.xlu0 0
  %166 = vperm.xlu0 %165, %v96
  %v167 = vpop.permute.xlu0 %166
  %170 = vset.pattern.permute.xlu0 0
  %171 = vperm.xlu0 %170, %v97
  %v172 = vpop.permute.xlu0 %171
  %175 = vset.pattern.permute.xlu0 0
  %176 = vperm.xlu0 %175, %v98
  %v177 = vpop.permute.xlu0 %176
  %v211 = vunpack.c.l.b16 %v51
  %v212 = vunpack.c.h.b16 %v51
  %v213 = vunpack.c.l.b16 %v52
  %v214 = vunpack.c.l.b16 %v53
  %v215 = vunpack.c.h.b16 %v53
  %v216 = vunpack.c.l.b16 %v54
  %v217 = vunpack.c.l.b16 %v55
  %v218 = vunpack.c.h.b16 %v55
  %v219 = vunpack.c.l.b16 %v56
  %v220 = vunpack.c.l.b16 %v57
  %v221 = vunpack.c.h.b16 %v57
  %v222 = vunpack.c.l.b16 %v58
  %v223 = vunpack.c.l.b16 %v59
  %v224 = vunpack.c.h.b16 %v59
  %v225 = vunpack.c.l.b16 %v60
  %v226 = vunpack.c.l.b16 %v61
  %v227 = vunpack.c.h.b16 %v61
  %v228 = vunpack.c.l.b16 %v62
  %v229 = vunpack.c.l.b16 %v63
  %v230 = vunpack.c.h.b16 %v63
  %v231 = vunpack.c.l.b16 %v64
  %v232 = vunpack.c.l.b16 %v65
  %v233 = vunpack.c.h.b16 %v65
  %v234 = vunpack.c.l.b16 %v66
  %v235 = vunpack.c.l.b16 %v67
  %v236 = vunpack.c.h.b16 %v67
  %v237 = vunpack.c.l.b16 %v68
  %v238 = vunpack.c.l.b16 %v69
  %v239 = vunpack.c.h.b16 %v69
  %v240 = vunpack.c.l.b16 %v70
  %v241 = vunpack.c.l.b16 %v71
  %v242 = vunpack.c.h.b16 %v71
  %v243 = vunpack.c.l.b16 %v72
  %v244 = vunpack.c.l.b16 %v73
  %v245 = vunpack.c.h.b16 %v73
  %v246 = vunpack.c.l.b16 %v74
  %v247 = vunpack.c.l.b16 %v75
  %v248 = vunpack.c.h.b16 %v75
  %v249 = vunpack.c.l.b16 %v76
  %v250 = vunpack.c.l.b16 %v77
  %v251 = vunpack.c.h.b16 %v77
  %v252 = vunpack.c.l.b16 %v78
  %v253 = vunpack.c.l.b16 %v79
  %v254 = vunpack.c.h.b16 %v79
  %v255 = vunpack.c.l.b16 %v80
  %v256 = vunpack.c.l.b16 %v81
  %v257 = vunpack.c.h.b16 %v81
  %v258 = vunpack.c.l.b16 %v82
  %v259 = vpack.c.b16 %v214, %v211
  %v260 = vpack.c.b16 %v215, %v212
  %v261 = vpack.c.b16 %v216, %v213
  %v262 = vpack.c.b16 %v220, %v217
  %v263 = vpack.c.b16 %v221, %v218
  %v264 = vpack.c.b16 %v222, %v219
  %v265 = vpack.c.b16 %v226, %v223
  %v266 = vpack.c.b16 %v227, %v224
  %v267 = vpack.c.b16 %v228, %v225
  %v268 = vpack.c.b16 %v232, %v229
  %v269 = vpack.c.b16 %v233, %v230
  %v270 = vpack.c.b16 %v234, %v231
  %v271 = vpack.c.b16 %v238, %v235
  %v272 = vpack.c.b16 %v239, %v236
  %v273 = vpack.c.b16 %v240, %v237
  %v274 = vpack.c.b16 %v244, %v241
  %v275 = vpack.c.b16 %v245, %v242
  %v276 = vpack.c.b16 %v246, %v243
  %v277 = vpack.c.b16 %v250, %v247
  %v278 = vpack.c.b16 %v251, %v248
  %v279 = vpack.c.b16 %v252, %v249
  %v280 = vpack.c.b16 %v256, %v253
  %v281 = vpack.c.b16 %v257, %v254
  %v282 = vpack.c.b16 %v258, %v255
  %v335 = vunpack.c.l.b16 %v15
  %v336 = vunpack.c.l.b16 %v16
  %v337 = vunpack.c.l.b16 %v17
  %v338 = vunpack.c.l.b16 %v18
  %v339 = vunpack.c.l.b16 %v19
  %v340 = vunpack.c.l.b16 %v20
  %v341 = vunpack.c.l.b16 %v21
  %v342 = vunpack.c.l.b16 %v22
  %v343 = vunpack.c.l.b16 %v23
  %v344 = vunpack.c.l.b16 %v24
  %v345 = vunpack.c.l.b16 %v25
  %v346 = vunpack.c.l.b16 %v26
  %v347 = vunpack.c.l.b16 %v27
  %v348 = vunpack.c.l.b16 %v28
  %v349 = vunpack.c.l.b16 %v29
  %v350 = vunpack.c.l.b16 %v30
  %v351 = vunpack.c.l.b16 %v31
  %v352 = vunpack.c.l.b16 %v32
  %v353 = vunpack.c.l.b16 %v33
  %v354 = vunpack.c.l.b16 %v34
  %v355 = vunpack.c.l.b16 %v35
  %v356 = vunpack.c.l.b16 %v36
  %v357 = vunpack.c.l.b16 %v37
  %v358 = vunpack.c.l.b16 %v38
  %v359 = vunpack.c.l.b16 %v39
  %v360 = vunpack.c.l.b16 %v40
  %v361 = vunpack.c.l.b16 %v41
  %v362 = vunpack.c.l.b16 %v42
  %v363 = vunpack.c.l.b16 %v43
  %v364 = vunpack.c.l.b16 %v44
  %v365 = vunpack.c.l.b16 %v45
  %v366 = vunpack.c.l.b16 %v46
  %v367 = vunpack.c.l.b16 %v47
  %v368 = vunpack.c.l.b16 %v48
  %v369 = vunpack.c.l.b16 %v49
  %v370 = vunpack.c.l.b16 %v50
  %v371 = vpack.c.b16 %v336, %v335
  %v372 = vpack.c.b16 %v338, %v337
  %v373 = vpack.c.b16 %v340, %v339
  %v374 = vpack.c.b16 %v342, %v341
  %v375 = vpack.c.b16 %v344, %v343
  %v376 = vpack.c.b16 %v346, %v345
  %v377 = vpack.c.b16 %v348, %v347
  %v378 = vpack.c.b16 %v350, %v349
  %v379 = vpack.c.b16 %v352, %v351
  %v380 = vpack.c.b16 %v354, %v353
  %v381 = vpack.c.b16 %v356, %v355
  %v382 = vpack.c.b16 %v358, %v357
  %v383 = vpack.c.b16 %v360, %v359
  %v384 = vpack.c.b16 %v362, %v361
  %v385 = vpack.c.b16 %v364, %v363
  %v386 = vpack.c.b16 %v366, %v365
  %v387 = vpack.c.b16 %v368, %v367
  %v388 = vpack.c.b16 %v370, %v369
  %vm407 = vcmask 261120
  %v409 = vsel %vm407, %v261, 0
  %v412 = vsel %vm407, %v264, 0
  %v415 = vsel %vm407, %v267, 0
  %v418 = vsel %vm407, %v270, 0
  %v421 = vsel %vm407, %v273, 0
  %v424 = vsel %vm407, %v276, 0
  %v427 = vsel %vm407, %v279, 0
  %v430 = vsel %vm407, %v282, 0
  %432 = vmatprep.subr.bf16.mxu0 0
  %433 = vmatpush1.bf16.msra.mxu0 %v378
  %434 = vmatprep.subr.bf16.mxu0 0
  %435 = vmatpush1.bf16.msra.mxu0 %v377
  %436 = vmatprep.subr.bf16.mxu0 0
  %437 = vmatpush1.bf16.msra.mxu0 %v376
  %438 = vmatprep.subr.bf16.mxu0 0
  %439 = vmatpush1.bf16.msra.mxu0 %v375
  %440 = vmatprep.subr.bf16.mxu0 0
  %441 = vmatpush1.bf16.msra.mxu0 %v374
  %442 = vmatprep.subr.bf16.mxu0 0
  %443 = vmatpush1.bf16.msra.mxu0 %v373
  %444 = vmatprep.subr.bf16.mxu0 0
  %445 = vmatpush1.bf16.msra.mxu0 %v372
  %446 = vmatprep.subr.bf16.mxu0 0
  %447 = vmatpush1.bf16.msra.mxu0 %v371
  %448 = vmatprep.subr.bf16.mxu0 0
  %449 = vmatpush2.bf16.msra.mxu0 %v386
  %450 = vmatprep.subr.bf16.mxu0 0
  %451 = vmatpush2.bf16.msra.mxu0 %v385
  %452 = vmatprep.subr.bf16.mxu0 0
  %453 = vmatpush2.bf16.msra.mxu0 %v384
  %454 = vmatprep.subr.bf16.mxu0 0
  %455 = vmatpush2.bf16.msra.mxu0 %v383
  %456 = vmatprep.subr.bf16.mxu0 0
  %457 = vmatpush2.bf16.msra.mxu0 %v382
  %458 = vmatprep.subr.bf16.mxu0 0
  %459 = vmatpush2.bf16.msra.mxu0 %v381
  %460 = vmatprep.subr.bf16.mxu0 0
  %461 = vmatpush2.bf16.msra.mxu0 %v380
  %462 = vmatprep.subr.bf16.mxu0 0
  %463 = vmatpush2.bf16.msra.mxu0 %v379
  %464 = vmatprep.mubr.bf16.mxu0 %v260
  %465 = vmatmul.mubr.bf16.gmra.mxu0 %v259
  %v466 = vpop.f32.mrf.mxu0
  %v467 = vadd.f32 %v102, %v466
  %v468 = vpop.f32.mrf.mxu0
  %v469 = vpop.f32.mrf.mxu0
  %v470 = vadd.f32 %v107, %v469
  %v471 = vpop.f32.mrf.mxu0
  %472 = vmatprep.mubr.bf16.mxu0 %v263
  %473 = vmatmul.mubr.bf16.gmra.mxu0 %v262
  %v474 = vpop.f32.mrf.mxu0
  %v475 = vadd.f32 %v112, %v474
  %v476 = vpop.f32.mrf.mxu0
  %v477 = vpop.f32.mrf.mxu0
  %v478 = vadd.f32 %v117, %v477
  %v479 = vpop.f32.mrf.mxu0
  %480 = vmatprep.mubr.bf16.mxu0 %v266
  %481 = vmatmul.mubr.bf16.gmra.mxu0 %v265
  %v482 = vpop.f32.mrf.mxu0
  %v483 = vadd.f32 %v122, %v482
  %v484 = vpop.f32.mrf.mxu0
  %v485 = vpop.f32.mrf.mxu0
  %v486 = vadd.f32 %v127, %v485
  %v487 = vpop.f32.mrf.mxu0
  %488 = vmatprep.mubr.bf16.mxu0 %v269
  %489 = vmatmul.mubr.bf16.gmra.mxu0 %v268
  %v490 = vpop.f32.mrf.mxu0
  %v491 = vadd.f32 %v132, %v490
  %v492 = vpop.f32.mrf.mxu0
  %v493 = vpop.f32.mrf.mxu0
  %v494 = vadd.f32 %v137, %v493
  %v495 = vpop.f32.mrf.mxu0
  %496 = vmatprep.mubr.bf16.mxu0 %v272
  %497 = vmatmul.mubr.bf16.gmra.mxu0 %v271
  %v498 = vpop.f32.mrf.mxu0
  %v499 = vadd.f32 %v142, %v498
  %v500 = vpop.f32.mrf.mxu0
  %v501 = vpop.f32.mrf.mxu0
  %v502 = vadd.f32 %v147, %v501
  %v503 = vpop.f32.mrf.mxu0
  %504 = vmatprep.mubr.bf16.mxu0 %v275
  %505 = vmatmul.mubr.bf16.gmra.mxu0 %v274
  %v506 = vpop.f32.mrf.mxu0
  %v507 = vadd.f32 %v152, %v506
  %v508 = vpop.f32.mrf.mxu0
  %v509 = vpop.f32.mrf.mxu0
  %v510 = vadd.f32 %v157, %v509
  %v511 = vpop.f32.mrf.mxu0
  %512 = vmatprep.mubr.bf16.mxu0 %v278
  %513 = vmatmul.mubr.bf16.gmra.mxu0 %v277
  %v514 = vpop.f32.mrf.mxu0
  %v515 = vadd.f32 %v162, %v514
  %v516 = vpop.f32.mrf.mxu0
  %v517 = vpop.f32.mrf.mxu0
  %v518 = vadd.f32 %v167, %v517
  %v519 = vpop.f32.mrf.mxu0
  %520 = vmatprep.mubr.bf16.mxu0 %v281
  %521 = vmatmul.mubr.bf16.gmra.mxu0 %v280
  %v522 = vpop.f32.mrf.mxu0
  %v523 = vadd.f32 %v172, %v522
  %v524 = vpop.f32.mrf.mxu0
  %v525 = vpop.f32.mrf.mxu0
  %v526 = vadd.f32 %v177, %v525
  %v527 = vpop.f32.mrf.mxu0
  %528 = vdwg.mxu0
  %529 = vmatprep.subr.bf16.mxu0 0
  %530 = vmatpush1.bf16.msra.mxu0 0
  %531 = vmatprep.subr.bf16.mxu0 0
  %532 = vmatpush1.bf16.msra.mxu0 0
  %533 = vmatprep.subr.bf16.mxu0 0
  %534 = vmatpush1.bf16.msra.mxu0 0
  %535 = vmatprep.subr.bf16.mxu0 0
  %536 = vmatpush1.bf16.msra.mxu0 0
  %537 = vmatprep.subr.bf16.mxu0 0
  %538 = vmatpush1.bf16.msra.mxu0 0
  %539 = vmatprep.subr.bf16.mxu0 0
  %540 = vmatpush1.bf16.msra.mxu0 0
  %541 = vmatprep.subr.bf16.mxu0 0
  %542 = vmatpush1.bf16.msra.mxu0 %v388
  %543 = vmatprep.subr.bf16.mxu0 0
  %544 = vmatpush1.bf16.msra.mxu0 %v387
  %545 = vmatprep.subr.bf16.mxu0 0
  %546 = vmatpush2.bf16.msra.mxu0 0
  %547 = vmatprep.subr.bf16.mxu0 0
  %548 = vmatpush2.bf16.msra.mxu0 0
  %549 = vmatprep.subr.bf16.mxu0 0
  %550 = vmatpush2.bf16.msra.mxu0 0
  %551 = vmatprep.subr.bf16.mxu0 0
  %552 = vmatpush2.bf16.msra.mxu0 0
  %553 = vmatprep.subr.bf16.mxu0 0
  %554 = vmatpush2.bf16.msra.mxu0 0
  %555 = vmatprep.subr.bf16.mxu0 0
  %556 = vmatpush2.bf16.msra.mxu0 0
  %557 = vmatprep.subr.bf16.mxu0 0
  %558 = vmatpush2.bf16.msra.mxu0 0
  %559 = vmatprep.subr.bf16.mxu0 0
  %560 = vmatpush2.bf16.msra.mxu0 0
  %561 = vmatprep.mubr.bf16.mxu0 0
  %562 = vmatmul.mubr.bf16.gmra.mxu0 %v409
  %v563 = vpop.f32.mrf.mxu0
  %v564 = vadd.f32 %v467, %v563
  %v565 = vpop.f32.mrf.mxu0
  %v566 = vpop.f32.mrf.mxu0
  %v567 = vadd.f32 %v470, %v566
  %v568 = vpop.f32.mrf.mxu0
  %569 = vmatprep.mubr.bf16.mxu0 0
  %570 = vmatmul.mubr.bf16.gmra.mxu0 %v412
  %v571 = vpop.f32.mrf.mxu0
  %v572 = vadd.f32 %v475, %v571
  %v573 = vpop.f32.mrf.mxu0
  %v574 = vpop.f32.mrf.mxu0
  %v575 = vadd.f32 %v478, %v574
  %v576 = vpop.f32.mrf.mxu0
  %577 = vmatprep.mubr.bf16.mxu0 0
  %578 = vmatmul.mubr.bf16.gmra.mxu0 %v415
  %v579 = vpop.f32.mrf.mxu0
  %v580 = vadd.f32 %v483, %v579
  %v581 = vpop.f32.mrf.mxu0
  %v582 = vpop.f32.mrf.mxu0
  %v583 = vadd.f32 %v486, %v582
  %v584 = vpop.f32.mrf.mxu0
  %585 = vmatprep.mubr.bf16.mxu0 0
  %586 = vmatmul.mubr.bf16.gmra.mxu0 %v418
  %v587 = vpop.f32.mrf.mxu0
  %v588 = vadd.f32 %v491, %v587
  %v589 = vpop.f32.mrf.mxu0
  %v590 = vpop.f32.mrf.mxu0
  %v591 = vadd.f32 %v494, %v590
  %v592 = vpop.f32.mrf.mxu0
  %593 = vmatprep.mubr.bf16.mxu0 0
  %594 = vmatmul.mubr.bf16.gmra.mxu0 %v421
  %v595 = vpop.f32.mrf.mxu0
  %v596 = vadd.f32 %v499, %v595
  %v597 = vpop.f32.mrf.mxu0
  %v598 = vpop.f32.mrf.mxu0
  %v599 = vadd.f32 %v502, %v598
  %v600 = vpop.f32.mrf.mxu0
  %601 = vmatprep.mubr.bf16.mxu0 0
  %602 = vmatmul.mubr.bf16.gmra.mxu0 %v424
  %v603 = vpop.f32.mrf.mxu0
  %v604 = vadd.f32 %v507, %v603
  %v605 = vpop.f32.mrf.mxu0
  %v606 = vpop.f32.mrf.mxu0
  %v607 = vadd.f32 %v510, %v606
  %v608 = vpop.f32.mrf.mxu0
  %609 = vmatprep.mubr.bf16.mxu0 0
  %610 = vmatmul.mubr.bf16.gmra.mxu0 %v427
  %v611 = vpop.f32.mrf.mxu0
  %v612 = vadd.f32 %v515, %v611
  %v613 = vpop.f32.mrf.mxu0
  %v614 = vpop.f32.mrf.mxu0
  %v615 = vadd.f32 %v518, %v614
  %v616 = vpop.f32.mrf.mxu0
  %617 = vmatprep.mubr.bf16.mxu0 0
  %618 = vmatmul.mubr.bf16.gmra.mxu0 %v430
  %v619 = vpop.f32.mrf.mxu0
  %v620 = vadd.f32 %v523, %v619
  %v621 = vpop.f32.mrf.mxu0
  %v622 = vpop.f32.mrf.mxu0
  %v623 = vadd.f32 %v526, %v622
  %v624 = vpop.f32.mrf.mxu0
  %625 = vdwg.mxu0
  %v626 = vmax.f32 %v564, 0.0
  %v627 = vmax.f32 %v567, 0.0
  %v628 = vmax.f32 %v572, 0.0
  %v629 = vmax.f32 %v575, 0.0
  %v630 = vmax.f32 %v580, 0.0
  %v631 = vmax.f32 %v583, 0.0
  %v632 = vmax.f32 %v588, 0.0
  %v633 = vmax.f32 %v591, 0.0
  %v634 = vmax.f32 %v596, 0.0
  %v635 = vmax.f32 %v599, 0.0
  %v636 = vmax.f32 %v604, 0.0
  %v637 = vmax.f32 %v607, 0.0
  %v638 = vmax.f32 %v612, 0.0
  %v639 = vmax.f32 %v615, 0.0
  %v640 = vmax.f32 %v620, 0.0
  %v641 = vmax.f32 %v623, 0.0
  %642 = vst.msk [vmem:[%s3] sm:$0xff] %vm407, %v626
  %643 = vst.msk [vmem:[%s3 + $0x8] sm:$0xff] %vm407, %v627
  %644 = vst.msk [vmem:[%s3 + $0x10] sm:$0xff] %vm407, %v628
  %645 = vst.msk [vmem:[%s3 + $0x18] sm:$0xff] %vm407, %v629
  %646 = vst.msk [vmem:[%s3 + $0x20] sm:$0xff] %vm407, %v630
  %647 = vst.msk [vmem:[%s3 + $0x28] sm:$0xff] %vm407, %v631
  %648 = vst.msk [vmem:[%s3 + $0x30] sm:$0xff] %vm407, %v632
  %649 = vst.msk [vmem:[%s3 + $0x38] sm:$0xff] %vm407, %v633
  %650 = vst.msk [vmem:[%s3 + $0x40] sm:$0xff] %vm407, %v634
  %651 = vst.msk [vmem:[%s3 + $0x48] sm:$0xff] %vm407, %v635
  %652 = vst.msk [vmem:[%s3 + $0x50] sm:$0xff] %vm407, %v636
  %653 = vst.msk [vmem:[%s3 + $0x58] sm:$0xff] %vm407, %v637
  %654 = vst.msk [vmem:[%s3 + $0x60] sm:$0xff] %vm407, %v638
  %655 = vst.msk [vmem:[%s3 + $0x68] sm:$0xff] %vm407, %v639
  %656 = vst.msk [vmem:[%s3 + $0x70] sm:$0xff] %vm407, %v640
  %657 = vst.msk [vmem:[%s3 + $0x78] sm:$0xff] %vm407, %v641
  // Predicated region
  $region14: #{vqvae_forward.35} parent=0 // pred_check
    _
  $region15: #{vqvae_forward.35} parent=0 // pred_check_branch
    %659 = sbr.rel (0) target = $region17
  $region16: #{vqvae_forward.35} parent=0 // pred_region
    _
  $region17: #{vqvae_forward.35} parent=0 // pred_fallthru
    _
  // Predicated region
  $region18: #{vqvae_forward.35} parent=0 // pred_check
    _
  $region19: #{vqvae_forward.35} parent=0 // pred_check_branch
    %661 = sbr.rel (0) target = $region21
  $region20: #{vqvae_forward.35} parent=0 // pred_region
    _
  $region21: #{vqvae_forward.35} parent=0 // pred_fallthru
    _

// kernel: vqvae_forward.36
$region0: #{vqvae_forward.36}
  #allocation0 [shape = 'u32[]', space=smem, size = 0x4, offset = 0x4, fixed_abs, tag = 'smem constant byte address 0x4 - core index']
  #allocation1 [shape = 'u32[144,128]{1,0:T(1,128)}', space=vmem, size = 0x12000, scoped, tag = 'internal scratch']
  %s0 = inlined_call_operand.vmem [shape: bf16[128,288], index: 0, kind: input, shape index: {}]
  %s1 = inlined_call_operand.vmem [shape: bf16[288,128], index: 1, kind: input, shape index: {}]
  %s2 = inlined_call_operand.vmem [shape: f32[128,1], index: 2, kind: input, shape index: {}]
  %s3 = inlined_call_operand.vmem [shape: f32[128,128], index: 3, kind: output, shape index: {}]
  %s4 = sld [smem:[#allocation0]]
  $region22: #{vqvae_forward.36} parent=0
    _
  %s6 = ssub.s32 1, %s4
  %s7 = scalar_select 0, %s6, %s4
  // Predicated region
  $region2: #{vqvae_forward.36} parent=0 // pred_check
    _
  $region3: #{vqvae_forward.36} parent=0 // pred_check_branch
    %9 = sbr.rel (0) target = $region5
  $region4: #{vqvae_forward.36} parent=0 // pred_region
    _
  $region5: #{vqvae_forward.36} parent=0 // pred_fallthru
    _
  // Predicated region
  $region6: #{vqvae_forward.36} parent=0 // pred_check
    _
  $region7: #{vqvae_forward.36} parent=0 // pred_check_branch
    %11 = sbr.rel (0) target = $region9
  $region8: #{vqvae_forward.36} parent=0 // pred_region
    _
  $region9: #{vqvae_forward.36} parent=0 // pred_fallthru
    _
  // Predicated region
  $region10: #{vqvae_forward.36} parent=0 // pred_check
    _
  $region11: #{vqvae_forward.36} parent=0 // pred_check_branch
    %13 = sbr.rel (0) target = $region13
  $region12: #{vqvae_forward.36} parent=0 // pred_region
    _
  $region13: #{vqvae_forward.36} parent=0 // pred_fallthru
    _
  %v15 = vld [vmem:[%s1] sm:$0xf]
  %v16 = vld [vmem:[%s1 + $0x4] sm:$0xf]
  %v17 = vld [vmem:[%s1 + $0x8] sm:$0xf]
  %v18 = vld [vmem:[%s1 + $0xc] sm:$0xf]
  %v19 = vld [vmem:[%s1 + $0x10] sm:$0xf]
  %v20 = vld [vmem:[%s1 + $0x14] sm:$0xf]
  %v21 = vld [vmem:[%s1 + $0x18] sm:$0xf]
  %v22 = vld [vmem:[%s1 + $0x1c] sm:$0xf]
  %v23 = vld [vmem:[%s1 + $0x20] sm:$0xf]
  %v24 = vld [vmem:[%s1 + $0x24] sm:$0xf]
  %v25 = vld [vmem:[%s1 + $0x28] sm:$0xf]
  %v26 = vld [vmem:[%s1 + $0x2c] sm:$0xf]
  %v27 = vld [vmem:[%s1 + $0x30] sm:$0xf]
  %v28 = vld [vmem:[%s1 + $0x34] sm:$0xf]
  %v29 = vld [vmem:[%s1 + $0x38] sm:$0xf]
  %v30 = vld [vmem:[%s1 + $0x3c] sm:$0xf]
  %v31 = vld [vmem:[%s1 + $0x40] sm:$0xf]
  %v32 = vld [vmem:[%s1 + $0x44] sm:$0xf]
  %v33 = vld [vmem:[%s1 + $0x48] sm:$0xf]
  %v34 = vld [vmem:[%s1 + $0x4c] sm:$0xf]
  %v35 = vld [vmem:[%s1 + $0x50] sm:$0xf]
  %v36 = vld [vmem:[%s1 + $0x54] sm:$0xf]
  %v37 = vld [vmem:[%s1 + $0x58] sm:$0xf]
  %v38 = vld [vmem:[%s1 + $0x5c] sm:$0xf]
  %v39 = vld [vmem:[%s1 + $0x60] sm:$0xf]
  %v40 = vld [vmem:[%s1 + $0x64] sm:$0xf]
  %v41 = vld [vmem:[%s1 + $0x68] sm:$0xf]
  %v42 = vld [vmem:[%s1 + $0x6c] sm:$0xf]
  %v43 = vld [vmem:[%s1 + $0x70] sm:$0xf]
  %v44 = vld [vmem:[%s1 + $0x74] sm:$0xf]
  %v45 = vld [vmem:[%s1 + $0x78] sm:$0xf]
  %v46 = vld [vmem:[%s1 + $0x7c] sm:$0xf]
  %v47 = vld [vmem:[%s1 + $0x80] sm:$0xf]
  %v48 = vld [vmem:[%s1 + $0x84] sm:$0xf]
  %v49 = vld [vmem:[%s1 + $0x88] sm:$0xf]
  %v50 = vld [vmem:[%s1 + $0x8c] sm:$0xf]
  %v51 = vld [vmem:[%s0] sm:$0xff]
  %v52 = vld [vmem:[%s0 + $0x8] sm:$0xf]
  %v53 = vld [vmem:[%s0 + $0xc] sm:$0xff]
  %v54 = vld [vmem:[%s0 + $0x14] sm:$0xf]
  %v55 = vld [vmem:[%s0 + $0x18] sm:$0xff]
  %v56 = vld [vmem:[%s0 + $0x20] sm:$0xf]
  %v57 = vld [vmem:[%s0 + $0x24] sm:$0xff]
  %v58 = vld [vmem:[%s0 + $0x2c] sm:$0xf]
  %v59 = vld [vmem:[%s0 + $0x30] sm:$0xff]
  %v60 = vld [vmem:[%s0 + $0x38] sm:$0xf]
  %v61 = vld [vmem:[%s0 + $0x3c] sm:$0xff]
  %v62 = vld [vmem:[%s0 + $0x44] sm:$0xf]
  %v63 = vld [vmem:[%s0 + $0x48] sm:$0xff]
  %v64 = vld [vmem:[%s0 + $0x50] sm:$0xf]
  %v65 = vld [vmem:[%s0 + $0x54] sm:$0xff]
  %v66 = vld [vmem:[%s0 + $0x5c] sm:$0xf]
  %v67 = vld [vmem:[%s0 + $0x60] sm:$0xff]
  %v68 = vld [vmem:[%s0 + $0x68] sm:$0xf]
  %v69 = vld [vmem:[%s0 + $0x6c] sm:$0xff]
  %v70 = vld [vmem:[%s0 + $0x74] sm:$0xf]
  %v71 = vld [vmem:[%s0 + $0x78] sm:$0xff]
  %v72 = vld [vmem:[%s0 + $0x80] sm:$0xf]
  %v73 = vld [vmem:[%s0 + $0x84] sm:$0xff]
  %v74 = vld [vmem:[%s0 + $0x8c] sm:$0xf]
  %v75 = vld [vmem:[%s0 + $0x90] sm:$0xff]
  %v76 = vld [vmem:[%s0 + $0x98] sm:$0xf]
  %v77 = vld [vmem:[%s0 + $0x9c] sm:$0xff]
  %v78 = vld [vmem:[%s0 + $0xa4] sm:$0xf]
  %v79 = vld [vmem:[%s0 + $0xa8] sm:$0xff]
  %v80 = vld [vmem:[%s0 + $0xb0] sm:$0xf]
  %v81 = vld [vmem:[%s0 + $0xb4] sm:$0xff]
  %v82 = vld [vmem:[%s0 + $0xbc] sm:$0xf]
  %v83 = vld [vmem:[%s2] sm:$0xff]
  %v84 = vld [vmem:[%s2 + $0x8] sm:$0xff]
  %v85 = vld [vmem:[%s2 + $0x10] sm:$0xff]
  %v86 = vld [vmem:[%s2 + $0x18] sm:$0xff]
  %v87 = vld [vmem:[%s2 + $0x20] sm:$0xff]
  %v88 = vld [vmem:[%s2 + $0x28] sm:$0xff]
  %v89 = vld [vmem:[%s2 + $0x30] sm:$0xff]
  %v90 = vld [vmem:[%s2 + $0x38] sm:$0xff]
  %v91 = vld [vmem:[%s2 + $0x40] sm:$0xff]
  %v92 = vld [vmem:[%s2 + $0x48] sm:$0xff]
  %v93 = vld [vmem:[%s2 + $0x50] sm:$0xff]
  %v94 = vld [vmem:[%s2 + $0x58] sm:$0xff]
  %v95 = vld [vmem:[%s2 + $0x60] sm:$0xff]
  %v96 = vld [vmem:[%s2 + $0x68] sm:$0xff]
  %v97 = vld [vmem:[%s2 + $0x70] sm:$0xff]
  %v98 = vld [vmem:[%s2 + $0x78] sm:$0xff]
  %100 = vset.pattern.permute.xlu0 0
  %101 = vperm.xlu0 %100, %v83
  %v102 = vpop.permute.xlu0 %101
  %105 = vset.pattern.permute.xlu0 0
  %106 = vperm.xlu0 %105, %v84
  %v107 = vpop.permute.xlu0 %106
  %110 = vset.pattern.permute.xlu0 0
  %111 = vperm.xlu0 %110, %v85
  %v112 = vpop.permute.xlu0 %111
  %115 = vset.pattern.permute.xlu0 0
  %116 = vperm.xlu0 %115, %v86
  %v117 = vpop.permute.xlu0 %116
  %120 = vset.pattern.permute.xlu0 0
  %121 = vperm.xlu0 %120, %v87
  %v122 = vpop.permute.xlu0 %121
  %125 = vset.pattern.permute.xlu0 0
  %126 = vperm.xlu0 %125, %v88
  %v127 = vpop.permute.xlu0 %126
  %130 = vset.pattern.permute.xlu0 0
  %131 = vperm.xlu0 %130, %v89
  %v132 = vpop.permute.xlu0 %131
  %135 = vset.pattern.permute.xlu0 0
  %136 = vperm.xlu0 %135, %v90
  %v137 = vpop.permute.xlu0 %136
  %140 = vset.pattern.permute.xlu0 0
  %141 = vperm.xlu0 %140, %v91
  %v142 = vpop.permute.xlu0 %141
  %145 = vset.pattern.permute.xlu0 0
  %146 = vperm.xlu0 %145, %v92
  %v147 = vpop.permute.xlu0 %146
  %150 = vset.pattern.permute.xlu0 0
  %151 = vperm.xlu0 %150, %v93
  %v152 = vpop.permute.xlu0 %151
  %155 = vset.pattern.permute.xlu0 0
  %156 = vperm.xlu0 %155, %v94
  %v157 = vpop.permute.xlu0 %156
  %160 = vset.pattern.permute.xlu0 0
  %161 = vperm.xlu0 %160, %v95
  %v162 = vpop.permute.xlu0 %161
  %165 = vset.pattern.permute.xlu0 0
  %166 = vperm.xlu0 %165, %v96
  %v167 = vpop.permute.xlu0 %166
  %170 = vset.pattern.permute.xlu0 0
  %171 = vperm.xlu0 %170, %v97
  %v172 = vpop.permute.xlu0 %171
  %175 = vset.pattern.permute.xlu0 0
  %176 = vperm.xlu0 %175, %v98
  %v177 = vpop.permute.xlu0 %176
  %v211 = vunpack.c.l.b16 %v51
  %v212 = vunpack.c.h.b16 %v51
  %v213 = vunpack.c.l.b16 %v52
  %v214 = vunpack.c.l.b16 %v53
  %v215 = vunpack.c.h.b16 %v53
  %v216 = vunpack.c.l.b16 %v54
  %v217 = vunpack.c.l.b16 %v55
  %v218 = vunpack.c.h.b16 %v55
  %v219 = vunpack.c.l.b16 %v56
  %v220 = vunpack.c.l.b16 %v57
  %v221 = vunpack.c.h.b16 %v57
  %v222 = vunpack.c.l.b16 %v58
  %v223 = vunpack.c.l.b16 %v59
  %v224 = vunpack.c.h.b16 %v59
  %v225 = vunpack.c.l.b16 %v60
  %v226 = vunpack.c.l.b16 %v61
  %v227 = vunpack.c.h.b16 %v61
  %v228 = vunpack.c.l.b16 %v62
  %v229 = vunpack.c.l.b16 %v63
  %v230 = vunpack.c.h.b16 %v63
  %v231 = vunpack.c.l.b16 %v64
  %v232 = vunpack.c.l.b16 %v65
  %v233 = vunpack.c.h.b16 %v65
  %v234 = vunpack.c.l.b16 %v66
  %v235 = vunpack.c.l.b16 %v67
  %v236 = vunpack.c.h.b16 %v67
  %v237 = vunpack.c.l.b16 %v68
  %v238 = vunpack.c.l.b16 %v69
  %v239 = vunpack.c.h.b16 %v69
  %v240 = vunpack.c.l.b16 %v70
  %v241 = vunpack.c.l.b16 %v71
  %v242 = vunpack.c.h.b16 %v71
  %v243 = vunpack.c.l.b16 %v72
  %v244 = vunpack.c.l.b16 %v73
  %v245 = vunpack.c.h.b16 %v73
  %v246 = vunpack.c.l.b16 %v74
  %v247 = vunpack.c.l.b16 %v75
  %v248 = vunpack.c.h.b16 %v75
  %v249 = vunpack.c.l.b16 %v76
  %v250 = vunpack.c.l.b16 %v77
  %v251 = vunpack.c.h.b16 %v77
  %v252 = vunpack.c.l.b16 %v78
  %v253 = vunpack.c.l.b16 %v79
  %v254 = vunpack.c.h.b16 %v79
  %v255 = vunpack.c.l.b16 %v80
  %v256 = vunpack.c.l.b16 %v81
  %v257 = vunpack.c.h.b16 %v81
  %v258 = vunpack.c.l.b16 %v82
  %v259 = vpack.c.b16 %v214, %v211
  %v260 = vpack.c.b16 %v215, %v212
  %v261 = vpack.c.b16 %v216, %v213
  %v262 = vpack.c.b16 %v220, %v217
  %v263 = vpack.c.b16 %v221, %v218
  %v264 = vpack.c.b16 %v222, %v219
  %v265 = vpack.c.b16 %v226, %v223
  %v266 = vpack.c.b16 %v227, %v224
  %v267 = vpack.c.b16 %v228, %v225
  %v268 = vpack.c.b16 %v232, %v229
  %v269 = vpack.c.b16 %v233, %v230
  %v270 = vpack.c.b16 %v234, %v231
  %v271 = vpack.c.b16 %v238, %v235
  %v272 = vpack.c.b16 %v239, %v236
  %v273 = vpack.c.b16 %v240, %v237
  %v274 = vpack.c.b16 %v244, %v241
  %v275 = vpack.c.b16 %v245, %v242
  %v276 = vpack.c.b16 %v246, %v243
  %v277 = vpack.c.b16 %v250, %v247
  %v278 = vpack.c.b16 %v251, %v248
  %v279 = vpack.c.b16 %v252, %v249
  %v280 = vpack.c.b16 %v256, %v253
  %v281 = vpack.c.b16 %v257, %v254
  %v282 = vpack.c.b16 %v258, %v255
  %v335 = vunpack.c.l.b16 %v15
  %v336 = vunpack.c.l.b16 %v16
  %v337 = vunpack.c.l.b16 %v17
  %v338 = vunpack.c.l.b16 %v18
  %v339 = vunpack.c.l.b16 %v19
  %v340 = vunpack.c.l.b16 %v20
  %v341 = vunpack.c.l.b16 %v21
  %v342 = vunpack.c.l.b16 %v22
  %v343 = vunpack.c.l.b16 %v23
  %v344 = vunpack.c.l.b16 %v24
  %v345 = vunpack.c.l.b16 %v25
  %v346 = vunpack.c.l.b16 %v26
  %v347 = vunpack.c.l.b16 %v27
  %v348 = vunpack.c.l.b16 %v28
  %v349 = vunpack.c.l.b16 %v29
  %v350 = vunpack.c.l.b16 %v30
  %v351 = vunpack.c.l.b16 %v31
  %v352 = vunpack.c.l.b16 %v32
  %v353 = vunpack.c.l.b16 %v33
  %v354 = vunpack.c.l.b16 %v34
  %v355 = vunpack.c.l.b16 %v35
  %v356 = vunpack.c.l.b16 %v36
  %v357 = vunpack.c.l.b16 %v37
  %v358 = vunpack.c.l.b16 %v38
  %v359 = vunpack.c.l.b16 %v39
  %v360 = vunpack.c.l.b16 %v40
  %v361 = vunpack.c.l.b16 %v41
  %v362 = vunpack.c.l.b16 %v42
  %v363 = vunpack.c.l.b16 %v43
  %v364 = vunpack.c.l.b16 %v44
  %v365 = vunpack.c.l.b16 %v45
  %v366 = vunpack.c.l.b16 %v46
  %v367 = vunpack.c.l.b16 %v47
  %v368 = vunpack.c.l.b16 %v48
  %v369 = vunpack.c.l.b16 %v49
  %v370 = vunpack.c.l.b16 %v50
  %v371 = vpack.c.b16 %v336, %v335
  %v372 = vpack.c.b16 %v338, %v337
  %v373 = vpack.c.b16 %v340, %v339
  %v374 = vpack.c.b16 %v342, %v341
  %v375 = vpack.c.b16 %v344, %v343
  %v376 = vpack.c.b16 %v346, %v345
  %v377 = vpack.c.b16 %v348, %v347
  %v378 = vpack.c.b16 %v350, %v349
  %v379 = vpack.c.b16 %v352, %v351
  %v380 = vpack.c.b16 %v354, %v353
  %v381 = vpack.c.b16 %v356, %v355
  %v382 = vpack.c.b16 %v358, %v357
  %v383 = vpack.c.b16 %v360, %v359
  %v384 = vpack.c.b16 %v362, %v361
  %v385 = vpack.c.b16 %v364, %v363
  %v386 = vpack.c.b16 %v366, %v365
  %v387 = vpack.c.b16 %v368, %v367
  %v388 = vpack.c.b16 %v370, %v369
  %vm407 = vcmask 261120
  %v409 = vsel %vm407, %v261, 0
  %v412 = vsel %vm407, %v264, 0
  %v415 = vsel %vm407, %v267, 0
  %v418 = vsel %vm407, %v270, 0
  %v421 = vsel %vm407, %v273, 0
  %v424 = vsel %vm407, %v276, 0
  %v427 = vsel %vm407, %v279, 0
  %v430 = vsel %vm407, %v282, 0
  %432 = vmatprep.subr.bf16.mxu0 0
  %433 = vmatpush1.bf16.msra.mxu0 %v378
  %434 = vmatprep.subr.bf16.mxu0 0
  %435 = vmatpush1.bf16.msra.mxu0 %v377
  %436 = vmatprep.subr.bf16.mxu0 0
  %437 = vmatpush1.bf16.msra.mxu0 %v376
  %438 = vmatprep.subr.bf16.mxu0 0
  %439 = vmatpush1.bf16.msra.mxu0 %v375
  %440 = vmatprep.subr.bf16.mxu0 0
  %441 = vmatpush1.bf16.msra.mxu0 %v374
  %442 = vmatprep.subr.bf16.mxu0 0
  %443 = vmatpush1.bf16.msra.mxu0 %v373
  %444 = vmatprep.subr.bf16.mxu0 0
  %445 = vmatpush1.bf16.msra.mxu0 %v372
  %446 = vmatprep.subr.bf16.mxu0 0
  %447 = vmatpush1.bf16.msra.mxu0 %v371
  %448 = vmatprep.subr.bf16.mxu0 0
  %449 = vmatpush2.bf16.msra.mxu0 %v386
  %450 = vmatprep.subr.bf16.mxu0 0
  %451 = vmatpush2.bf16.msra.mxu0 %v385
  %452 = vmatprep.subr.bf16.mxu0 0
  %453 = vmatpush2.bf16.msra.mxu0 %v384
  %454 = vmatprep.subr.bf16.mxu0 0
  %455 = vmatpush2.bf16.msra.mxu0 %v383
  %456 = vmatprep.subr.bf16.mxu0 0
  %457 = vmatpush2.bf16.msra.mxu0 %v382
  %458 = vmatprep.subr.bf16.mxu0 0
  %459 = vmatpush2.bf16.msra.mxu0 %v381
  %460 = vmatprep.subr.bf16.mxu0 0
  %461 = vmatpush2.bf16.msra.mxu0 %v380
  %462 = vmatprep.subr.bf16.mxu0 0
  %463 = vmatpush2.bf16.msra.mxu0 %v379
  %464 = vmatprep.mubr.bf16.mxu0 %v260
  %465 = vmatmul.mubr.bf16.gmra.mxu0 %v259
  %v466 = vpop.f32.mrf.mxu0
  %v467 = vadd.f32 %v102, %v466
  %v468 = vpop.f32.mrf.mxu0
  %v469 = vpop.f32.mrf.mxu0
  %v470 = vadd.f32 %v107, %v469
  %v471 = vpop.f32.mrf.mxu0
  %472 = vmatprep.mubr.bf16.mxu0 %v263
  %473 = vmatmul.mubr.bf16.gmra.mxu0 %v262
  %v474 = vpop.f32.mrf.mxu0
  %v475 = vadd.f32 %v112, %v474
  %v476 = vpop.f32.mrf.mxu0
  %v477 = vpop.f32.mrf.mxu0
  %v478 = vadd.f32 %v117, %v477
  %v479 = vpop.f32.mrf.mxu0
  %480 = vmatprep.mubr.bf16.mxu0 %v266
  %481 = vmatmul.mubr.bf16.gmra.mxu0 %v265
  %v482 = vpop.f32.mrf.mxu0
  %v483 = vadd.f32 %v122, %v482
  %v484 = vpop.f32.mrf.mxu0
  %v485 = vpop.f32.mrf.mxu0
  %v486 = vadd.f32 %v127, %v485
  %v487 = vpop.f32.mrf.mxu0
  %488 = vmatprep.mubr.bf16.mxu0 %v269
  %489 = vmatmul.mubr.bf16.gmra.mxu0 %v268
  %v490 = vpop.f32.mrf.mxu0
  %v491 = vadd.f32 %v132, %v490
  %v492 = vpop.f32.mrf.mxu0
  %v493 = vpop.f32.mrf.mxu0
  %v494 = vadd.f32 %v137, %v493
  %v495 = vpop.f32.mrf.mxu0
  %496 = vmatprep.mubr.bf16.mxu0 %v272
  %497 = vmatmul.mubr.bf16.gmra.mxu0 %v271
  %v498 = vpop.f32.mrf.mxu0
  %v499 = vadd.f32 %v142, %v498
  %v500 = vpop.f32.mrf.mxu0
  %v501 = vpop.f32.mrf.mxu0
  %v502 = vadd.f32 %v147, %v501
  %v503 = vpop.f32.mrf.mxu0
  %504 = vmatprep.mubr.bf16.mxu0 %v275
  %505 = vmatmul.mubr.bf16.gmra.mxu0 %v274
  %v506 = vpop.f32.mrf.mxu0
  %v507 = vadd.f32 %v152, %v506
  %v508 = vpop.f32.mrf.mxu0
  %v509 = vpop.f32.mrf.mxu0
  %v510 = vadd.f32 %v157, %v509
  %v511 = vpop.f32.mrf.mxu0
  %512 = vmatprep.mubr.bf16.mxu0 %v278
  %513 = vmatmul.mubr.bf16.gmra.mxu0 %v277
  %v514 = vpop.f32.mrf.mxu0
  %v515 = vadd.f32 %v162, %v514
  %v516 = vpop.f32.mrf.mxu0
  %v517 = vpop.f32.mrf.mxu0
  %v518 = vadd.f32 %v167, %v517
  %v519 = vpop.f32.mrf.mxu0
  %520 = vmatprep.mubr.bf16.mxu0 %v281
  %521 = vmatmul.mubr.bf16.gmra.mxu0 %v280
  %v522 = vpop.f32.mrf.mxu0
  %v523 = vadd.f32 %v172, %v522
  %v524 = vpop.f32.mrf.mxu0
  %v525 = vpop.f32.mrf.mxu0
  %v526 = vadd.f32 %v177, %v525
  %v527 = vpop.f32.mrf.mxu0
  %528 = vdwg.mxu0
  %529 = vmatprep.subr.bf16.mxu0 0
  %530 = vmatpush1.bf16.msra.mxu0 0
  %531 = vmatprep.subr.bf16.mxu0 0
  %532 = vmatpush1.bf16.msra.mxu0 0
  %533 = vmatprep.subr.bf16.mxu0 0
  %534 = vmatpush1.bf16.msra.mxu0 0
  %535 = vmatprep.subr.bf16.mxu0 0
  %536 = vmatpush1.bf16.msra.mxu0 0
  %537 = vmatprep.subr.bf16.mxu0 0
  %538 = vmatpush1.bf16.msra.mxu0 0
  %539 = vmatprep.subr.bf16.mxu0 0
  %540 = vmatpush1.bf16.msra.mxu0 0
  %541 = vmatprep.subr.bf16.mxu0 0
  %542 = vmatpush1.bf16.msra.mxu0 %v388
  %543 = vmatprep.subr.bf16.mxu0 0
  %544 = vmatpush1.bf16.msra.mxu0 %v387
  %545 = vmatprep.subr.bf16.mxu0 0
  %546 = vmatpush2.bf16.msra.mxu0 0
  %547 = vmatprep.subr.bf16.mxu0 0
  %548 = vmatpush2.bf16.msra.mxu0 0
  %549 = vmatprep.subr.bf16.mxu0 0
  %550 = vmatpush2.bf16.msra.mxu0 0
  %551 = vmatprep.subr.bf16.mxu0 0
  %552 = vmatpush2.bf16.msra.mxu0 0
  %553 = vmatprep.subr.bf16.mxu0 0
  %554 = vmatpush2.bf16.msra.mxu0 0
  %555 = vmatprep.subr.bf16.mxu0 0
  %556 = vmatpush2.bf16.msra.mxu0 0
  %557 = vmatprep.subr.bf16.mxu0 0
  %558 = vmatpush2.bf16.msra.mxu0 0
  %559 = vmatprep.subr.bf16.mxu0 0
  %560 = vmatpush2.bf16.msra.mxu0 0
  %561 = vmatprep.mubr.bf16.mxu0 0
  %562 = vmatmul.mubr.bf16.gmra.mxu0 %v409
  %v563 = vpop.f32.mrf.mxu0
  %v564 = vadd.f32 %v467, %v563
  %v565 = vpop.f32.mrf.mxu0
  %v566 = vpop.f32.mrf.mxu0
  %v567 = vadd.f32 %v470, %v566
  %v568 = vpop.f32.mrf.mxu0
  %569 = vmatprep.mubr.bf16.mxu0 0
  %570 = vmatmul.mubr.bf16.gmra.mxu0 %v412
  %v571 = vpop.f32.mrf.mxu0
  %v572 = vadd.f32 %v475, %v571
  %v573 = vpop.f32.mrf.mxu0
  %v574 = vpop.f32.mrf.mxu0
  %v575 = vadd.f32 %v478, %v574
  %v576 = vpop.f32.mrf.mxu0
  %577 = vmatprep.mubr.bf16.mxu0 0
  %578 = vmatmul.mubr.bf16.gmra.mxu0 %v415
  %v579 = vpop.f32.mrf.mxu0
  %v580 = vadd.f32 %v483, %v579
  %v581 = vpop.f32.mrf.mxu0
  %v582 = vpop.f32.mrf.mxu0
  %v583 = vadd.f32 %v486, %v582
  %v584 = vpop.f32.mrf.mxu0
  %585 = vmatprep.mubr.bf16.mxu0 0
  %586 = vmatmul.mubr.bf16.gmra.mxu0 %v418
  %v587 = vpop.f32.mrf.mxu0
  %v588 = vadd.f32 %v491, %v587
  %v589 = vpop.f32.mrf.mxu0
  %v590 = vpop.f32.mrf.mxu0
  %v591 = vadd.f32 %v494, %v590
  %v592 = vpop.f32.mrf.mxu0
  %593 = vmatprep.mubr.bf16.mxu0 0
  %594 = vmatmul.mubr.bf16.gmra.mxu0 %v421
  %v595 = vpop.f32.mrf.mxu0
  %v596 = vadd.f32 %v499, %v595
  %v597 = vpop.f32.mrf.mxu0
  %v598 = vpop.f32.mrf.mxu0
  %v599 = vadd.f32 %v502, %v598
  %v600 = vpop.f32.mrf.mxu0
  %601 = vmatprep.mubr.bf16.mxu0 0
  %602 = vmatmul.mubr.bf16.gmra.mxu0 %v424
  %v603 = vpop.f32.mrf.mxu0
  %v604 = vadd.f32 %v507, %v603
  %v605 = vpop.f32.mrf.mxu0
  %v606 = vpop.f32.mrf.mxu0
  %v607 = vadd.f32 %v510, %v606
  %v608 = vpop.f32.mrf.mxu0
  %609 = vmatprep.mubr.bf16.mxu0 0
  %610 = vmatmul.mubr.bf16.gmra.mxu0 %v427
  %v611 = vpop.f32.mrf.mxu0
  %v612 = vadd.f32 %v515, %v611
  %v613 = vpop.f32.mrf.mxu0
  %v614 = vpop.f32.mrf.mxu0
  %v615 = vadd.f32 %v518, %v614
  %v616 = vpop.f32.mrf.mxu0
  %617 = vmatprep.mubr.bf16.mxu0 0
  %618 = vmatmul.mubr.bf16.gmra.mxu0 %v430
  %v619 = vpop.f32.mrf.mxu0
  %v620 = vadd.f32 %v523, %v619
  %v621 = vpop.f32.mrf.mxu0
  %v622 = vpop.f32.mrf.mxu0
  %v623 = vadd.f32 %v526, %v622
  %v624 = vpop.f32.mrf.mxu0
  %625 = vdwg.mxu0
  %v626 = vmax.f32 %v564, 0.0
  %v627 = vmax.f32 %v567, 0.0
  %v628 = vmax.f32 %v572, 0.0
  %v629 = vmax.f32 %v575, 0.0
  %v630 = vmax.f32 %v580, 0.0
  %v631 = vmax.f32 %v583, 0.0
  %v632 = vmax.f32 %v588, 0.0
  %v633 = vmax.f32 %v591, 0.0
  %v634 = vmax.f32 %v596, 0.0
  %v635 = vmax.f32 %v599, 0.0
  %v636 = vmax.f32 %v604, 0.0
  %v637 = vmax.f32 %v607, 0.0
  %v638 = vmax.f32 %v612, 0.0
  %v639 = vmax.f32 %v615, 0.0
  %v640 = vmax.f32 %v620, 0.0
  %v641 = vmax.f32 %v623, 0.0
  %642 = vst [vmem:[%s3] sm:$0xff] %v626
  %643 = vst [vmem:[%s3 + $0x8] sm:$0xff] %v627
  %644 = vst [vmem:[%s3 + $0x10] sm:$0xff] %v628
  %645 = vst [vmem:[%s3 + $0x18] sm:$0xff] %v629
  %646 = vst [vmem:[%s3 + $0x20] sm:$0xff] %v630
  %647 = vst [vmem:[%s3 + $0x28] sm:$0xff] %v631
  %648 = vst [vmem:[%s3 + $0x30] sm:$0xff] %v632
  %649 = vst [vmem:[%s3 + $0x38] sm:$0xff] %v633
  %650 = vst [vmem:[%s3 + $0x40] sm:$0xff] %v634
  %651 = vst [vmem:[%s3 + $0x48] sm:$0xff] %v635
  %652 = vst [vmem:[%s3 + $0x50] sm:$0xff] %v636
  %653 = vst [vmem:[%s3 + $0x58] sm:$0xff] %v637
  %654 = vst [vmem:[%s3 + $0x60] sm:$0xff] %v638
  %655 = vst [vmem:[%s3 + $0x68] sm:$0xff] %v639
  %656 = vst [vmem:[%s3 + $0x70] sm:$0xff] %v640
  %657 = vst [vmem:[%s3 + $0x78] sm:$0xff] %v641
  // Predicated region
  $region14: #{vqvae_forward.36} parent=0 // pred_check
    _
  $region15: #{vqvae_forward.36} parent=0 // pred_check_branch
    %659 = sbr.rel (0) target = $region17
  $region16: #{vqvae_forward.36} parent=0 // pred_region
    _
  $region17: #{vqvae_forward.36} parent=0 // pred_fallthru
    _
  // Predicated region
  $region18: #{vqvae_forward.36} parent=0 // pred_check
    _
  $region19: #{vqvae_forward.36} parent=0 // pred_check_branch
    %661 = sbr.rel (0) target = $region21
  $region20: #{vqvae_forward.36} parent=0 // pred_region
    _
  $region21: #{vqvae_forward.36} parent=0 // pred_fallthru
    _

// kernel: tile.38
$region0: #{tile.38}
  #allocation0 [shape = 's32[1]{0}', space=sflag, size = 0x4, scoped, tag = 'scoped memory for tile.38']
  %s0 = inlined_call_operand.vmem [shape: f32[3], index: 0, kind: input, shape index: {}]
  %s1 = inlined_call_operand.vmem [shape: f32[4,3], index: 1, kind: output, shape index: {}]
  // Predicated region
  $region2: #{tile.38} parent=0 // pred_check
    _
  $region3: #{tile.38} parent=0 // pred_check_branch
    %3 = sbr.rel (0) target = $region5
  $region4: #{tile.38} parent=0 // pred_region
    _
  $region5: #{tile.38} parent=0 // pred_fallthru
    _
  %v4 = vld [vmem:[%s0] ss:$0 sm:$0xff]
  %5 = vst [vmem:[%s1] sm:$0xf] %v4

// kernel: tile.3
$region0: #{tile.3}
  %s0 = inlined_call_operand.vmem [shape: f32[4,3], index: 0, kind: input, shape index: {}]
  %s1 = inlined_call_operand.vmem [shape: f32[12,1], index: 1, kind: output, shape index: {}]
  $region1: #{tile.3} parent=0
    #allocation0 [shape = 'u8[4096]{0}', space=vmem, size = 0x1000, scoped, tag = 'scoped mem for input reshape']
    %s3 = sshll.u32 1, 4
    %s4 = ssub.s32 %s3, 1
    %v5 = vld [vmem:[%s0] sm:%s4]
    %6 = vst [vmem:[#allocation0] sm:%s4] %v5
    %v7 = vld [vmem:[#allocation0] sm:$0xf]
    %vm8 = vcmask 7168
    %9 = vst.msk [vmem:[%s1] ss:$3 sm:$0xf] %vm8, %v7
    %v10 = vld [vmem:[#allocation0] sm:$0xf]
    %11 = vrot.lane.b32.xlu0 %v10, 127
    %v12 = vpop.permute.xlu0 %11
    %vm13 = vcmask 7168
    %s14 = scalar_lea.vmem %s1, 1
    %15 = vst.msk [vmem:[%s14] ss:$3 sm:$0xf] %vm13, %v12
    %v16 = vld [vmem:[#allocation0] sm:$0xf]
    %17 = vrot.lane.b32.xlu0 %v16, 126
    %v18 = vpop.permute.xlu0 %17
    %vm19 = vcmask 7168
    %s20 = scalar_lea.vmem %s1, 2
    %21 = vst.msk [vmem:[%s20] ss:$3 sm:$0xf] %vm19, %v18

// kernel: vqvae_forward.37
$region0: #{vqvae_forward.37}
  #allocation0 [shape = 'u32[]', space=smem, size = 0x4, offset = 0x4, fixed_abs, tag = 'smem constant byte address 0x4 - core index']
  #allocation1 [shape = 'u32[144,128]{1,0:T(1,128)}', space=vmem, size = 0x12000, scoped, tag = 'internal scratch']
  %s0 = inlined_call_operand.vmem [shape: bf16[12,288], index: 0, kind: input, shape index: {}]
  %s1 = inlined_call_operand.vmem [shape: bf16[288,512], index: 1, kind: input, shape index: {}]
  %s2 = inlined_call_operand.vmem [shape: f32[12,1], index: 2, kind: input, shape index: {}]
  %s3 = inlined_call_operand.vmem [shape: f32[12,512], index: 3, kind: output, shape index: {}]
  %s4 = sld [smem:[#allocation0]]
  $region102: #{vqvae_forward.37} parent=0
    _
  %s6 = ssub.s32 1, %s4
  %s7 = scalar_select 0, %s6, %s4
  $region1: #{vqvae_forward.37} parent=0
    #allocation2 [shape = 'u8[294912]{0}', space=vmem, size = 0x48000, scoped, tag = 'input window, operand 1']
    #allocation3 [shape = 'u8[32768]{0}', space=vmem, size = 0x8000, scoped, tag = 'output window, operand 0']
    loop: start=0, step=1, limit=4
    $region2: #{vqvae_forward.37} parent=1 // loop_pre_header
      _
    $region3: #{vqvae_forward.37} parent=1 // loop_header
      %s9 = sphi 0, %s13
      %p10 = scmp.ge.s32.totalorder %s9, 4
      %s17 = sphi 0, %s17
      %s19 = sphi 0, %s17
      %s20 = sphi 0, %s19
      %s34 = sphi 0, %s20
      %s40 = sphi 0, %s42
      %s43 = sphi 0, %s40
      %s44 = sphi 0, %s43
      %s60 = sphi 0, %s44
      %s64 = sphi 0, %s64
      %s66 = sphi 0, %s64
      %s67 = sphi 0, %s66
      %s81 = sphi 0, %s67
      %s87 = sphi 0, %s89
      %s90 = sphi 0, %s87
      %s91 = sphi 0, %s90
      %s107 = sphi 0, %s91
    $region4: #{vqvae_forward.37} parent=1 // loop_header_branch
      %12 = sbr.rel (%p10) target = $region8
    $region5: #{vqvae_forward.37} parent=1 // loop_body
      %s14 = ssub.s32 %s9, 1
      %s15 = ssub.s32 %s9, 2
      %s16 = sadd.s32 %s9, 1
      %s18 = sadd.s32 %s17, 1
      %p21 = scmp.eq.s32.totalorder %s9, 1
      %p22 = scmp.ne.s32.totalorder %s17, %s19
      %p23 = scmp.eq.s32.totalorder %s9, 0
      %p24 = por %p22, %p23
      %p25 = scmp.ne.s32.totalorder %s17, %s19
      %p26 = scmp.eq.s32.totalorder %s14, 1
      %p27 = por %p25, %p26
      %p28 = scmp.ne.s32.totalorder %s19, %s20
      %p29 = scmp.eq.s32.totalorder %s14, 0
      %p30 = por %p28, %p29
      %p31 = scmp.ne.s32.totalorder %s19, %s20
      %p32 = scmp.eq.s32.totalorder %s15, 1
      %p33 = por %p31, %p32
      %p35 = scmp.ne.s32.totalorder %s20, %s34
      %p36 = scmp.eq.s32.totalorder %s15, 0
      %p37 = por %p35, %p36
      %s38 = ssub.s32 %s9, %s16
      %p39 = scmp.eq.s32.totalorder %s38, 0
      %s41 = sadd.s32 %s40, 1
      %s42 = scalar_select %p39, %s40, %s41
      %p45 = pneg %p39
      %p46 = scmp.eq.s32.totalorder %s9, 1
      %p47 = por %p45, %p46
      %p48 = scmp.ne.s32.totalorder %s40, %s43
      %p49 = scmp.eq.s32.totalorder %s9, 0
      %p50 = por %p48, %p49
      %p51 = scmp.ne.s32.totalorder %s40, %s43
      %p52 = scmp.eq.s32.totalorder %s14, 1
      %p53 = por %p51, %p52
      %p54 = scmp.ne.s32.totalorder %s43, %s44
      %p55 = scmp.eq.s32.totalorder %s14, 0
      %p56 = por %p54, %p55
      %p57 = scmp.ne.s32.totalorder %s43, %s44
      %p58 = scmp.eq.s32.totalorder %s15, 1
      %p59 = por %p57, %p58
      %p61 = scmp.ne.s32.totalorder %s44, %s60
      %p62 = scmp.eq.s32.totalorder %s15, 0
      %p63 = por %p61, %p62
      %s65 = sadd.s32 %s64, 1
      %p68 = scmp.eq.s32.totalorder %s9, 1
      %p69 = scmp.ne.s32.totalorder %s64, %s66
      %p70 = scmp.eq.s32.totalorder %s9, 0
      %p71 = por %p69, %p70
      %p72 = scmp.ne.s32.totalorder %s64, %s66
      %p73 = scmp.eq.s32.totalorder %s14, 1
      %p74 = por %p72, %p73
      %p75 = scmp.ne.s32.totalorder %s66, %s67
      %p76 = scmp.eq.s32.totalorder %s14, 0
      %p77 = por %p75, %p76
      %p78 = scmp.ne.s32.totalorder %s66, %s67
      %p79 = scmp.eq.s32.totalorder %s15, 1
      %p80 = por %p78, %p79
      %p82 = scmp.ne.s32.totalorder %s67, %s81
      %p83 = scmp.eq.s32.totalorder %s15, 0
      %p84 = por %p82, %p83
      %s85 = ssub.s32 %s9, %s16
      %p86 = scmp.eq.s32.totalorder %s85, 0
      %s88 = sadd.s32 %s87, 1
      %s89 = scalar_select %p86, %s87, %s88
      %p92 = pneg %p86
      %p93 = scmp.eq.s32.totalorder %s9, 1
      %p94 = por %p92, %p93
      %p95 = scmp.ne.s32.totalorder %s87, %s90
      %p96 = scmp.eq.s32.totalorder %s9, 0
      %p97 = por %p95, %p96
      %p98 = scmp.ne.s32.totalorder %s87, %s90
      %p99 = scmp.eq.s32.totalorder %s14, 1
      %p100 = por %p98, %p99
      %p101 = scmp.ne.s32.totalorder %s90, %s91
      %p102 = scmp.eq.s32.totalorder %s14, 0
      %p103 = por %p101, %p102
      %p104 = scmp.ne.s32.totalorder %s90, %s91
      %p105 = scmp.eq.s32.totalorder %s15, 1
      %p106 = por %p104, %p105
      %p108 = scmp.ne.s32.totalorder %s91, %s107
      %p109 = scmp.eq.s32.totalorder %s15, 0
      %p110 = por %p108, %p109
      %p111 = scmp.le.s32.totalorder 1, %s9
      %p112 = scmp.lt.s32.totalorder %s9, 3
      %p113 = pnand %p111, %p112
      %p114 = pneg %p113
      // Predicated region
      $region9: #{vqvae_forward.37} parent=5 // pred_check
        _
      $region10: #{vqvae_forward.37} parent=5 // pred_check_branch
        %116 = sbr.rel (%p113) target = $region12
      $region11: #{vqvae_forward.37} parent=5 // pred_region
        %s117 = ssub.s32 %s9, 1
        // Predicated region
        $region13: #{vqvae_forward.37} parent=11 // pred_check
          %p118 = pneg %p30
        $region14: #{vqvae_forward.37} parent=11 // pred_check_branch
          %120 = sbr.rel (%p118) target = $region16
        $region15: #{vqvae_forward.37} parent=11 // pred_region
          _
        $region16: #{vqvae_forward.37} parent=11 // pred_fallthru
          _
        // Predicated region
        $region17: #{vqvae_forward.37} parent=11 // pred_check
          %p121 = pneg %p77
        $region18: #{vqvae_forward.37} parent=11 // pred_check_branch
          %123 = sbr.rel (%p121) target = $region20
        $region19: #{vqvae_forward.37} parent=11 // pred_region
          _
        $region20: #{vqvae_forward.37} parent=11 // pred_fallthru
          _
      $region12: #{vqvae_forward.37} parent=5 // pred_fallthru
        _
      %p124 = scmp.lt.s32.totalorder %s9, 2
      // Predicated region
      $region21: #{vqvae_forward.37} parent=5 // pred_check
        %p125 = pneg %p124
      $region22: #{vqvae_forward.37} parent=5 // pred_check_branch
        %127 = sbr.rel (%p125) target = $region24
      $region23: #{vqvae_forward.37} parent=5 // pred_region
        // Predicated region
        $region25: #{vqvae_forward.37} parent=23 // pred_check
          %p128 = pneg %p50
        $region26: #{vqvae_forward.37} parent=23 // pred_check_branch
          %130 = sbr.rel (%p128) target = $region28
        $region27: #{vqvae_forward.37} parent=23 // pred_region
          %s131 = sand.u32 %s40, 1
          %s132 = sand.u32 %s40, 1
          %s133 = smul.addr %s132, 288
          %s134 = scalar_lea.vmem [#allocation2], %s133
          %s135 = smul.u32 2, %s9
          %s136 = smul.addr %s135, 4
          %s137 = scalar_lea.vmem %s1, %s136
          // Predicated region
          $region29: #{vqvae_forward.37} parent=27 // pred_check
            _
          $region30: #{vqvae_forward.37} parent=27 // pred_check_branch
            %139 = sbr.rel (0) target = $region32
          $region31: #{vqvae_forward.37} parent=27 // pred_region
            // Predicated region
            $region33: #{vqvae_forward.37} parent=31 // pred_check
              _
            $region34: #{vqvae_forward.37} parent=31 // pred_check_branch
              %141 = sbr.rel (0) target = $region36
            $region35: #{vqvae_forward.37} parent=31 // pred_region
              // Predicated region
              $region48: #{vqvae_forward.37} parent=35 // pred_check
                _
              $region49: #{vqvae_forward.37} parent=35 // pred_check_branch
                %227 = sbr.rel (0) target = $region51
              $region50: #{vqvae_forward.37} parent=35 // pred_region
                loop: start=0, step=1, limit=1
                $region52: #{vqvae_forward.37} parent=50 // loop_pre_header
                  _
                $region53: #{vqvae_forward.37} parent=50 // loop_header
                  %s229 = sphi 0, %s233
                  %p230 = scmp.ge.s32.totalorder %s229, 1
                  %s234 = sphi %s137, %s137
                  %s235 = sphi %s134, %s134
                $region54: #{vqvae_forward.37} parent=50 // loop_header_branch
                  %232 = sbr.rel (%p230) target = $region58
                $region55: #{vqvae_forward.37} parent=50 // loop_body
                  %v236 = vld [vmem:[%s234] sm:$0xff]
                  %237 = vst [vmem:[%s235] sm:$0xff] %v236
                  %v238 = vld [vmem:[%s234 + $0x10] sm:$0xff]
                  %239 = vst [vmem:[%s235 + $0x8] sm:$0xff] %v238
                  %v240 = vld [vmem:[%s234 + $0x20] sm:$0xff]
                  %241 = vst [vmem:[%s235 + $0x10] sm:$0xff] %v240
                  %v242 = vld [vmem:[%s234 + $0x30] sm:$0xff]
                  %243 = vst [vmem:[%s235 + $0x18] sm:$0xff] %v242
                  %v244 = vld [vmem:[%s234 + $0x40] sm:$0xff]
                  %245 = vst [vmem:[%s235 + $0x20] sm:$0xff] %v244
                  %v246 = vld [vmem:[%s234 + $0x50] sm:$0xff]
                  %247 = vst [vmem:[%s235 + $0x28] sm:$0xff] %v246
                  %v248 = vld [vmem:[%s234 + $0x60] sm:$0xff]
                  %249 = vst [vmem:[%s235 + $0x30] sm:$0xff] %v248
                  %v250 = vld [vmem:[%s234 + $0x70] sm:$0xff]
                  %251 = vst [vmem:[%s235 + $0x38] sm:$0xff] %v250
                  %v252 = vld [vmem:[%s234 + $0x80] sm:$0xff]
                  %253 = vst [vmem:[%s235 + $0x40] sm:$0xff] %v252
                  %v254 = vld [vmem:[%s234 + $0x90] sm:$0xff]
                  %255 = vst [vmem:[%s235 + $0x48] sm:$0xff] %v254
                  %v256 = vld [vmem:[%s234 + $0xa0] sm:$0xff]
                  %257 = vst [vmem:[%s235 + $0x50] sm:$0xff] %v256
                  %v258 = vld [vmem:[%s234 + $0xb0] sm:$0xff]
                  %259 = vst [vmem:[%s235 + $0x58] sm:$0xff] %v258
                  %v260 = vld [vmem:[%s234 + $0xc0] sm:$0xff]
                  %261 = vst [vmem:[%s235 + $0x60] sm:$0xff] %v260
                  %v262 = vld [vmem:[%s234 + $0xd0] sm:$0xff]
                  %263 = vst [vmem:[%s235 + $0x68] sm:$0xff] %v262
                  %v264 = vld [vmem:[%s234 + $0xe0] sm:$0xff]
                  %265 = vst [vmem:[%s235 + $0x70] sm:$0xff] %v264
                  %v266 = vld [vmem:[%s234 + $0xf0] sm:$0xff]
                  %267 = vst [vmem:[%s235 + $0x78] sm:$0xff] %v266
                  %v268 = vld [vmem:[%s234 + $0x100] sm:$0xff]
                  %269 = vst [vmem:[%s235 + $0x80] sm:$0xff] %v268
                  %v270 = vld [vmem:[%s234 + $0x110] sm:$0xff]
                  %271 = vst [vmem:[%s235 + $0x88] sm:$0xff] %v270
                  %v272 = vld [vmem:[%s234 + $0x120] sm:$0xff]
                  %273 = vst [vmem:[%s235 + $0x90] sm:$0xff] %v272
                  %v274 = vld [vmem:[%s234 + $0x130] sm:$0xff]
                  %275 = vst [vmem:[%s235 + $0x98] sm:$0xff] %v274
                  %v276 = vld [vmem:[%s234 + $0x140] sm:$0xff]
                  %277 = vst [vmem:[%s235 + $0xa0] sm:$0xff] %v276
                  %v278 = vld [vmem:[%s234 + $0x150] sm:$0xff]
                  %279 = vst [vmem:[%s235 + $0xa8] sm:$0xff] %v278
                  %v280 = vld [vmem:[%s234 + $0x160] sm:$0xff]
                  %281 = vst [vmem:[%s235 + $0xb0] sm:$0xff] %v280
                  %v282 = vld [vmem:[%s234 + $0x170] sm:$0xff]
                  %283 = vst [vmem:[%s235 + $0xb8] sm:$0xff] %v282
                  %v284 = vld [vmem:[%s234 + $0x180] sm:$0xff]
                  %285 = vst [vmem:[%s235 + $0xc0] sm:$0xff] %v284
                  %v286 = vld [vmem:[%s234 + $0x190] sm:$0xff]
                  %287 = vst [vmem:[%s235 + $0xc8] sm:$0xff] %v286
                  %v288 = vld [vmem:[%s234 + $0x1a0] sm:$0xff]
                  %289 = vst [vmem:[%s235 + $0xd0] sm:$0xff] %v288
                  %v290 = vld [vmem:[%s234 + $0x1b0] sm:$0xff]
                  %291 = vst [vmem:[%s235 + $0xd8] sm:$0xff] %v290
                  %v292 = vld [vmem:[%s234 + $0x1c0] sm:$0xff]
                  %293 = vst [vmem:[%s235 + $0xe0] sm:$0xff] %v292
                  %v294 = vld [vmem:[%s234 + $0x1d0] sm:$0xff]
                  %295 = vst [vmem:[%s235 + $0xe8] sm:$0xff] %v294
                  %v296 = vld [vmem:[%s234 + $0x1e0] sm:$0xff]
                  %297 = vst [vmem:[%s235 + $0xf0] sm:$0xff] %v296
                  %v298 = vld [vmem:[%s234 + $0x1f0] sm:$0xff]
                  %299 = vst [vmem:[%s235 + $0xf8] sm:$0xff] %v298
                  %v300 = vld [vmem:[%s234 + $0x200] sm:$0xff]
                  %301 = vst [vmem:[%s235 + $0x100] sm:$0xff] %v300
                  %v302 = vld [vmem:[%s234 + $0x210] sm:$0xff]
                  %303 = vst [vmem:[%s235 + $0x108] sm:$0xff] %v302
                  %v304 = vld [vmem:[%s234 + $0x220] sm:$0xff]
                  %305 = vst [vmem:[%s235 + $0x110] sm:$0xff] %v304
                  %v306 = vld [vmem:[%s234 + $0x230] sm:$0xff]
                  %307 = vst [vmem:[%s235 + $0x118] sm:$0xff] %v306
                $region56: #{vqvae_forward.37} parent=50 // loop_footer
                  %s233 = sadd.s32 1, %s229
                $region57: #{vqvae_forward.37} parent=50 // loop_footer_branch
                  %228 = sbr.rel target = $region53
                $region58: #{vqvae_forward.37} parent=50 // loop_exit
                  _
              $region51: #{vqvae_forward.37} parent=35 // pred_fallthru
                _
              // Predicated region
              $region59: #{vqvae_forward.37} parent=35 // pred_check
                _
              $region60: #{vqvae_forward.37} parent=35 // pred_check_branch
                %309 = sbr.rel target = $region62
              $region61: #{vqvae_forward.37} parent=35 // pred_region
                _
              $region62: #{vqvae_forward.37} parent=35 // pred_fallthru
                _
            $region36: #{vqvae_forward.37} parent=31 // pred_fallthru
              _
            // Predicated region
            $region37: #{vqvae_forward.37} parent=31 // pred_check
              _
            $region38: #{vqvae_forward.37} parent=31 // pred_check_branch
              %143 = sbr.rel target = $region40
            $region39: #{vqvae_forward.37} parent=31 // pred_region
              %s145 = ssub.s32 256, 1
              loop: start=0, step=1, limit=1
              $region41: #{vqvae_forward.37} parent=39 // loop_pre_header
                _
              $region42: #{vqvae_forward.37} parent=39 // loop_header
                %s147 = sphi 0, %s151
                %p148 = scmp.ge.s32.totalorder %s147, 1
                %s152 = sphi %s137, %s137
                %s153 = sphi %s134, %s134
              $region43: #{vqvae_forward.37} parent=39 // loop_header_branch
                %150 = sbr.rel (%p148) target = $region47
              $region44: #{vqvae_forward.37} parent=39 // loop_body
                %v154 = vld [vmem:[%s152] sm:%s145]
                %155 = vst [vmem:[%s153] sm:%s145] %v154
                %v156 = vld [vmem:[%s152 + $0x10] sm:%s145]
                %157 = vst [vmem:[%s153 + $0x8] sm:%s145] %v156
                %v158 = vld [vmem:[%s152 + $0x20] sm:%s145]
                %159 = vst [vmem:[%s153 + $0x10] sm:%s145] %v158
                %v160 = vld [vmem:[%s152 + $0x30] sm:%s145]
                %161 = vst [vmem:[%s153 + $0x18] sm:%s145] %v160
                %v162 = vld [vmem:[%s152 + $0x40] sm:%s145]
                %163 = vst [vmem:[%s153 + $0x20] sm:%s145] %v162
                %v164 = vld [vmem:[%s152 + $0x50] sm:%s145]
                %165 = vst [vmem:[%s153 + $0x28] sm:%s145] %v164
                %v166 = vld [vmem:[%s152 + $0x60] sm:%s145]
                %167 = vst [vmem:[%s153 + $0x30] sm:%s145] %v166
                %v168 = vld [vmem:[%s152 + $0x70] sm:%s145]
                %169 = vst [vmem:[%s153 + $0x38] sm:%s145] %v168
                %v170 = vld [vmem:[%s152 + $0x80] sm:%s145]
                %171 = vst [vmem:[%s153 + $0x40] sm:%s145] %v170
                %v172 = vld [vmem:[%s152 + $0x90] sm:%s145]
                %173 = vst [vmem:[%s153 + $0x48] sm:%s145] %v172
                %v174 = vld [vmem:[%s152 + $0xa0] sm:%s145]
                %175 = vst [vmem:[%s153 + $0x50] sm:%s145] %v174
                %v176 = vld [vmem:[%s152 + $0xb0] sm:%s145]
                %177 = vst [vmem:[%s153 + $0x58] sm:%s145] %v176
                %v178 = vld [vmem:[%s152 + $0xc0] sm:%s145]
                %179 = vst [vmem:[%s153 + $0x60] sm:%s145] %v178
                %v180 = vld [vmem:[%s152 + $0xd0] sm:%s145]
                %181 = vst [vmem:[%s153 + $0x68] sm:%s145] %v180
                %v182 = vld [vmem:[%s152 + $0xe0] sm:%s145]
                %183 = vst [vmem:[%s153 + $0x70] sm:%s145] %v182
                %v184 = vld [vmem:[%s152 + $0xf0] sm:%s145]
                %185 = vst [vmem:[%s153 + $0x78] sm:%s145] %v184
                %v186 = vld [vmem:[%s152 + $0x100] sm:%s145]
                %187 = vst [vmem:[%s153 + $0x80] sm:%s145] %v186
                %v188 = vld [vmem:[%s152 + $0x110] sm:%s145]
                %189 = vst [vmem:[%s153 + $0x88] sm:%s145] %v188
                %v190 = vld [vmem:[%s152 + $0x120] sm:%s145]
                %191 = vst [vmem:[%s153 + $0x90] sm:%s145] %v190
                %v192 = vld [vmem:[%s152 + $0x130] sm:%s145]
                %193 = vst [vmem:[%s153 + $0x98] sm:%s145] %v192
                %v194 = vld [vmem:[%s152 + $0x140] sm:%s145]
                %195 = vst [vmem:[%s153 + $0xa0] sm:%s145] %v194
                %v196 = vld [vmem:[%s152 + $0x150] sm:%s145]
                %197 = vst [vmem:[%s153 + $0xa8] sm:%s145] %v196
                %v198 = vld [vmem:[%s152 + $0x160] sm:%s145]
                %199 = vst [vmem:[%s153 + $0xb0] sm:%s145] %v198
                %v200 = vld [vmem:[%s152 + $0x170] sm:%s145]
                %201 = vst [vmem:[%s153 + $0xb8] sm:%s145] %v200
                %v202 = vld [vmem:[%s152 + $0x180] sm:%s145]
                %203 = vst [vmem:[%s153 + $0xc0] sm:%s145] %v202
                %v204 = vld [vmem:[%s152 + $0x190] sm:%s145]
                %205 = vst [vmem:[%s153 + $0xc8] sm:%s145] %v204
                %v206 = vld [vmem:[%s152 + $0x1a0] sm:%s145]
                %207 = vst [vmem:[%s153 + $0xd0] sm:%s145] %v206
                %v208 = vld [vmem:[%s152 + $0x1b0] sm:%s145]
                %209 = vst [vmem:[%s153 + $0xd8] sm:%s145] %v208
                %v210 = vld [vmem:[%s152 + $0x1c0] sm:%s145]
                %211 = vst [vmem:[%s153 + $0xe0] sm:%s145] %v210
                %v212 = vld [vmem:[%s152 + $0x1d0] sm:%s145]
                %213 = vst [vmem:[%s153 + $0xe8] sm:%s145] %v212
                %v214 = vld [vmem:[%s152 + $0x1e0] sm:%s145]
                %215 = vst [vmem:[%s153 + $0xf0] sm:%s145] %v214
                %v216 = vld [vmem:[%s152 + $0x1f0] sm:%s145]
                %217 = vst [vmem:[%s153 + $0xf8] sm:%s145] %v216
                %v218 = vld [vmem:[%s152 + $0x200] sm:%s145]
                %219 = vst [vmem:[%s153 + $0x100] sm:%s145] %v218
                %v220 = vld [vmem:[%s152 + $0x210] sm:%s145]
                %221 = vst [vmem:[%s153 + $0x108] sm:%s145] %v220
                %v222 = vld [vmem:[%s152 + $0x220] sm:%s145]
                %223 = vst [vmem:[%s153 + $0x110] sm:%s145] %v222
                %v224 = vld [vmem:[%s152 + $0x230] sm:%s145]
                %225 = vst [vmem:[%s153 + $0x118] sm:%s145] %v224
              $region45: #{vqvae_forward.37} parent=39 // loop_footer
                %s151 = sadd.s32 1, %s147
              $region46: #{vqvae_forward.37} parent=39 // loop_footer_branch
                %146 = sbr.rel target = $region42
              $region47: #{vqvae_forward.37} parent=39 // loop_exit
                _
            $region40: #{vqvae_forward.37} parent=31 // pred_fallthru
              _
          $region32: #{vqvae_forward.37} parent=27 // pred_fallthru
            _
          %310 = vnop
        $region28: #{vqvae_forward.37} parent=23 // pred_fallthru
          _
      $region24: #{vqvae_forward.37} parent=5 // pred_fallthru
        _
      %p311 = scmp.le.s32.totalorder 1, %s9
      %p312 = scmp.lt.s32.totalorder %s9, 3
      %p313 = pnand %p311, %p312
      %p314 = pneg %p313
      // Predicated region
      $region63: #{vqvae_forward.37} parent=5 // pred_check
        _
      $region64: #{vqvae_forward.37} parent=5 // pred_check_branch
        %316 = sbr.rel (%p313) target = $region66
      $region65: #{vqvae_forward.37} parent=5 // pred_region
        %s317 = ssub.s32 %s9, 1
        %s318 = sand.u32 %s43, 1
        %s319 = sand.u32 %s43, 1
        %s320 = smul.addr %s319, 288
        %s321 = scalar_lea.vmem [#allocation2], %s320
        // Predicated region
        $region67: #{vqvae_forward.37} parent=65 // pred_check
          %p322 = pneg %p56
        $region68: #{vqvae_forward.37} parent=65 // pred_check_branch
          %324 = sbr.rel (%p322) target = $region70
        $region69: #{vqvae_forward.37} parent=65 // pred_region
          _
        $region70: #{vqvae_forward.37} parent=65 // pred_fallthru
          _
        %p325 = pneg %p30
        %p326 = pneg %p27
        %s327 = sand.u32 %s43, 1
        %s328 = sand.u32 %s43, 1
        %s329 = smul.addr %s328, 288
        %s330 = scalar_lea.vmem [#allocation2], %s329
        %p331 = pneg %p56
        %p332 = pneg %p53
        %p333 = pneg %p77
        %p334 = pneg %p74
        %p335 = pneg %p103
        %p336 = pneg %p100
        %s337 = sand.u32 %s90, 1
        %s338 = sand.u32 %s90, 1
        %s339 = smul.addr %s338, 32
        %s340 = scalar_lea.vmem [#allocation3], %s339
        %s341 = smul.u32 2, %s14
        %s342 = smul.u32 2, %s14
        %v344 = vld [vmem:[%s321] sm:$0xff]
        %v345 = vld [vmem:[%s321 + $0x8] sm:$0xff]
        %v346 = vld [vmem:[%s321 + $0x10] sm:$0xff]
        %v347 = vld [vmem:[%s321 + $0x18] sm:$0xff]
        %v348 = vld [vmem:[%s321 + $0x20] sm:$0xff]
        %v349 = vld [vmem:[%s321 + $0x28] sm:$0xff]
        %v350 = vld [vmem:[%s321 + $0x30] sm:$0xff]
        %v351 = vld [vmem:[%s321 + $0x38] sm:$0xff]
        %v352 = vld [vmem:[%s321 + $0x40] sm:$0xff]
        %v353 = vld [vmem:[%s321 + $0x48] sm:$0xff]
        %v354 = vld [vmem:[%s321 + $0x50] sm:$0xff]
        %v355 = vld [vmem:[%s321 + $0x58] sm:$0xff]
        %v356 = vld [vmem:[%s321 + $0x60] sm:$0xff]
        %v357 = vld [vmem:[%s321 + $0x68] sm:$0xff]
        %v358 = vld [vmem:[%s321 + $0x70] sm:$0xff]
        %v359 = vld [vmem:[%s321 + $0x78] sm:$0xff]
        %v360 = vld [vmem:[%s321 + $0x80] sm:$0xff]
        %v361 = vld [vmem:[%s321 + $0x88] sm:$0xff]
        %v362 = vld [vmem:[%s321 + $0x90] sm:$0xff]
        %v363 = vld [vmem:[%s321 + $0x98] sm:$0xff]
        %v364 = vld [vmem:[%s321 + $0xa0] sm:$0xff]
        %v365 = vld [vmem:[%s321 + $0xa8] sm:$0xff]
        %v366 = vld [vmem:[%s321 + $0xb0] sm:$0xff]
        %v367 = vld [vmem:[%s321 + $0xb8] sm:$0xff]
        %v368 = vld [vmem:[%s321 + $0xc0] sm:$0xff]
        %v369 = vld [vmem:[%s321 + $0xc8] sm:$0xff]
        %v370 = vld [vmem:[%s321 + $0xd0] sm:$0xff]
        %v371 = vld [vmem:[%s321 + $0xd8] sm:$0xff]
        %v372 = vld [vmem:[%s321 + $0xe0] sm:$0xff]
        %v373 = vld [vmem:[%s321 + $0xe8] sm:$0xff]
        %v374 = vld [vmem:[%s321 + $0xf0] sm:$0xff]
        %v375 = vld [vmem:[%s321 + $0xf8] sm:$0xff]
        %v376 = vld [vmem:[%s321 + $0x100] sm:$0xff]
        %v377 = vld [vmem:[%s321 + $0x108] sm:$0xff]
        %v378 = vld [vmem:[%s321 + $0x110] sm:$0xff]
        %v379 = vld [vmem:[%s321 + $0x118] sm:$0xff]
        %v380 = vld [vmem:[%s0] sm:$0xff]
        %v381 = vld [vmem:[%s0 + $0x8] sm:$0xf]
        %v382 = vld [vmem:[%s0 + $0xc] sm:$0x33]
        %v383 = vld [vmem:[%s0 + $0x14] sm:$0x3]
        %v384 = vld [vmem:[%s2] sm:$0xff]
        %v385 = vld [vmem:[%s2 + $0x8] sm:$0xf]
        %387 = vset.pattern.permute.xlu0 0
        %388 = vperm.xlu0 %387, %v384
        %v389 = vpop.permute.xlu0 %388
        %392 = vset.pattern.permute.xlu0 0
        %393 = vperm.xlu0 %392, %v385
        %v394 = vpop.permute.xlu0 %393
        %v400 = vunpack.c.l.b16 %v380
        %v401 = vunpack.c.h.b16 %v380
        %v402 = vunpack.c.l.b16 %v381
        %v403 = vunpack.c.l.b16 %v382
        %v404 = vunpack.c.h.b16 %v382
        %v405 = vunpack.c.l.b16 %v383
        %v406 = vpack.c.b16 %v403, %v400
        %v407 = vpack.c.b16 %v404, %v401
        %v408 = vpack.c.b16 %v405, %v402
        %v447 = vunpack.c.l.b16 %v344
        %v448 = vunpack.c.h.b16 %v344
        %v449 = vunpack.c.l.b16 %v345
        %v450 = vunpack.c.h.b16 %v345
        %v451 = vunpack.c.l.b16 %v346
        %v452 = vunpack.c.h.b16 %v346
        %v453 = vunpack.c.l.b16 %v347
        %v454 = vunpack.c.h.b16 %v347
        %v455 = vunpack.c.l.b16 %v348
        %v456 = vunpack.c.h.b16 %v348
        %v457 = vunpack.c.l.b16 %v349
        %v458 = vunpack.c.h.b16 %v349
        %v459 = vunpack.c.l.b16 %v350
        %v460 = vunpack.c.h.b16 %v350
        %v461 = vunpack.c.l.b16 %v351
        %v462 = vunpack.c.h.b16 %v351
        %v463 = vunpack.c.l.b16 %v352
        %v464 = vunpack.c.h.b16 %v352
        %v465 = vunpack.c.l.b16 %v353
        %v466 = vunpack.c.h.b16 %v353
        %v467 = vunpack.c.l.b16 %v354
        %v468 = vunpack.c.h.b16 %v354
        %v469 = vunpack.c.l.b16 %v355
        %v470 = vunpack.c.h.b16 %v355
        %v471 = vunpack.c.l.b16 %v356
        %v472 = vunpack.c.h.b16 %v356
        %v473 = vunpack.c.l.b16 %v357
        %v474 = vunpack.c.h.b16 %v357
        %v475 = vunpack.c.l.b16 %v358
        %v476 = vunpack.c.h.b16 %v358
        %v477 = vunpack.c.l.b16 %v359
        %v478 = vunpack.c.h.b16 %v359
        %v479 = vunpack.c.l.b16 %v360
        %v480 = vunpack.c.h.b16 %v360
        %v481 = vunpack.c.l.b16 %v361
        %v482 = vunpack.c.h.b16 %v361
        %v483 = vunpack.c.l.b16 %v362
        %v484 = vunpack.c.h.b16 %v362
        %v485 = vunpack.c.l.b16 %v363
        %v486 = vunpack.c.h.b16 %v363
        %v487 = vunpack.c.l.b16 %v364
        %v488 = vunpack.c.h.b16 %v364
        %v489 = vunpack.c.l.b16 %v365
        %v490 = vunpack.c.h.b16 %v365
        %v491 = vunpack.c.l.b16 %v366
        %v492 = vunpack.c.h.b16 %v366
        %v493 = vunpack.c.l.b16 %v367
        %v494 = vunpack.c.h.b16 %v367
        %v495 = vunpack.c.l.b16 %v368
        %v496 = vunpack.c.h.b16 %v368
        %v497 = vunpack.c.l.b16 %v369
        %v498 = vunpack.c.h.b16 %v369
        %v499 = vunpack.c.l.b16 %v370
        %v500 = vunpack.c.h.b16 %v370
        %v501 = vunpack.c.l.b16 %v371
        %v502 = vunpack.c.h.b16 %v371
        %v503 = vunpack.c.l.b16 %v372
        %v504 = vunpack.c.h.b16 %v372
        %v505 = vunpack.c.l.b16 %v373
        %v506 = vunpack.c.h.b16 %v373
        %v507 = vunpack.c.l.b16 %v374
        %v508 = vunpack.c.h.b16 %v374
        %v509 = vunpack.c.l.b16 %v375
        %v510 = vunpack.c.h.b16 %v375
        %v511 = vunpack.c.l.b16 %v376
        %v512 = vunpack.c.h.b16 %v376
        %v513 = vunpack.c.l.b16 %v377
        %v514 = vunpack.c.h.b16 %v377
        %v515 = vunpack.c.l.b16 %v378
        %v516 = vunpack.c.h.b16 %v378
        %v517 = vunpack.c.l.b16 %v379
        %v518 = vunpack.c.h.b16 %v379
        %v519 = vpack.c.b16 %v449, %v447
        %v520 = vpack.c.b16 %v450, %v448
        %v521 = vpack.c.b16 %v453, %v451
        %v522 = vpack.c.b16 %v454, %v452
        %v523 = vpack.c.b16 %v457, %v455
        %v524 = vpack.c.b16 %v458, %v456
        %v525 = vpack.c.b16 %v461, %v459
        %v526 = vpack.c.b16 %v462, %v460
        %v527 = vpack.c.b16 %v465, %v463
        %v528 = vpack.c.b16 %v466, %v464
        %v529 = vpack.c.b16 %v469, %v467
        %v530 = vpack.c.b16 %v470, %v468
        %v531 = vpack.c.b16 %v473, %v471
        %v532 = vpack.c.b16 %v474, %v472
        %v533 = vpack.c.b16 %v477, %v475
        %v534 = vpack.c.b16 %v478, %v476
        %v535 = vpack.c.b16 %v481, %v479
        %v536 = vpack.c.b16 %v482, %v480
        %v537 = vpack.c.b16 %v485, %v483
        %v538 = vpack.c.b16 %v486, %v484
        %v539 = vpack.c.b16 %v489, %v487
        %v540 = vpack.c.b16 %v490, %v488
        %v541 = vpack.c.b16 %v493, %v491
        %v542 = vpack.c.b16 %v494, %v492
        %v543 = vpack.c.b16 %v497, %v495
        %v544 = vpack.c.b16 %v498, %v496
        %v545 = vpack.c.b16 %v501, %v499
        %v546 = vpack.c.b16 %v502, %v500
        %v547 = vpack.c.b16 %v505, %v503
        %v548 = vpack.c.b16 %v506, %v504
        %v549 = vpack.c.b16 %v509, %v507
        %v550 = vpack.c.b16 %v510, %v508
        %v551 = vpack.c.b16 %v513, %v511
        %v552 = vpack.c.b16 %v514, %v512
        %v553 = vpack.c.b16 %v517, %v515
        %v554 = vpack.c.b16 %v518, %v516
        %vm591 = vcmask 261120
        %v593 = vsel %vm591, %v408, 0
        %595 = vmatprep.subr.bf16.mxu0 %v534
        %596 = vmatpush1.bf16.msra.mxu0 %v533
        %597 = vmatprep.subr.bf16.mxu0 %v532
        %598 = vmatpush1.bf16.msra.mxu0 %v531
        %599 = vmatprep.subr.bf16.mxu0 %v530
        %600 = vmatpush1.bf16.msra.mxu0 %v529
        %601 = vmatprep.subr.bf16.mxu0 %v528
        %602 = vmatpush1.bf16.msra.mxu0 %v527
        %603 = vmatprep.subr.bf16.mxu0 %v526
        %604 = vmatpush1.bf16.msra.mxu0 %v525
        %605 = vmatprep.subr.bf16.mxu0 %v524
        %606 = vmatpush1.bf16.msra.mxu0 %v523
        %607 = vmatprep.subr.bf16.mxu0 %v522
        %608 = vmatpush1.bf16.msra.mxu0 %v521
        %609 = vmatprep.subr.bf16.mxu0 %v520
        %610 = vmatpush1.bf16.msra.mxu0 %v519
        %611 = vmatprep.subr.bf16.mxu0 %v550
        %612 = vmatpush2.bf16.msra.mxu0 %v549
        %613 = vmatprep.subr.bf16.mxu0 %v548
        %614 = vmatpush2.bf16.msra.mxu0 %v547
        %615 = vmatprep.subr.bf16.mxu0 %v546
        %616 = vmatpush2.bf16.msra.mxu0 %v545
        %617 = vmatprep.subr.bf16.mxu0 %v544
        %618 = vmatpush2.bf16.msra.mxu0 %v543
        %619 = vmatprep.subr.bf16.mxu0 %v542
        %620 = vmatpush2.bf16.msra.mxu0 %v541
        %621 = vmatprep.subr.bf16.mxu0 %v540
        %622 = vmatpush2.bf16.msra.mxu0 %v539
        %623 = vmatprep.subr.bf16.mxu0 %v538
        %624 = vmatpush2.bf16.msra.mxu0 %v537
        %625 = vmatprep.subr.bf16.mxu0 %v536
        %626 = vmatpush2.bf16.msra.mxu0 %v535
        %627 = vmatprep.mubr.bf16.mxu0 %v407
        %628 = vmatmul.mubr.bf16.gmra.mxu0 %v406
        %v629 = vpop.f32.mrf.mxu0
        %v630 = vadd.f32 %v389, %v629
        %v631 = vpop.f32.mrf.mxu0
        %v632 = vadd.f32 %v389, %v631
        %v633 = vpop.f32.mrf.mxu0
        %v634 = vadd.f32 %v394, %v633
        %v635 = vpop.f32.mrf.mxu0
        %v636 = vadd.f32 %v394, %v635
        %637 = vdwg.mxu0
        %638 = vmatprep.subr.bf16.mxu0 0
        %639 = vmatpush1.bf16.msra.mxu0 0
        %640 = vmatprep.subr.bf16.mxu0 0
        %641 = vmatpush1.bf16.msra.mxu0 0
        %642 = vmatprep.subr.bf16.mxu0 0
        %643 = vmatpush1.bf16.msra.mxu0 0
        %644 = vmatprep.subr.bf16.mxu0 0
        %645 = vmatpush1.bf16.msra.mxu0 0
        %646 = vmatprep.subr.bf16.mxu0 0
        %647 = vmatpush1.bf16.msra.mxu0 0
        %648 = vmatprep.subr.bf16.mxu0 0
        %649 = vmatpush1.bf16.msra.mxu0 0
        %650 = vmatprep.subr.bf16.mxu0 %v554
        %651 = vmatpush1.bf16.msra.mxu0 %v553
        %652 = vmatprep.subr.bf16.mxu0 %v552
        %653 = vmatpush1.bf16.msra.mxu0 %v551
        %654 = vmatprep.subr.bf16.mxu0 0
        %655 = vmatpush2.bf16.msra.mxu0 0
        %656 = vmatprep.subr.bf16.mxu0 0
        %657 = vmatpush2.bf16.msra.mxu0 0
        %658 = vmatprep.subr.bf16.mxu0 0
        %659 = vmatpush2.bf16.msra.mxu0 0
        %660 = vmatprep.subr.bf16.mxu0 0
        %661 = vmatpush2.bf16.msra.mxu0 0
        %662 = vmatprep.subr.bf16.mxu0 0
        %663 = vmatpush2.bf16.msra.mxu0 0
        %664 = vmatprep.subr.bf16.mxu0 0
        %665 = vmatpush2.bf16.msra.mxu0 0
        %666 = vmatprep.subr.bf16.mxu0 0
        %667 = vmatpush2.bf16.msra.mxu0 0
        %668 = vmatprep.subr.bf16.mxu0 0
        %669 = vmatpush2.bf16.msra.mxu0 0
        %670 = vmatprep.mubr.bf16.mxu0 0
        %671 = vmatmul.mubr.bf16.gmra.mxu0 %v593
        %v672 = vpop.f32.mrf.mxu0
        %v673 = vadd.f32 %v630, %v672
        %v674 = vpop.f32.mrf.mxu0
        %v675 = vadd.f32 %v632, %v674
        %v676 = vpop.f32.mrf.mxu0
        %v677 = vadd.f32 %v634, %v676
        %v678 = vpop.f32.mrf.mxu0
        %v679 = vadd.f32 %v636, %v678
        %680 = vdwg.mxu0
        %681 = vst [vmem:[%s340] sm:$0xff] %v673
        %682 = vst [vmem:[%s340 + $0x8] sm:$0xff] %v675
        %683 = vst [vmem:[%s340 + $0x10] sm:$0xf] %v677
        %684 = vst [vmem:[%s340 + $0x18] sm:$0xf] %v679
        %s685 = sand.u32 %s90, 1
        %s686 = sand.u32 %s90, 1
        %s687 = smul.addr %s686, 32
        %s688 = scalar_lea.vmem [#allocation3], %s687
        // Predicated region
        $region71: #{vqvae_forward.37} parent=65 // pred_check
          %p689 = pneg %p100
        $region72: #{vqvae_forward.37} parent=65 // pred_check_branch
          %691 = sbr.rel (%p689) target = $region74
        $region73: #{vqvae_forward.37} parent=65 // pred_region
          %s692 = smul.u32 2, %s14
          %s693 = smul.addr %s692, 8
          %s694 = scalar_lea.vmem %s3, %s693
          // Predicated region
          $region75: #{vqvae_forward.37} parent=73 // pred_check
            _
          $region76: #{vqvae_forward.37} parent=73 // pred_check_branch
            %696 = sbr.rel (0) target = $region78
          $region77: #{vqvae_forward.37} parent=73 // pred_region
            // Predicated region
            $region79: #{vqvae_forward.37} parent=77 // pred_check
              _
            $region80: #{vqvae_forward.37} parent=77 // pred_check_branch
              %698 = sbr.rel (0) target = $region82
            $region81: #{vqvae_forward.37} parent=77 // pred_region
              loop: start=0, step=1, limit=1
              $region83: #{vqvae_forward.37} parent=81 // loop_pre_header
                _
              $region84: #{vqvae_forward.37} parent=81 // loop_header
                %s700 = sphi 0, %s704
                %p701 = scmp.ge.s32.totalorder %s700, 1
                %s705 = sphi %s688, %s688
                %s706 = sphi %s694, %s694
              $region85: #{vqvae_forward.37} parent=81 // loop_header_branch
                %703 = sbr.rel (%p701) target = $region89
              $region86: #{vqvae_forward.37} parent=81 // loop_body
                %v707 = vld [vmem:[%s705] sm:$0xff]
                %708 = vst [vmem:[%s706] sm:$0xff] %v707
                %v709 = vld [vmem:[%s705 + $0x8] sm:$0xff]
                %710 = vst [vmem:[%s706 + $0x8] sm:$0xff] %v709
                %v711 = vld [vmem:[%s705 + $0x10] sm:$0xff]
                %712 = vst [vmem:[%s706 + $0x20] sm:$0xff] %v711
                %v713 = vld [vmem:[%s705 + $0x18] sm:$0xff]
                %714 = vst [vmem:[%s706 + $0x28] sm:$0xff] %v713
              $region87: #{vqvae_forward.37} parent=81 // loop_footer
                %s704 = sadd.s32 1, %s700
              $region88: #{vqvae_forward.37} parent=81 // loop_footer_branch
                %699 = sbr.rel target = $region84
              $region89: #{vqvae_forward.37} parent=81 // loop_exit
                _
            $region82: #{vqvae_forward.37} parent=77 // pred_fallthru
              _
            // Predicated region
            $region90: #{vqvae_forward.37} parent=77 // pred_check
              _
            $region91: #{vqvae_forward.37} parent=77 // pred_check_branch
              %716 = sbr.rel target = $region93
            $region92: #{vqvae_forward.37} parent=77 // pred_region
              _
            $region93: #{vqvae_forward.37} parent=77 // pred_fallthru
              _
          $region78: #{vqvae_forward.37} parent=73 // pred_fallthru
            _
          %717 = vnop
        $region74: #{vqvae_forward.37} parent=65 // pred_fallthru
          _
      $region66: #{vqvae_forward.37} parent=5 // pred_fallthru
        _
      %p718 = scmp.le.s32.totalorder 2, %s9
      // Predicated region
      $region94: #{vqvae_forward.37} parent=5 // pred_check
        %p719 = pneg %p718
      $region95: #{vqvae_forward.37} parent=5 // pred_check_branch
        %721 = sbr.rel (%p719) target = $region97
      $region96: #{vqvae_forward.37} parent=5 // pred_region
        %s722 = ssub.s32 %s9, 2
        // Predicated region
        $region98: #{vqvae_forward.37} parent=96 // pred_check
          %p723 = pneg %p106
        $region99: #{vqvae_forward.37} parent=96 // pred_check_branch
          %725 = sbr.rel (%p723) target = $region101
        $region100: #{vqvae_forward.37} parent=96 // pred_region
          %s726 = sand.u32 %s91, 1
          %s727 = sand.u32 %s91, 1
          %s728 = smul.addr %s727, 32
          %s729 = scalar_lea.vmem [#allocation3], %s728
        $region101: #{vqvae_forward.37} parent=96 // pred_fallthru
          _
      $region97: #{vqvae_forward.37} parent=5 // pred_fallthru
        _
    $region6: #{vqvae_forward.37} parent=1 // loop_footer
      %s13 = sadd.s32 1, %s9
    $region7: #{vqvae_forward.37} parent=1 // loop_footer_branch
      %8 = sbr.rel target = $region3
    $region8: #{vqvae_forward.37} parent=1 // loop_exit
      _

</llo_original>
